<compile_context>
chip_gen: v6e
topology: v6e:2x2x1
jax: 0.10.0
libtpu: 0.0.40
codegen_flags: <defaults>
</compile_context>

<pallas_src>
import math
import numpy as np
import jax
import jax.numpy as jnp
from jax.experimental import pallas as pl
from jax.experimental.pallas import tpu as pltpu


def _round_up(x, m):
    return (x + m - 1) // m * m


def _cbert_head_kernel(sid_smem, nval_smem,                       # scalar prefetch (SMEM)
                       rep_ref, bias_ref, nval_ref, tgt_ref, w_hbm,  # inputs
                       loss_ref, corr_ref,                        # outputs
                       w_buf, sems):                              # scratch
    _, n_cand, tb, _d = w_buf.shape          # (2, Nmax, TB, D) double-buffered gather
    i = pl.program_id(0)
    n_groups = pl.num_programs(0)
    slot = i % 2

    def issue_gather(group, buf_slot):
        """Start HBM->VMEM DMAs for all *valid* candidate rows of `group`."""
        @pl.loop(0, tb)
        def _per_example(t):
            ex = group * tb + t
            nv = nval_smem[ex]
            for n in range(n_cand):                       # Nmax is small & static
                @pl.when(n < nv)                          # skip padded candidate slots
                def _():
                    sid = sid_smem[ex * n_cand + n]
                    pltpu.make_async_copy(
                        w_hbm.at[pl.ds(sid, 1)],
                        w_buf.at[buf_slot, n, pl.ds(t, 1)],
                        sems.at[buf_slot, n, t],
                    ).start()

    def wait_gather(group, buf_slot):
        """Wait on exactly the DMAs issued by issue_gather(group, buf_slot)."""
        @pl.loop(0, tb)
        def _per_example(t):
            nv = nval_smem[group * tb + t]
            for n in range(n_cand):
                @pl.when(n < nv)
                def _():
                    pltpu.make_async_copy(
                        w_hbm.at[pl.ds(0, 1)],            # src only used for shape
                        w_buf.at[buf_slot, n, pl.ds(t, 1)],
                        sems.at[buf_slot, n, t],
                    ).wait()

    # Prime the pipeline: fetch group 0 into slot 0 on the first step.
    @pl.when(i == 0)
    def _():
        issue_gather(0, 0)

    # Prefetch the next group's candidate rows into the other slot so the DMAs
    # overlap with this step's compute + writeback (hides HBM gather latency).
    @pl.when(i + 1 < n_groups)
    def _():
        issue_gather(i + 1, 1 - slot)

    # Wait for the current group's rows (issued one step earlier, or just above).
    wait_gather(i, slot)

    rep = rep_ref[0]                                       # (TB, D)
    w = w_buf[slot]                                        # (Nmax, TB, D) gathered rows
    # Candidate scores on the VPU/XLU (tiny per-example matvec; MXU stays idle).
    scores = jnp.sum(w * rep[None, :, :], axis=-1) + bias_ref[0]     # (Nmax, TB)

    n_iota = jax.lax.broadcasted_iota(jnp.int32, (n_cand, tb), 0)    # candidate index
    valid = n_iota < nval_ref[0]                           # (Nmax, TB) suffix-pad mask
    neg_inf = jnp.float32(-1e30)
    sm = jnp.where(valid, scores, neg_inf)                 # mask padded / stale rows

    tgt = tgt_ref[0]                                       # (1, TB)
    col_max = jnp.max(sm, axis=0, keepdims=True)           # (1, TB)
    # First-occurrence argmax over candidates (matches torch.argmax).
    pred = jnp.min(jnp.where(sm == col_max, n_iota, jnp.int32(n_cand)),
                   axis=0, keepdims=True)                  # (1, TB)
    corr_ref[0] = (pred == tgt).astype(jnp.int32)

    # Cross-entropy over the valid candidate logits (max-stabilized).
    denom = jnp.sum(jnp.exp(sm - col_max), axis=0, keepdims=True)
    lse = col_max + jnp.log(denom)
    # Assumes target_id always indexes a valid (non-padded) candidate slot, as in
    # the original data pipeline.
    picked = jnp.sum(jnp.where(n_iota == tgt, sm, 0.0), axis=0, keepdims=True)
    loss_ref[0] = lse - picked


def cbert_linear_head(reps, weight, bias, sense_ids, target_ids, *, tile_b=128):
    """Pallas implementation of CBERTLinear.forward (train-mode head).

    Returns (batch_loss, correct) matching the PyTorch module:
      batch_loss = mean over examples of CE(W[sids] @ rep + b[sids], target_id)
      correct    = bool[B], argmax == target_id
    """
    B, D = reps.shape
    S, D_w = weight.shape
    assert D_w == D
    Nmax = sense_ids.shape[1]

    f32 = jnp.float32
    TB = _round_up(max(int(tile_b), 8), 8)     # examples per grid step
    B_pad = _round_up(B, TB)
    G = B_pad // TB

    w32 = weight if weight.dtype == f32 else weight.astype(f32)    # no O(S*D) copy
    bias32 = bias if bias.dtype == f32 else bias.astype(f32)

    sid = sense_ids.astype(jnp.int32)
    valid = sid >= 0
    nval = jnp.sum(valid.astype(jnp.int32), axis=1)        # (B,) -- suffix-pad invariant
    sid_safe = jnp.where(valid, sid, 0)
    bias_g = jnp.where(valid, bias32[sid_safe], 0.0)        # (B, Nmax) gathered bias

    # Pad the batch to a multiple of TB; padded examples have nval == 0, so their
    # DMAs are skipped and their (garbage, masked) results are dropped below.
    reps_p = jnp.zeros((B_pad, D), f32).at[:B].set(reps.astype(f32))
    sid_flat = jnp.zeros((B_pad * Nmax,), jnp.int32).at[:B * Nmax].set(sid_safe.reshape(-1))
    nval_p = jnp.zeros((B_pad,), jnp.int32).at[:B].set(nval)
    tgt_p = jnp.zeros((B_pad,), jnp.int32).at[:B].set(target_ids.astype(jnp.int32).reshape(B))
    bias_p = jnp.zeros((B_pad, Nmax), f32).at[:B].set(bias_g)

    # Group into (G, TB, ...) so every grid step handles TB examples and the per-step
    # output block is one full (1, TB) row (lane-dense for TB >= 128).
    reps_g = reps_p.reshape(G, TB, D)
    bias_gt = bias_p.reshape(G, TB, Nmax).transpose(0, 2, 1)    # (G, Nmax, TB)
    nval_v = nval_p.reshape(G, 1, TB)
    tgt_v = tgt_p.reshape(G, 1, TB)

    grid_spec = pltpu.PrefetchScalarGridSpec(
        num_scalar_prefetch=2,                 # sid_flat, nval -> SMEM (drive the gather)
        grid=(G,),
        in_specs=[
            pl.BlockSpec((1, TB, D), lambda i, sid, nv: (i, 0, 0)),     # reps
            pl.BlockSpec((1, Nmax, TB), lambda i, sid, nv: (i, 0, 0)),  # gathered bias
            pl.BlockSpec((1, 1, TB), lambda i, sid, nv: (i, 0, 0)),     # n_valid per ex
            pl.BlockSpec((1, 1, TB), lambda i, sid, nv: (i, 0, 0)),     # target slot
            pl.BlockSpec(memory_space=pl.ANY),   # weight stays in HBM; rows DMA-gathered
        ],
        out_specs=(
            pl.BlockSpec((1, 1, TB), lambda i, sid, nv: (i, 0, 0)),     # per-example loss
            pl.BlockSpec((1, 1, TB), lambda i, sid, nv: (i, 0, 0)),     # correct flag
        ),
        scratch_shapes=[
            pltpu.VMEM((2, Nmax, TB, D), f32),          # double-buffered gathered rows
            pltpu.SemaphoreType.DMA((2, Nmax, TB)),
        ],
    )

    vmem_need = 4 * (2 * Nmax * TB * D                       # gather scratch
                     + 2 * (TB * D + Nmax * TB + 2 * TB)     # double-buffered inputs
                     + 2 * 2 * TB)                           # double-buffered outputs
    vmem_limit = int(min(max(2 * vmem_need, 16 * 1024 * 1024), 48 * 1024 * 1024))

    losses, correct = pl.pallas_call(
        _cbert_head_kernel,
        out_shape=(jax.ShapeDtypeStruct((G, 1, TB), f32),
                   jax.ShapeDtypeStruct((G, 1, TB), jnp.int32)),
        grid_spec=grid_spec,
        compiler_params=pltpu.CompilerParams(
            # The revolving gather slot carries state across grid steps, so this
            # axis must be "arbitrary".  To use both v7x TensorCores, split the
            # batch into >=2 pallas_call invocations at the wrapper level.
            dimension_semantics=("arbitrary",),
            vmem_limit_bytes=vmem_limit,
        ),
        cost_estimate=pl.CostEstimate(
            flops=int(2 * B_pad * Nmax * D),
            transcendentals=int(B_pad * (Nmax + 1)),
            bytes_accessed=int(4 * (B * Nmax * D + B_pad * D + B_pad * (2 * Nmax + 4))),
        ),
    )(sid_flat, nval_p, reps_g, bias_gt, nval_v, tgt_v, w32)

    losses = losses.reshape(B_pad)[:B]
    correct = correct.reshape(B_pad)[:B].astype(bool)
    batch_loss = jnp.mean(losses)                            # == sum_b CE_b / B
    return batch_loss, correct


def _reference_head(reps, weight, bias, sense_ids, target_ids):
    """Pure numpy reference mirroring the PyTorch per-example loop."""
    reps = np.asarray(reps, np.float32)
    weight = np.asarray(weight, np.float32)
    bias = np.asarray(bias, np.float32)
    sense_ids = np.asarray(sense_ids)
    target_ids = np.asarray(target_ids)
    losses, corrects = [], []
    for b in range(reps.shape[0]):
        sid = sense_ids[b]
        sid = sid[sid != -1]
        out = weight[sid] @ reps[b] + bias[sid]
        pred = int(np.argmax(out))
        corrects.append(pred == int(target_ids[b]))
        m = float(np.max(out))
        logz = m + np.log(np.sum(np.exp(out - m)))
        losses.append(logz - out[int(target_ids[b])])
    return float(np.mean(np.array(losses, np.float64))), np.array(corrects, bool)


if __name__ == "__main__":
    def run_case(case_idx, B, D, S, Nmax, TB):
        key = jax.random.fold_in(jax.random.PRNGKey(0), case_idx)
        k_rep, k_w, k_b = jax.random.split(key, 3)

        # nn.Linear-style init for sensekey_linear (uniform +-1/sqrt(D)).
        bound = 1.0 / math.sqrt(D)
        weight = jax.random.uniform(k_w, (S, D), jnp.float32, minval=-bound, maxval=bound)
        bias = jax.random.uniform(k_b, (S,), jnp.float32, minval=-bound, maxval=bound)
        # Context-encoder representations (stand-in for BERT output).
        reps = jax.random.normal(k_rep, (B, D), jnp.float32)

        # Candidate sense ids per example (-1 suffix padded), target index into candidates.
        rng = np.random.default_rng(1234 + case_idx)
        sense_ids = np.full((B, Nmax), -1, np.int32)
        target_ids = np.zeros((B,), np.int32)
        for b in range(B):
            n_valid = int(rng.integers(1, Nmax + 1))
            sense_ids[b, :n_valid] = rng.choice(S, size=n_valid, replace=False)
            target_ids[b] = int(rng.integers(0, n_valid))
        sense_ids = jnp.asarray(sense_ids)
        target_ids = jnp.asarray(target_ids)

        loss, correct = cbert_linear_head(reps, weight, bias, sense_ids, target_ids,
                                          tile_b=TB)
        loss = jax.block_until_ready(loss)
        correct = jax.block_until_ready(correct)

        ref_loss, ref_correct = _reference_head(reps, weight, bias, sense_ids, target_ids)
        np.testing.assert_allclose(np.asarray(loss), ref_loss, rtol=1e-4, atol=1e-5)
        assert np.array_equal(np.asarray(correct), ref_correct), (correct, ref_correct)

    # Case 1: batch divides the tile evenly -> 2 grid steps (exercises the cross-step
    # double-buffered gather).
    run_case(0, B=16, D=256, S=64, Nmax=8, TB=8)
    # Case 2: batch padding (B=5 -> 8) + non-power-of-two candidate count.
    run_case(1, B=5, D=128, S=40, Nmax=6, TB=8)

    print("KERNEL_OK")
</pallas_src>

<mosaic_0001>
module attributes {stable_mosaic.version = 11 : i64} {
  func.func @_cbert_head_kernel(%arg0: i32, %arg1: memref<128xi32, #tpu.memory_space<smem>>, %arg2: memref<16xi32, #tpu.memory_space<smem>>, %arg3: memref<1x8x256xf32, #tpu.memory_space<vmem>>, %arg4: memref<1x8x8xf32, #tpu.memory_space<vmem>>, %arg5: memref<1x1x8xi32, #tpu.memory_space<vmem>>, %arg6: memref<1x1x8xi32, #tpu.memory_space<vmem>>, %arg7: memref<64x256xf32, #tpu.memory_space<any>>, %arg8: memref<1x1x8xf32, #tpu.memory_space<vmem>>, %arg9: memref<1x1x8xi32, #tpu.memory_space<vmem>>, %arg10: memref<2x8x8x256xf32, #tpu.memory_space<vmem>>, %arg11: memref<2x8x8x!tpu.dma_semaphore, #tpu.memory_space<semaphore_mem>>) attributes {dimension_semantics = [#tpu.dimension_semantics<arbitrary>], iteration_bounds = array<i64: 2>, scalar_prefetch = 2 : i64, scratch_operands = 2 : i64, tpu.core_type = #tpu.core_type<tc>, window_params = [{transform_indices = @transform_0, window_bounds = array<i64: 1, 8, 256>}, {transform_indices = @transform_1, window_bounds = array<i64: 1, 8, 8>}, {transform_indices = @transform_2, window_bounds = array<i64: 1, 1, 8>}, {transform_indices = @transform_3, window_bounds = array<i64: 1, 1, 8>}, {}, {transform_indices = @transform_5, window_bounds = array<i64: 1, 1, 8>}, {transform_indices = @transform_6, window_bounds = array<i64: 1, 1, 8>}]} {
    %c2_i32 = arith.constant 2 : i32
    %c0_i32 = arith.constant 0 : i32
    %0 = arith.cmpi eq, %c2_i32, %c0_i32 : i32
    %c1_i32 = arith.constant 1 : i32
    %1 = arith.select %0, %c1_i32, %c2_i32 : i32
    %2 = arith.remsi %arg0, %1 : i32
    %c0_i32_0 = arith.constant 0 : i32
    %3 = arith.cmpi ne, %2, %c0_i32_0 : i32
    %c0_i32_1 = arith.constant 0 : i32
    %4 = arith.cmpi slt, %2, %c0_i32_1 : i32
    %c0_i32_2 = arith.constant 0 : i32
    %5 = arith.cmpi slt, %1, %c0_i32_2 : i32
    %6 = arith.xori %4, %5 : i1
    %7 = arith.andi %6, %3 : i1
    %8 = arith.addi %2, %1 : i32
    %9 = arith.select %7, %8, %2 : i32
    %c0_i32_3 = arith.constant 0 : i32
    %10 = arith.cmpi eq, %arg0, %c0_i32_3 : i32
    %11 = arith.extui %10 : i1 to i32
    %c0_i32_4 = arith.constant 0 : i32
    %12 = arith.cmpi ne, %11, %c0_i32_4 : i32
    scf.if %12 {
      %c0_i32_38 = arith.constant 0 : i32
      %c8_i32_39 = arith.constant 8 : i32
      %69 = arith.addi %c0_i32_38, %c8_i32_39 : i32
      %c1_i32_40 = arith.constant 1 : i32
      scf.for %arg12 = %c0_i32_38 to %69 step %c1_i32_40  : i32 {
        %c1_i32_42 = arith.constant 1 : i32
        %70 = arith.muli %arg12, %c1_i32_42 : i32
        %c0_i32_43 = arith.constant 0 : i32
        %71 = arith.addi %c0_i32_43, %70 : i32
        %c0_i32_44 = arith.constant 0 : i32
        %72 = arith.addi %c0_i32_44, %71 : i32
        %73 = arith.index_cast %72 : i32 to index
        %74 = memref.load %arg2[%73] : memref<16xi32, #tpu.memory_space<smem>>
        %c0_i32_45 = arith.constant 0 : i32
        %75 = arith.cmpi sgt, %74, %c0_i32_45 : i32
        %76 = arith.extui %75 : i1 to i32
        %c0_i32_46 = arith.constant 0 : i32
        %77 = arith.cmpi ne, %76, %c0_i32_46 : i32
        scf.if %77 {
          %c8_i32_56 = arith.constant 8 : i32
          %99 = arith.muli %72, %c8_i32_56 : i32
          %c0_i32_57 = arith.constant 0 : i32
          %100 = arith.addi %99, %c0_i32_57 : i32
          %101 = arith.index_cast %100 : i32 to index
          %102 = memref.load %arg1[%101] : memref<128xi32, #tpu.memory_space<smem>>
          %c0_i32_58 = arith.constant 0 : i32
          %c0_i32_59 = arith.constant 0 : i32
          %c0_i32_60 = arith.constant 0 : i32
          %c0_i32_61 = arith.constant 0 : i32
          %c0_i32_62 = arith.constant 0 : i32
          %103 = tpu.memref_slice %arg7[%102, %c0_i32_62] : memref<64x256xf32, #tpu.memory_space<any>> -> memref<1x256xf32, #tpu.memory_space<any>>
          %c0_i32_63 = arith.constant 0 : i32
          %104 = tpu.memref_slice %arg10[%c0_i32_58, %c0_i32_59, %71, %c0_i32_63] : memref<2x8x8x256xf32, #tpu.memory_space<vmem>> -> memref<1x1x1x256xf32, #tpu.memory_space<vmem>>
          %105 = tpu.memref_squeeze %104 : memref<1x1x1x256xf32, #tpu.memory_space<vmem>> -> memref<1x256xf32, #tpu.memory_space<vmem>>
          %106 = tpu.memref_slice %arg11[%c0_i32_60, %c0_i32_61, %71] : memref<2x8x8x!tpu.dma_semaphore, #tpu.memory_space<semaphore_mem>> -> memref<1x1x1x!tpu.dma_semaphore, #tpu.memory_space<semaphore_mem>>
          %107 = tpu.memref_squeeze %106 : memref<1x1x1x!tpu.dma_semaphore, #tpu.memory_space<semaphore_mem>> -> memref<!tpu.dma_semaphore, #tpu.memory_space<semaphore_mem>>
          tpu.enqueue_dma source(%103 : memref<1x256xf32, #tpu.memory_space<any>>) target(%105 : memref<1x256xf32, #tpu.memory_space<vmem>>) target_semaphore(%107 : memref<!tpu.dma_semaphore, #tpu.memory_space<semaphore_mem>>)
        } else {
        }
        %c1_i32_47 = arith.constant 1 : i32
        %78 = arith.cmpi sgt, %74, %c1_i32_47 : i32
        %79 = arith.extui %78 : i1 to i32
        %c0_i32_48 = arith.constant 0 : i32
        %80 = arith.cmpi ne, %79, %c0_i32_48 : i32
        scf.if %80 {
          %c8_i32_56 = arith.constant 8 : i32
          %99 = arith.muli %72, %c8_i32_56 : i32
          %c1_i32_57 = arith.constant 1 : i32
          %100 = arith.addi %99, %c1_i32_57 : i32
          %101 = arith.index_cast %100 : i32 to index
          %102 = memref.load %arg1[%101] : memref<128xi32, #tpu.memory_space<smem>>
          %c0_i32_58 = arith.constant 0 : i32
          %c1_i32_59 = arith.constant 1 : i32
          %c0_i32_60 = arith.constant 0 : i32
          %c1_i32_61 = arith.constant 1 : i32
          %c0_i32_62 = arith.constant 0 : i32
          %103 = tpu.memref_slice %arg7[%102, %c0_i32_62] : memref<64x256xf32, #tpu.memory_space<any>> -> memref<1x256xf32, #tpu.memory_space<any>>
          %c0_i32_63 = arith.constant 0 : i32
          %104 = tpu.memref_slice %arg10[%c0_i32_58, %c1_i32_59, %71, %c0_i32_63] : memref<2x8x8x256xf32, #tpu.memory_space<vmem>> -> memref<1x1x1x256xf32, #tpu.memory_space<vmem>>
          %105 = tpu.memref_squeeze %104 : memref<1x1x1x256xf32, #tpu.memory_space<vmem>> -> memref<1x256xf32, #tpu.memory_space<vmem>>
          %106 = tpu.memref_slice %arg11[%c0_i32_60, %c1_i32_61, %71] : memref<2x8x8x!tpu.dma_semaphore, #tpu.memory_space<semaphore_mem>> -> memref<1x1x1x!tpu.dma_semaphore, #tpu.memory_space<semaphore_mem>>
          %107 = tpu.memref_squeeze %106 : memref<1x1x1x!tpu.dma_semaphore, #tpu.memory_space<semaphore_mem>> -> memref<!tpu.dma_semaphore, #tpu.memory_space<semaphore_mem>>
          tpu.enqueue_dma source(%103 : memref<1x256xf32, #tpu.memory_space<any>>) target(%105 : memref<1x256xf32, #tpu.memory_space<vmem>>) target_semaphore(%107 : memref<!tpu.dma_semaphore, #tpu.memory_space<semaphore_mem>>)
        } else {
        }
        %c2_i32_49 = arith.constant 2 : i32
        %81 = arith.cmpi sgt, %74, %c2_i32_49 : i32
        %82 = arith.extui %81 : i1 to i32
        %c0_i32_50 = arith.constant 0 : i32
        %83 = arith.cmpi ne, %82, %c0_i32_50 : i32
        scf.if %83 {
          %c8_i32_56 = arith.constant 8 : i32
          %99 = arith.muli %72, %c8_i32_56 : i32
          %c2_i32_57 = arith.constant 2 : i32
          %100 = arith.addi %99, %c2_i32_57 : i32
          %101 = arith.index_cast %100 : i32 to index
          %102 = memref.load %arg1[%101] : memref<128xi32, #tpu.memory_space<smem>>
          %c0_i32_58 = arith.constant 0 : i32
          %c2_i32_59 = arith.constant 2 : i32
          %c0_i32_60 = arith.constant 0 : i32
          %c2_i32_61 = arith.constant 2 : i32
          %c0_i32_62 = arith.constant 0 : i32
          %103 = tpu.memref_slice %arg7[%102, %c0_i32_62] : memref<64x256xf32, #tpu.memory_space<any>> -> memref<1x256xf32, #tpu.memory_space<any>>
          %c0_i32_63 = arith.constant 0 : i32
          %104 = tpu.memref_slice %arg10[%c0_i32_58, %c2_i32_59, %71, %c0_i32_63] : memref<2x8x8x256xf32, #tpu.memory_space<vmem>> -> memref<1x1x1x256xf32, #tpu.memory_space<vmem>>
          %105 = tpu.memref_squeeze %104 : memref<1x1x1x256xf32, #tpu.memory_space<vmem>> -> memref<1x256xf32, #tpu.memory_space<vmem>>
          %106 = tpu.memref_slice %arg11[%c0_i32_60, %c2_i32_61, %71] : memref<2x8x8x!tpu.dma_semaphore, #tpu.memory_space<semaphore_mem>> -> memref<1x1x1x!tpu.dma_semaphore, #tpu.memory_space<semaphore_mem>>
          %107 = tpu.memref_squeeze %106 : memref<1x1x1x!tpu.dma_semaphore, #tpu.memory_space<semaphore_mem>> -> memref<!tpu.dma_semaphore, #tpu.memory_space<semaphore_mem>>
          tpu.enqueue_dma source(%103 : memref<1x256xf32, #tpu.memory_space<any>>) target(%105 : memref<1x256xf32, #tpu.memory_space<vmem>>) target_semaphore(%107 : memref<!tpu.dma_semaphore, #tpu.memory_space<semaphore_mem>>)
        } else {
        }
        %c3_i32 = arith.constant 3 : i32
        %84 = arith.cmpi sgt, %74, %c3_i32 : i32
        %85 = arith.extui %84 : i1 to i32
        %c0_i32_51 = arith.constant 0 : i32
        %86 = arith.cmpi ne, %85, %c0_i32_51 : i32
        scf.if %86 {
          %c8_i32_56 = arith.constant 8 : i32
          %99 = arith.muli %72, %c8_i32_56 : i32
          %c3_i32_57 = arith.constant 3 : i32
          %100 = arith.addi %99, %c3_i32_57 : i32
          %101 = arith.index_cast %100 : i32 to index
          %102 = memref.load %arg1[%101] : memref<128xi32, #tpu.memory_space<smem>>
          %c0_i32_58 = arith.constant 0 : i32
          %c3_i32_59 = arith.constant 3 : i32
          %c0_i32_60 = arith.constant 0 : i32
          %c3_i32_61 = arith.constant 3 : i32
          %c0_i32_62 = arith.constant 0 : i32
          %103 = tpu.memref_slice %arg7[%102, %c0_i32_62] : memref<64x256xf32, #tpu.memory_space<any>> -> memref<1x256xf32, #tpu.memory_space<any>>
          %c0_i32_63 = arith.constant 0 : i32
          %104 = tpu.memref_slice %arg10[%c0_i32_58, %c3_i32_59, %71, %c0_i32_63] : memref<2x8x8x256xf32, #tpu.memory_space<vmem>> -> memref<1x1x1x256xf32, #tpu.memory_space<vmem>>
          %105 = tpu.memref_squeeze %104 : memref<1x1x1x256xf32, #tpu.memory_space<vmem>> -> memref<1x256xf32, #tpu.memory_space<vmem>>
          %106 = tpu.memref_slice %arg11[%c0_i32_60, %c3_i32_61, %71] : memref<2x8x8x!tpu.dma_semaphore, #tpu.memory_space<semaphore_mem>> -> memref<1x1x1x!tpu.dma_semaphore, #tpu.memory_space<semaphore_mem>>
          %107 = tpu.memref_squeeze %106 : memref<1x1x1x!tpu.dma_semaphore, #tpu.memory_space<semaphore_mem>> -> memref<!tpu.dma_semaphore, #tpu.memory_space<semaphore_mem>>
          tpu.enqueue_dma source(%103 : memref<1x256xf32, #tpu.memory_space<any>>) target(%105 : memref<1x256xf32, #tpu.memory_space<vmem>>) target_semaphore(%107 : memref<!tpu.dma_semaphore, #tpu.memory_space<semaphore_mem>>)
        } else {
        }
        %c4_i32 = arith.constant 4 : i32
        %87 = arith.cmpi sgt, %74, %c4_i32 : i32
        %88 = arith.extui %87 : i1 to i32
        %c0_i32_52 = arith.constant 0 : i32
        %89 = arith.cmpi ne, %88, %c0_i32_52 : i32
        scf.if %89 {
          %c8_i32_56 = arith.constant 8 : i32
          %99 = arith.muli %72, %c8_i32_56 : i32
          %c4_i32_57 = arith.constant 4 : i32
          %100 = arith.addi %99, %c4_i32_57 : i32
          %101 = arith.index_cast %100 : i32 to index
          %102 = memref.load %arg1[%101] : memref<128xi32, #tpu.memory_space<smem>>
          %c0_i32_58 = arith.constant 0 : i32
          %c4_i32_59 = arith.constant 4 : i32
          %c0_i32_60 = arith.constant 0 : i32
          %c4_i32_61 = arith.constant 4 : i32
          %c0_i32_62 = arith.constant 0 : i32
          %103 = tpu.memref_slice %arg7[%102, %c0_i32_62] : memref<64x256xf32, #tpu.memory_space<any>> -> memref<1x256xf32, #tpu.memory_space<any>>
          %c0_i32_63 = arith.constant 0 : i32
          %104 = tpu.memref_slice %arg10[%c0_i32_58, %c4_i32_59, %71, %c0_i32_63] : memref<2x8x8x256xf32, #tpu.memory_space<vmem>> -> memref<1x1x1x256xf32, #tpu.memory_space<vmem>>
          %105 = tpu.memref_squeeze %104 : memref<1x1x1x256xf32, #tpu.memory_space<vmem>> -> memref<1x256xf32, #tpu.memory_space<vmem>>
          %106 = tpu.memref_slice %arg11[%c0_i32_60, %c4_i32_61, %71] : memref<2x8x8x!tpu.dma_semaphore, #tpu.memory_space<semaphore_mem>> -> memref<1x1x1x!tpu.dma_semaphore, #tpu.memory_space<semaphore_mem>>
          %107 = tpu.memref_squeeze %106 : memref<1x1x1x!tpu.dma_semaphore, #tpu.memory_space<semaphore_mem>> -> memref<!tpu.dma_semaphore, #tpu.memory_space<semaphore_mem>>
          tpu.enqueue_dma source(%103 : memref<1x256xf32, #tpu.memory_space<any>>) target(%105 : memref<1x256xf32, #tpu.memory_space<vmem>>) target_semaphore(%107 : memref<!tpu.dma_semaphore, #tpu.memory_space<semaphore_mem>>)
        } else {
        }
        %c5_i32 = arith.constant 5 : i32
        %90 = arith.cmpi sgt, %74, %c5_i32 : i32
        %91 = arith.extui %90 : i1 to i32
        %c0_i32_53 = arith.constant 0 : i32
        %92 = arith.cmpi ne, %91, %c0_i32_53 : i32
        scf.if %92 {
          %c8_i32_56 = arith.constant 8 : i32
          %99 = arith.muli %72, %c8_i32_56 : i32
          %c5_i32_57 = arith.constant 5 : i32
          %100 = arith.addi %99, %c5_i32_57 : i32
          %101 = arith.index_cast %100 : i32 to index
          %102 = memref.load %arg1[%101] : memref<128xi32, #tpu.memory_space<smem>>
          %c0_i32_58 = arith.constant 0 : i32
          %c5_i32_59 = arith.constant 5 : i32
          %c0_i32_60 = arith.constant 0 : i32
          %c5_i32_61 = arith.constant 5 : i32
          %c0_i32_62 = arith.constant 0 : i32
          %103 = tpu.memref_slice %arg7[%102, %c0_i32_62] : memref<64x256xf32, #tpu.memory_space<any>> -> memref<1x256xf32, #tpu.memory_space<any>>
          %c0_i32_63 = arith.constant 0 : i32
          %104 = tpu.memref_slice %arg10[%c0_i32_58, %c5_i32_59, %71, %c0_i32_63] : memref<2x8x8x256xf32, #tpu.memory_space<vmem>> -> memref<1x1x1x256xf32, #tpu.memory_space<vmem>>
          %105 = tpu.memref_squeeze %104 : memref<1x1x1x256xf32, #tpu.memory_space<vmem>> -> memref<1x256xf32, #tpu.memory_space<vmem>>
          %106 = tpu.memref_slice %arg11[%c0_i32_60, %c5_i32_61, %71] : memref<2x8x8x!tpu.dma_semaphore, #tpu.memory_space<semaphore_mem>> -> memref<1x1x1x!tpu.dma_semaphore, #tpu.memory_space<semaphore_mem>>
          %107 = tpu.memref_squeeze %106 : memref<1x1x1x!tpu.dma_semaphore, #tpu.memory_space<semaphore_mem>> -> memref<!tpu.dma_semaphore, #tpu.memory_space<semaphore_mem>>
          tpu.enqueue_dma source(%103 : memref<1x256xf32, #tpu.memory_space<any>>) target(%105 : memref<1x256xf32, #tpu.memory_space<vmem>>) target_semaphore(%107 : memref<!tpu.dma_semaphore, #tpu.memory_space<semaphore_mem>>)
        } else {
        }
        %c6_i32 = arith.constant 6 : i32
        %93 = arith.cmpi sgt, %74, %c6_i32 : i32
        %94 = arith.extui %93 : i1 to i32
        %c0_i32_54 = arith.constant 0 : i32
        %95 = arith.cmpi ne, %94, %c0_i32_54 : i32
        scf.if %95 {
          %c8_i32_56 = arith.constant 8 : i32
          %99 = arith.muli %72, %c8_i32_56 : i32
          %c6_i32_57 = arith.constant 6 : i32
          %100 = arith.addi %99, %c6_i32_57 : i32
          %101 = arith.index_cast %100 : i32 to index
          %102 = memref.load %arg1[%101] : memref<128xi32, #tpu.memory_space<smem>>
          %c0_i32_58 = arith.constant 0 : i32
          %c6_i32_59 = arith.constant 6 : i32
          %c0_i32_60 = arith.constant 0 : i32
          %c6_i32_61 = arith.constant 6 : i32
          %c0_i32_62 = arith.constant 0 : i32
          %103 = tpu.memref_slice %arg7[%102, %c0_i32_62] : memref<64x256xf32, #tpu.memory_space<any>> -> memref<1x256xf32, #tpu.memory_space<any>>
          %c0_i32_63 = arith.constant 0 : i32
          %104 = tpu.memref_slice %arg10[%c0_i32_58, %c6_i32_59, %71, %c0_i32_63] : memref<2x8x8x256xf32, #tpu.memory_space<vmem>> -> memref<1x1x1x256xf32, #tpu.memory_space<vmem>>
          %105 = tpu.memref_squeeze %104 : memref<1x1x1x256xf32, #tpu.memory_space<vmem>> -> memref<1x256xf32, #tpu.memory_space<vmem>>
          %106 = tpu.memref_slice %arg11[%c0_i32_60, %c6_i32_61, %71] : memref<2x8x8x!tpu.dma_semaphore, #tpu.memory_space<semaphore_mem>> -> memref<1x1x1x!tpu.dma_semaphore, #tpu.memory_space<semaphore_mem>>
          %107 = tpu.memref_squeeze %106 : memref<1x1x1x!tpu.dma_semaphore, #tpu.memory_space<semaphore_mem>> -> memref<!tpu.dma_semaphore, #tpu.memory_space<semaphore_mem>>
          tpu.enqueue_dma source(%103 : memref<1x256xf32, #tpu.memory_space<any>>) target(%105 : memref<1x256xf32, #tpu.memory_space<vmem>>) target_semaphore(%107 : memref<!tpu.dma_semaphore, #tpu.memory_space<semaphore_mem>>)
        } else {
        }
        %c7_i32 = arith.constant 7 : i32
        %96 = arith.cmpi sgt, %74, %c7_i32 : i32
        %97 = arith.extui %96 : i1 to i32
        %c0_i32_55 = arith.constant 0 : i32
        %98 = arith.cmpi ne, %97, %c0_i32_55 : i32
        scf.if %98 {
          %c8_i32_56 = arith.constant 8 : i32
          %99 = arith.muli %72, %c8_i32_56 : i32
          %c7_i32_57 = arith.constant 7 : i32
          %100 = arith.addi %99, %c7_i32_57 : i32
          %101 = arith.index_cast %100 : i32 to index
          %102 = memref.load %arg1[%101] : memref<128xi32, #tpu.memory_space<smem>>
          %c0_i32_58 = arith.constant 0 : i32
          %c7_i32_59 = arith.constant 7 : i32
          %c0_i32_60 = arith.constant 0 : i32
          %c7_i32_61 = arith.constant 7 : i32
          %c0_i32_62 = arith.constant 0 : i32
          %103 = tpu.memref_slice %arg7[%102, %c0_i32_62] : memref<64x256xf32, #tpu.memory_space<any>> -> memref<1x256xf32, #tpu.memory_space<any>>
          %c0_i32_63 = arith.constant 0 : i32
          %104 = tpu.memref_slice %arg10[%c0_i32_58, %c7_i32_59, %71, %c0_i32_63] : memref<2x8x8x256xf32, #tpu.memory_space<vmem>> -> memref<1x1x1x256xf32, #tpu.memory_space<vmem>>
          %105 = tpu.memref_squeeze %104 : memref<1x1x1x256xf32, #tpu.memory_space<vmem>> -> memref<1x256xf32, #tpu.memory_space<vmem>>
          %106 = tpu.memref_slice %arg11[%c0_i32_60, %c7_i32_61, %71] : memref<2x8x8x!tpu.dma_semaphore, #tpu.memory_space<semaphore_mem>> -> memref<1x1x1x!tpu.dma_semaphore, #tpu.memory_space<semaphore_mem>>
          %107 = tpu.memref_squeeze %106 : memref<1x1x1x!tpu.dma_semaphore, #tpu.memory_space<semaphore_mem>> -> memref<!tpu.dma_semaphore, #tpu.memory_space<semaphore_mem>>
          tpu.enqueue_dma source(%103 : memref<1x256xf32, #tpu.memory_space<any>>) target(%105 : memref<1x256xf32, #tpu.memory_space<vmem>>) target_semaphore(%107 : memref<!tpu.dma_semaphore, #tpu.memory_space<semaphore_mem>>)
        } else {
        }
      }
      %c8_i32_41 = arith.constant 8 : i32
    } else {
    }
    %c1_i32_5 = arith.constant 1 : i32
    %13 = arith.addi %arg0, %c1_i32_5 : i32
    %c2_i32_6 = arith.constant 2 : i32
    %14 = arith.cmpi slt, %13, %c2_i32_6 : i32
    %15 = arith.extui %14 : i1 to i32
    %c0_i32_7 = arith.constant 0 : i32
    %16 = arith.cmpi ne, %15, %c0_i32_7 : i32
    scf.if %16 {
      %c1_i32_38 = arith.constant 1 : i32
      %69 = arith.addi %arg0, %c1_i32_38 : i32
      %c1_i32_39 = arith.constant 1 : i32
      %70 = arith.subi %c1_i32_39, %9 : i32
      %c0_i32_40 = arith.constant 0 : i32
      %c8_i32_41 = arith.constant 8 : i32
      %71 = arith.addi %c0_i32_40, %c8_i32_41 : i32
      %c1_i32_42 = arith.constant 1 : i32
      scf.for %arg12 = %c0_i32_40 to %71 step %c1_i32_42  : i32 {
        %c1_i32_44 = arith.constant 1 : i32
        %72 = arith.muli %arg12, %c1_i32_44 : i32
        %c0_i32_45 = arith.constant 0 : i32
        %73 = arith.addi %c0_i32_45, %72 : i32
        %c8_i32_46 = arith.constant 8 : i32
        %74 = arith.muli %69, %c8_i32_46 : i32
        %75 = arith.addi %74, %73 : i32
        %76 = arith.index_cast %75 : i32 to index
        %77 = memref.load %arg2[%76] : memref<16xi32, #tpu.memory_space<smem>>
        %c0_i32_47 = arith.constant 0 : i32
        %78 = arith.cmpi sgt, %77, %c0_i32_47 : i32
        %79 = arith.extui %78 : i1 to i32
        %c0_i32_48 = arith.constant 0 : i32
        %80 = arith.cmpi ne, %79, %c0_i32_48 : i32
        scf.if %80 {
          %c8_i32_58 = arith.constant 8 : i32
          %102 = arith.muli %75, %c8_i32_58 : i32
          %c0_i32_59 = arith.constant 0 : i32
          %103 = arith.addi %102, %c0_i32_59 : i32
          %104 = arith.index_cast %103 : i32 to index
          %105 = memref.load %arg1[%104] : memref<128xi32, #tpu.memory_space<smem>>
          %c0_i32_60 = arith.constant 0 : i32
          %c0_i32_61 = arith.constant 0 : i32
          %c0_i32_62 = arith.constant 0 : i32
          %106 = tpu.memref_slice %arg7[%105, %c0_i32_62] : memref<64x256xf32, #tpu.memory_space<any>> -> memref<1x256xf32, #tpu.memory_space<any>>
          %c0_i32_63 = arith.constant 0 : i32
          %107 = tpu.memref_slice %arg10[%70, %c0_i32_60, %73, %c0_i32_63] : memref<2x8x8x256xf32, #tpu.memory_space<vmem>> -> memref<1x1x1x256xf32, #tpu.memory_space<vmem>>
          %108 = tpu.memref_squeeze %107 : memref<1x1x1x256xf32, #tpu.memory_space<vmem>> -> memref<1x256xf32, #tpu.memory_space<vmem>>
          %109 = tpu.memref_slice %arg11[%70, %c0_i32_61, %73] : memref<2x8x8x!tpu.dma_semaphore, #tpu.memory_space<semaphore_mem>> -> memref<1x1x1x!tpu.dma_semaphore, #tpu.memory_space<semaphore_mem>>
          %110 = tpu.memref_squeeze %109 : memref<1x1x1x!tpu.dma_semaphore, #tpu.memory_space<semaphore_mem>> -> memref<!tpu.dma_semaphore, #tpu.memory_space<semaphore_mem>>
          tpu.enqueue_dma source(%106 : memref<1x256xf32, #tpu.memory_space<any>>) target(%108 : memref<1x256xf32, #tpu.memory_space<vmem>>) target_semaphore(%110 : memref<!tpu.dma_semaphore, #tpu.memory_space<semaphore_mem>>)
        } else {
        }
        %c1_i32_49 = arith.constant 1 : i32
        %81 = arith.cmpi sgt, %77, %c1_i32_49 : i32
        %82 = arith.extui %81 : i1 to i32
        %c0_i32_50 = arith.constant 0 : i32
        %83 = arith.cmpi ne, %82, %c0_i32_50 : i32
        scf.if %83 {
          %c8_i32_58 = arith.constant 8 : i32
          %102 = arith.muli %75, %c8_i32_58 : i32
          %c1_i32_59 = arith.constant 1 : i32
          %103 = arith.addi %102, %c1_i32_59 : i32
          %104 = arith.index_cast %103 : i32 to index
          %105 = memref.load %arg1[%104] : memref<128xi32, #tpu.memory_space<smem>>
          %c1_i32_60 = arith.constant 1 : i32
          %c1_i32_61 = arith.constant 1 : i32
          %c0_i32_62 = arith.constant 0 : i32
          %106 = tpu.memref_slice %arg7[%105, %c0_i32_62] : memref<64x256xf32, #tpu.memory_space<any>> -> memref<1x256xf32, #tpu.memory_space<any>>
          %c0_i32_63 = arith.constant 0 : i32
          %107 = tpu.memref_slice %arg10[%70, %c1_i32_60, %73, %c0_i32_63] : memref<2x8x8x256xf32, #tpu.memory_space<vmem>> -> memref<1x1x1x256xf32, #tpu.memory_space<vmem>>
          %108 = tpu.memref_squeeze %107 : memref<1x1x1x256xf32, #tpu.memory_space<vmem>> -> memref<1x256xf32, #tpu.memory_space<vmem>>
          %109 = tpu.memref_slice %arg11[%70, %c1_i32_61, %73] : memref<2x8x8x!tpu.dma_semaphore, #tpu.memory_space<semaphore_mem>> -> memref<1x1x1x!tpu.dma_semaphore, #tpu.memory_space<semaphore_mem>>
          %110 = tpu.memref_squeeze %109 : memref<1x1x1x!tpu.dma_semaphore, #tpu.memory_space<semaphore_mem>> -> memref<!tpu.dma_semaphore, #tpu.memory_space<semaphore_mem>>
          tpu.enqueue_dma source(%106 : memref<1x256xf32, #tpu.memory_space<any>>) target(%108 : memref<1x256xf32, #tpu.memory_space<vmem>>) target_semaphore(%110 : memref<!tpu.dma_semaphore, #tpu.memory_space<semaphore_mem>>)
        } else {
        }
        %c2_i32_51 = arith.constant 2 : i32
        %84 = arith.cmpi sgt, %77, %c2_i32_51 : i32
        %85 = arith.extui %84 : i1 to i32
        %c0_i32_52 = arith.constant 0 : i32
        %86 = arith.cmpi ne, %85, %c0_i32_52 : i32
        scf.if %86 {
          %c8_i32_58 = arith.constant 8 : i32
          %102 = arith.muli %75, %c8_i32_58 : i32
          %c2_i32_59 = arith.constant 2 : i32
          %103 = arith.addi %102, %c2_i32_59 : i32
          %104 = arith.index_cast %103 : i32 to index
          %105 = memref.load %arg1[%104] : memref<128xi32, #tpu.memory_space<smem>>
          %c2_i32_60 = arith.constant 2 : i32
          %c2_i32_61 = arith.constant 2 : i32
          %c0_i32_62 = arith.constant 0 : i32
          %106 = tpu.memref_slice %arg7[%105, %c0_i32_62] : memref<64x256xf32, #tpu.memory_space<any>> -> memref<1x256xf32, #tpu.memory_space<any>>
          %c0_i32_63 = arith.constant 0 : i32
          %107 = tpu.memref_slice %arg10[%70, %c2_i32_60, %73, %c0_i32_63] : memref<2x8x8x256xf32, #tpu.memory_space<vmem>> -> memref<1x1x1x256xf32, #tpu.memory_space<vmem>>
          %108 = tpu.memref_squeeze %107 : memref<1x1x1x256xf32, #tpu.memory_space<vmem>> -> memref<1x256xf32, #tpu.memory_space<vmem>>
          %109 = tpu.memref_slice %arg11[%70, %c2_i32_61, %73] : memref<2x8x8x!tpu.dma_semaphore, #tpu.memory_space<semaphore_mem>> -> memref<1x1x1x!tpu.dma_semaphore, #tpu.memory_space<semaphore_mem>>
          %110 = tpu.memref_squeeze %109 : memref<1x1x1x!tpu.dma_semaphore, #tpu.memory_space<semaphore_mem>> -> memref<!tpu.dma_semaphore, #tpu.memory_space<semaphore_mem>>
          tpu.enqueue_dma source(%106 : memref<1x256xf32, #tpu.memory_space<any>>) target(%108 : memref<1x256xf32, #tpu.memory_space<vmem>>) target_semaphore(%110 : memref<!tpu.dma_semaphore, #tpu.memory_space<semaphore_mem>>)
        } else {
        }
        %c3_i32 = arith.constant 3 : i32
        %87 = arith.cmpi sgt, %77, %c3_i32 : i32
        %88 = arith.extui %87 : i1 to i32
        %c0_i32_53 = arith.constant 0 : i32
        %89 = arith.cmpi ne, %88, %c0_i32_53 : i32
        scf.if %89 {
          %c8_i32_58 = arith.constant 8 : i32
          %102 = arith.muli %75, %c8_i32_58 : i32
          %c3_i32_59 = arith.constant 3 : i32
          %103 = arith.addi %102, %c3_i32_59 : i32
          %104 = arith.index_cast %103 : i32 to index
          %105 = memref.load %arg1[%104] : memref<128xi32, #tpu.memory_space<smem>>
          %c3_i32_60 = arith.constant 3 : i32
          %c3_i32_61 = arith.constant 3 : i32
          %c0_i32_62 = arith.constant 0 : i32
          %106 = tpu.memref_slice %arg7[%105, %c0_i32_62] : memref<64x256xf32, #tpu.memory_space<any>> -> memref<1x256xf32, #tpu.memory_space<any>>
          %c0_i32_63 = arith.constant 0 : i32
          %107 = tpu.memref_slice %arg10[%70, %c3_i32_60, %73, %c0_i32_63] : memref<2x8x8x256xf32, #tpu.memory_space<vmem>> -> memref<1x1x1x256xf32, #tpu.memory_space<vmem>>
          %108 = tpu.memref_squeeze %107 : memref<1x1x1x256xf32, #tpu.memory_space<vmem>> -> memref<1x256xf32, #tpu.memory_space<vmem>>
          %109 = tpu.memref_slice %arg11[%70, %c3_i32_61, %73] : memref<2x8x8x!tpu.dma_semaphore, #tpu.memory_space<semaphore_mem>> -> memref<1x1x1x!tpu.dma_semaphore, #tpu.memory_space<semaphore_mem>>
          %110 = tpu.memref_squeeze %109 : memref<1x1x1x!tpu.dma_semaphore, #tpu.memory_space<semaphore_mem>> -> memref<!tpu.dma_semaphore, #tpu.memory_space<semaphore_mem>>
          tpu.enqueue_dma source(%106 : memref<1x256xf32, #tpu.memory_space<any>>) target(%108 : memref<1x256xf32, #tpu.memory_space<vmem>>) target_semaphore(%110 : memref<!tpu.dma_semaphore, #tpu.memory_space<semaphore_mem>>)
        } else {
        }
        %c4_i32 = arith.constant 4 : i32
        %90 = arith.cmpi sgt, %77, %c4_i32 : i32
        %91 = arith.extui %90 : i1 to i32
        %c0_i32_54 = arith.constant 0 : i32
        %92 = arith.cmpi ne, %91, %c0_i32_54 : i32
        scf.if %92 {
          %c8_i32_58 = arith.constant 8 : i32
          %102 = arith.muli %75, %c8_i32_58 : i32
          %c4_i32_59 = arith.constant 4 : i32
          %103 = arith.addi %102, %c4_i32_59 : i32
          %104 = arith.index_cast %103 : i32 to index
          %105 = memref.load %arg1[%104] : memref<128xi32, #tpu.memory_space<smem>>
          %c4_i32_60 = arith.constant 4 : i32
          %c4_i32_61 = arith.constant 4 : i32
          %c0_i32_62 = arith.constant 0 : i32
          %106 = tpu.memref_slice %arg7[%105, %c0_i32_62] : memref<64x256xf32, #tpu.memory_space<any>> -> memref<1x256xf32, #tpu.memory_space<any>>
          %c0_i32_63 = arith.constant 0 : i32
          %107 = tpu.memref_slice %arg10[%70, %c4_i32_60, %73, %c0_i32_63] : memref<2x8x8x256xf32, #tpu.memory_space<vmem>> -> memref<1x1x1x256xf32, #tpu.memory_space<vmem>>
          %108 = tpu.memref_squeeze %107 : memref<1x1x1x256xf32, #tpu.memory_space<vmem>> -> memref<1x256xf32, #tpu.memory_space<vmem>>
          %109 = tpu.memref_slice %arg11[%70, %c4_i32_61, %73] : memref<2x8x8x!tpu.dma_semaphore, #tpu.memory_space<semaphore_mem>> -> memref<1x1x1x!tpu.dma_semaphore, #tpu.memory_space<semaphore_mem>>
          %110 = tpu.memref_squeeze %109 : memref<1x1x1x!tpu.dma_semaphore, #tpu.memory_space<semaphore_mem>> -> memref<!tpu.dma_semaphore, #tpu.memory_space<semaphore_mem>>
          tpu.enqueue_dma source(%106 : memref<1x256xf32, #tpu.memory_space<any>>) target(%108 : memref<1x256xf32, #tpu.memory_space<vmem>>) target_semaphore(%110 : memref<!tpu.dma_semaphore, #tpu.memory_space<semaphore_mem>>)
        } else {
        }
        %c5_i32 = arith.constant 5 : i32
        %93 = arith.cmpi sgt, %77, %c5_i32 : i32
        %94 = arith.extui %93 : i1 to i32
        %c0_i32_55 = arith.constant 0 : i32
        %95 = arith.cmpi ne, %94, %c0_i32_55 : i32
        scf.if %95 {
          %c8_i32_58 = arith.constant 8 : i32
          %102 = arith.muli %75, %c8_i32_58 : i32
          %c5_i32_59 = arith.constant 5 : i32
          %103 = arith.addi %102, %c5_i32_59 : i32
          %104 = arith.index_cast %103 : i32 to index
          %105 = memref.load %arg1[%104] : memref<128xi32, #tpu.memory_space<smem>>
          %c5_i32_60 = arith.constant 5 : i32
          %c5_i32_61 = arith.constant 5 : i32
          %c0_i32_62 = arith.constant 0 : i32
          %106 = tpu.memref_slice %arg7[%105, %c0_i32_62] : memref<64x256xf32, #tpu.memory_space<any>> -> memref<1x256xf32, #tpu.memory_space<any>>
          %c0_i32_63 = arith.constant 0 : i32
          %107 = tpu.memref_slice %arg10[%70, %c5_i32_60, %73, %c0_i32_63] : memref<2x8x8x256xf32, #tpu.memory_space<vmem>> -> memref<1x1x1x256xf32, #tpu.memory_space<vmem>>
          %108 = tpu.memref_squeeze %107 : memref<1x1x1x256xf32, #tpu.memory_space<vmem>> -> memref<1x256xf32, #tpu.memory_space<vmem>>
          %109 = tpu.memref_slice %arg11[%70, %c5_i32_61, %73] : memref<2x8x8x!tpu.dma_semaphore, #tpu.memory_space<semaphore_mem>> -> memref<1x1x1x!tpu.dma_semaphore, #tpu.memory_space<semaphore_mem>>
          %110 = tpu.memref_squeeze %109 : memref<1x1x1x!tpu.dma_semaphore, #tpu.memory_space<semaphore_mem>> -> memref<!tpu.dma_semaphore, #tpu.memory_space<semaphore_mem>>
          tpu.enqueue_dma source(%106 : memref<1x256xf32, #tpu.memory_space<any>>) target(%108 : memref<1x256xf32, #tpu.memory_space<vmem>>) target_semaphore(%110 : memref<!tpu.dma_semaphore, #tpu.memory_space<semaphore_mem>>)
        } else {
        }
        %c6_i32 = arith.constant 6 : i32
        %96 = arith.cmpi sgt, %77, %c6_i32 : i32
        %97 = arith.extui %96 : i1 to i32
        %c0_i32_56 = arith.constant 0 : i32
        %98 = arith.cmpi ne, %97, %c0_i32_56 : i32
        scf.if %98 {
          %c8_i32_58 = arith.constant 8 : i32
          %102 = arith.muli %75, %c8_i32_58 : i32
          %c6_i32_59 = arith.constant 6 : i32
          %103 = arith.addi %102, %c6_i32_59 : i32
          %104 = arith.index_cast %103 : i32 to index
          %105 = memref.load %arg1[%104] : memref<128xi32, #tpu.memory_space<smem>>
          %c6_i32_60 = arith.constant 6 : i32
          %c6_i32_61 = arith.constant 6 : i32
          %c0_i32_62 = arith.constant 0 : i32
          %106 = tpu.memref_slice %arg7[%105, %c0_i32_62] : memref<64x256xf32, #tpu.memory_space<any>> -> memref<1x256xf32, #tpu.memory_space<any>>
          %c0_i32_63 = arith.constant 0 : i32
          %107 = tpu.memref_slice %arg10[%70, %c6_i32_60, %73, %c0_i32_63] : memref<2x8x8x256xf32, #tpu.memory_space<vmem>> -> memref<1x1x1x256xf32, #tpu.memory_space<vmem>>
          %108 = tpu.memref_squeeze %107 : memref<1x1x1x256xf32, #tpu.memory_space<vmem>> -> memref<1x256xf32, #tpu.memory_space<vmem>>
          %109 = tpu.memref_slice %arg11[%70, %c6_i32_61, %73] : memref<2x8x8x!tpu.dma_semaphore, #tpu.memory_space<semaphore_mem>> -> memref<1x1x1x!tpu.dma_semaphore, #tpu.memory_space<semaphore_mem>>
          %110 = tpu.memref_squeeze %109 : memref<1x1x1x!tpu.dma_semaphore, #tpu.memory_space<semaphore_mem>> -> memref<!tpu.dma_semaphore, #tpu.memory_space<semaphore_mem>>
          tpu.enqueue_dma source(%106 : memref<1x256xf32, #tpu.memory_space<any>>) target(%108 : memref<1x256xf32, #tpu.memory_space<vmem>>) target_semaphore(%110 : memref<!tpu.dma_semaphore, #tpu.memory_space<semaphore_mem>>)
        } else {
        }
        %c7_i32 = arith.constant 7 : i32
        %99 = arith.cmpi sgt, %77, %c7_i32 : i32
        %100 = arith.extui %99 : i1 to i32
        %c0_i32_57 = arith.constant 0 : i32
        %101 = arith.cmpi ne, %100, %c0_i32_57 : i32
        scf.if %101 {
          %c8_i32_58 = arith.constant 8 : i32
          %102 = arith.muli %75, %c8_i32_58 : i32
          %c7_i32_59 = arith.constant 7 : i32
          %103 = arith.addi %102, %c7_i32_59 : i32
          %104 = arith.index_cast %103 : i32 to index
          %105 = memref.load %arg1[%104] : memref<128xi32, #tpu.memory_space<smem>>
          %c7_i32_60 = arith.constant 7 : i32
          %c7_i32_61 = arith.constant 7 : i32
          %c0_i32_62 = arith.constant 0 : i32
          %106 = tpu.memref_slice %arg7[%105, %c0_i32_62] : memref<64x256xf32, #tpu.memory_space<any>> -> memref<1x256xf32, #tpu.memory_space<any>>
          %c0_i32_63 = arith.constant 0 : i32
          %107 = tpu.memref_slice %arg10[%70, %c7_i32_60, %73, %c0_i32_63] : memref<2x8x8x256xf32, #tpu.memory_space<vmem>> -> memref<1x1x1x256xf32, #tpu.memory_space<vmem>>
          %108 = tpu.memref_squeeze %107 : memref<1x1x1x256xf32, #tpu.memory_space<vmem>> -> memref<1x256xf32, #tpu.memory_space<vmem>>
          %109 = tpu.memref_slice %arg11[%70, %c7_i32_61, %73] : memref<2x8x8x!tpu.dma_semaphore, #tpu.memory_space<semaphore_mem>> -> memref<1x1x1x!tpu.dma_semaphore, #tpu.memory_space<semaphore_mem>>
          %110 = tpu.memref_squeeze %109 : memref<1x1x1x!tpu.dma_semaphore, #tpu.memory_space<semaphore_mem>> -> memref<!tpu.dma_semaphore, #tpu.memory_space<semaphore_mem>>
          tpu.enqueue_dma source(%106 : memref<1x256xf32, #tpu.memory_space<any>>) target(%108 : memref<1x256xf32, #tpu.memory_space<vmem>>) target_semaphore(%110 : memref<!tpu.dma_semaphore, #tpu.memory_space<semaphore_mem>>)
        } else {
        }
      }
      %c8_i32_43 = arith.constant 8 : i32
    } else {
    }
    %c0_i32_8 = arith.constant 0 : i32
    %c8_i32 = arith.constant 8 : i32
    %17 = arith.addi %c0_i32_8, %c8_i32 : i32
    %c1_i32_9 = arith.constant 1 : i32
    scf.for %arg12 = %c0_i32_8 to %17 step %c1_i32_9  : i32 {
      %c1_i32_38 = arith.constant 1 : i32
      %69 = arith.muli %arg12, %c1_i32_38 : i32
      %c0_i32_39 = arith.constant 0 : i32
      %70 = arith.addi %c0_i32_39, %69 : i32
      %c8_i32_40 = arith.constant 8 : i32
      %71 = arith.muli %arg0, %c8_i32_40 : i32
      %72 = arith.addi %71, %70 : i32
      %73 = arith.index_cast %72 : i32 to index
      %74 = memref.load %arg2[%73] : memref<16xi32, #tpu.memory_space<smem>>
      %c0_i32_41 = arith.constant 0 : i32
      %75 = arith.cmpi sgt, %74, %c0_i32_41 : i32
      %76 = arith.extui %75 : i1 to i32
      %c0_i32_42 = arith.constant 0 : i32
      %77 = arith.cmpi ne, %76, %c0_i32_42 : i32
      scf.if %77 {
        %c0_i32_52 = arith.constant 0 : i32
        %c0_i32_53 = arith.constant 0 : i32
        %c0_i32_54 = arith.constant 0 : i32
        %c0_i32_55 = arith.constant 0 : i32
        %99 = tpu.memref_slice %arg7[%c0_i32_54, %c0_i32_55] : memref<64x256xf32, #tpu.memory_space<any>> -> memref<1x256xf32, #tpu.memory_space<any>>
        %c0_i32_56 = arith.constant 0 : i32
        %100 = tpu.memref_slice %arg10[%9, %c0_i32_52, %70, %c0_i32_56] : memref<2x8x8x256xf32, #tpu.memory_space<vmem>> -> memref<1x1x1x256xf32, #tpu.memory_space<vmem>>
        %101 = tpu.memref_squeeze %100 : memref<1x1x1x256xf32, #tpu.memory_space<vmem>> -> memref<1x256xf32, #tpu.memory_space<vmem>>
        %102 = tpu.memref_slice %arg11[%9, %c0_i32_53, %70] : memref<2x8x8x!tpu.dma_semaphore, #tpu.memory_space<semaphore_mem>> -> memref<1x1x1x!tpu.dma_semaphore, #tpu.memory_space<semaphore_mem>>
        %103 = tpu.memref_squeeze %102 : memref<1x1x1x!tpu.dma_semaphore, #tpu.memory_space<semaphore_mem>> -> memref<!tpu.dma_semaphore, #tpu.memory_space<semaphore_mem>>
        tpu.wait_dma2 semaphore(%103 : memref<!tpu.dma_semaphore, #tpu.memory_space<semaphore_mem>>) src(%99 : memref<1x256xf32, #tpu.memory_space<any>>) dst(%101 : memref<1x256xf32, #tpu.memory_space<vmem>>)
      } else {
      }
      %c1_i32_43 = arith.constant 1 : i32
      %78 = arith.cmpi sgt, %74, %c1_i32_43 : i32
      %79 = arith.extui %78 : i1 to i32
      %c0_i32_44 = arith.constant 0 : i32
      %80 = arith.cmpi ne, %79, %c0_i32_44 : i32
      scf.if %80 {
        %c1_i32_52 = arith.constant 1 : i32
        %c1_i32_53 = arith.constant 1 : i32
        %c0_i32_54 = arith.constant 0 : i32
        %c0_i32_55 = arith.constant 0 : i32
        %99 = tpu.memref_slice %arg7[%c0_i32_54, %c0_i32_55] : memref<64x256xf32, #tpu.memory_space<any>> -> memref<1x256xf32, #tpu.memory_space<any>>
        %c0_i32_56 = arith.constant 0 : i32
        %100 = tpu.memref_slice %arg10[%9, %c1_i32_52, %70, %c0_i32_56] : memref<2x8x8x256xf32, #tpu.memory_space<vmem>> -> memref<1x1x1x256xf32, #tpu.memory_space<vmem>>
        %101 = tpu.memref_squeeze %100 : memref<1x1x1x256xf32, #tpu.memory_space<vmem>> -> memref<1x256xf32, #tpu.memory_space<vmem>>
        %102 = tpu.memref_slice %arg11[%9, %c1_i32_53, %70] : memref<2x8x8x!tpu.dma_semaphore, #tpu.memory_space<semaphore_mem>> -> memref<1x1x1x!tpu.dma_semaphore, #tpu.memory_space<semaphore_mem>>
        %103 = tpu.memref_squeeze %102 : memref<1x1x1x!tpu.dma_semaphore, #tpu.memory_space<semaphore_mem>> -> memref<!tpu.dma_semaphore, #tpu.memory_space<semaphore_mem>>
        tpu.wait_dma2 semaphore(%103 : memref<!tpu.dma_semaphore, #tpu.memory_space<semaphore_mem>>) src(%99 : memref<1x256xf32, #tpu.memory_space<any>>) dst(%101 : memref<1x256xf32, #tpu.memory_space<vmem>>)
      } else {
      }
      %c2_i32_45 = arith.constant 2 : i32
      %81 = arith.cmpi sgt, %74, %c2_i32_45 : i32
      %82 = arith.extui %81 : i1 to i32
      %c0_i32_46 = arith.constant 0 : i32
      %83 = arith.cmpi ne, %82, %c0_i32_46 : i32
      scf.if %83 {
        %c2_i32_52 = arith.constant 2 : i32
        %c2_i32_53 = arith.constant 2 : i32
        %c0_i32_54 = arith.constant 0 : i32
        %c0_i32_55 = arith.constant 0 : i32
        %99 = tpu.memref_slice %arg7[%c0_i32_54, %c0_i32_55] : memref<64x256xf32, #tpu.memory_space<any>> -> memref<1x256xf32, #tpu.memory_space<any>>
        %c0_i32_56 = arith.constant 0 : i32
        %100 = tpu.memref_slice %arg10[%9, %c2_i32_52, %70, %c0_i32_56] : memref<2x8x8x256xf32, #tpu.memory_space<vmem>> -> memref<1x1x1x256xf32, #tpu.memory_space<vmem>>
        %101 = tpu.memref_squeeze %100 : memref<1x1x1x256xf32, #tpu.memory_space<vmem>> -> memref<1x256xf32, #tpu.memory_space<vmem>>
        %102 = tpu.memref_slice %arg11[%9, %c2_i32_53, %70] : memref<2x8x8x!tpu.dma_semaphore, #tpu.memory_space<semaphore_mem>> -> memref<1x1x1x!tpu.dma_semaphore, #tpu.memory_space<semaphore_mem>>
        %103 = tpu.memref_squeeze %102 : memref<1x1x1x!tpu.dma_semaphore, #tpu.memory_space<semaphore_mem>> -> memref<!tpu.dma_semaphore, #tpu.memory_space<semaphore_mem>>
        tpu.wait_dma2 semaphore(%103 : memref<!tpu.dma_semaphore, #tpu.memory_space<semaphore_mem>>) src(%99 : memref<1x256xf32, #tpu.memory_space<any>>) dst(%101 : memref<1x256xf32, #tpu.memory_space<vmem>>)
      } else {
      }
      %c3_i32 = arith.constant 3 : i32
      %84 = arith.cmpi sgt, %74, %c3_i32 : i32
      %85 = arith.extui %84 : i1 to i32
      %c0_i32_47 = arith.constant 0 : i32
      %86 = arith.cmpi ne, %85, %c0_i32_47 : i32
      scf.if %86 {
        %c3_i32_52 = arith.constant 3 : i32
        %c3_i32_53 = arith.constant 3 : i32
        %c0_i32_54 = arith.constant 0 : i32
        %c0_i32_55 = arith.constant 0 : i32
        %99 = tpu.memref_slice %arg7[%c0_i32_54, %c0_i32_55] : memref<64x256xf32, #tpu.memory_space<any>> -> memref<1x256xf32, #tpu.memory_space<any>>
        %c0_i32_56 = arith.constant 0 : i32
        %100 = tpu.memref_slice %arg10[%9, %c3_i32_52, %70, %c0_i32_56] : memref<2x8x8x256xf32, #tpu.memory_space<vmem>> -> memref<1x1x1x256xf32, #tpu.memory_space<vmem>>
        %101 = tpu.memref_squeeze %100 : memref<1x1x1x256xf32, #tpu.memory_space<vmem>> -> memref<1x256xf32, #tpu.memory_space<vmem>>
        %102 = tpu.memref_slice %arg11[%9, %c3_i32_53, %70] : memref<2x8x8x!tpu.dma_semaphore, #tpu.memory_space<semaphore_mem>> -> memref<1x1x1x!tpu.dma_semaphore, #tpu.memory_space<semaphore_mem>>
        %103 = tpu.memref_squeeze %102 : memref<1x1x1x!tpu.dma_semaphore, #tpu.memory_space<semaphore_mem>> -> memref<!tpu.dma_semaphore, #tpu.memory_space<semaphore_mem>>
        tpu.wait_dma2 semaphore(%103 : memref<!tpu.dma_semaphore, #tpu.memory_space<semaphore_mem>>) src(%99 : memref<1x256xf32, #tpu.memory_space<any>>) dst(%101 : memref<1x256xf32, #tpu.memory_space<vmem>>)
      } else {
      }
      %c4_i32 = arith.constant 4 : i32
      %87 = arith.cmpi sgt, %74, %c4_i32 : i32
      %88 = arith.extui %87 : i1 to i32
      %c0_i32_48 = arith.constant 0 : i32
      %89 = arith.cmpi ne, %88, %c0_i32_48 : i32
      scf.if %89 {
        %c4_i32_52 = arith.constant 4 : i32
        %c4_i32_53 = arith.constant 4 : i32
        %c0_i32_54 = arith.constant 0 : i32
        %c0_i32_55 = arith.constant 0 : i32
        %99 = tpu.memref_slice %arg7[%c0_i32_54, %c0_i32_55] : memref<64x256xf32, #tpu.memory_space<any>> -> memref<1x256xf32, #tpu.memory_space<any>>
        %c0_i32_56 = arith.constant 0 : i32
        %100 = tpu.memref_slice %arg10[%9, %c4_i32_52, %70, %c0_i32_56] : memref<2x8x8x256xf32, #tpu.memory_space<vmem>> -> memref<1x1x1x256xf32, #tpu.memory_space<vmem>>
        %101 = tpu.memref_squeeze %100 : memref<1x1x1x256xf32, #tpu.memory_space<vmem>> -> memref<1x256xf32, #tpu.memory_space<vmem>>
        %102 = tpu.memref_slice %arg11[%9, %c4_i32_53, %70] : memref<2x8x8x!tpu.dma_semaphore, #tpu.memory_space<semaphore_mem>> -> memref<1x1x1x!tpu.dma_semaphore, #tpu.memory_space<semaphore_mem>>
        %103 = tpu.memref_squeeze %102 : memref<1x1x1x!tpu.dma_semaphore, #tpu.memory_space<semaphore_mem>> -> memref<!tpu.dma_semaphore, #tpu.memory_space<semaphore_mem>>
        tpu.wait_dma2 semaphore(%103 : memref<!tpu.dma_semaphore, #tpu.memory_space<semaphore_mem>>) src(%99 : memref<1x256xf32, #tpu.memory_space<any>>) dst(%101 : memref<1x256xf32, #tpu.memory_space<vmem>>)
      } else {
      }
      %c5_i32 = arith.constant 5 : i32
      %90 = arith.cmpi sgt, %74, %c5_i32 : i32
      %91 = arith.extui %90 : i1 to i32
      %c0_i32_49 = arith.constant 0 : i32
      %92 = arith.cmpi ne, %91, %c0_i32_49 : i32
      scf.if %92 {
        %c5_i32_52 = arith.constant 5 : i32
        %c5_i32_53 = arith.constant 5 : i32
        %c0_i32_54 = arith.constant 0 : i32
        %c0_i32_55 = arith.constant 0 : i32
        %99 = tpu.memref_slice %arg7[%c0_i32_54, %c0_i32_55] : memref<64x256xf32, #tpu.memory_space<any>> -> memref<1x256xf32, #tpu.memory_space<any>>
        %c0_i32_56 = arith.constant 0 : i32
        %100 = tpu.memref_slice %arg10[%9, %c5_i32_52, %70, %c0_i32_56] : memref<2x8x8x256xf32, #tpu.memory_space<vmem>> -> memref<1x1x1x256xf32, #tpu.memory_space<vmem>>
        %101 = tpu.memref_squeeze %100 : memref<1x1x1x256xf32, #tpu.memory_space<vmem>> -> memref<1x256xf32, #tpu.memory_space<vmem>>
        %102 = tpu.memref_slice %arg11[%9, %c5_i32_53, %70] : memref<2x8x8x!tpu.dma_semaphore, #tpu.memory_space<semaphore_mem>> -> memref<1x1x1x!tpu.dma_semaphore, #tpu.memory_space<semaphore_mem>>
        %103 = tpu.memref_squeeze %102 : memref<1x1x1x!tpu.dma_semaphore, #tpu.memory_space<semaphore_mem>> -> memref<!tpu.dma_semaphore, #tpu.memory_space<semaphore_mem>>
        tpu.wait_dma2 semaphore(%103 : memref<!tpu.dma_semaphore, #tpu.memory_space<semaphore_mem>>) src(%99 : memref<1x256xf32, #tpu.memory_space<any>>) dst(%101 : memref<1x256xf32, #tpu.memory_space<vmem>>)
      } else {
      }
      %c6_i32 = arith.constant 6 : i32
      %93 = arith.cmpi sgt, %74, %c6_i32 : i32
      %94 = arith.extui %93 : i1 to i32
      %c0_i32_50 = arith.constant 0 : i32
      %95 = arith.cmpi ne, %94, %c0_i32_50 : i32
      scf.if %95 {
        %c6_i32_52 = arith.constant 6 : i32
        %c6_i32_53 = arith.constant 6 : i32
        %c0_i32_54 = arith.constant 0 : i32
        %c0_i32_55 = arith.constant 0 : i32
        %99 = tpu.memref_slice %arg7[%c0_i32_54, %c0_i32_55] : memref<64x256xf32, #tpu.memory_space<any>> -> memref<1x256xf32, #tpu.memory_space<any>>
        %c0_i32_56 = arith.constant 0 : i32
        %100 = tpu.memref_slice %arg10[%9, %c6_i32_52, %70, %c0_i32_56] : memref<2x8x8x256xf32, #tpu.memory_space<vmem>> -> memref<1x1x1x256xf32, #tpu.memory_space<vmem>>
        %101 = tpu.memref_squeeze %100 : memref<1x1x1x256xf32, #tpu.memory_space<vmem>> -> memref<1x256xf32, #tpu.memory_space<vmem>>
        %102 = tpu.memref_slice %arg11[%9, %c6_i32_53, %70] : memref<2x8x8x!tpu.dma_semaphore, #tpu.memory_space<semaphore_mem>> -> memref<1x1x1x!tpu.dma_semaphore, #tpu.memory_space<semaphore_mem>>
        %103 = tpu.memref_squeeze %102 : memref<1x1x1x!tpu.dma_semaphore, #tpu.memory_space<semaphore_mem>> -> memref<!tpu.dma_semaphore, #tpu.memory_space<semaphore_mem>>
        tpu.wait_dma2 semaphore(%103 : memref<!tpu.dma_semaphore, #tpu.memory_space<semaphore_mem>>) src(%99 : memref<1x256xf32, #tpu.memory_space<any>>) dst(%101 : memref<1x256xf32, #tpu.memory_space<vmem>>)
      } else {
      }
      %c7_i32 = arith.constant 7 : i32
      %96 = arith.cmpi sgt, %74, %c7_i32 : i32
      %97 = arith.extui %96 : i1 to i32
      %c0_i32_51 = arith.constant 0 : i32
      %98 = arith.cmpi ne, %97, %c0_i32_51 : i32
      scf.if %98 {
        %c7_i32_52 = arith.constant 7 : i32
        %c7_i32_53 = arith.constant 7 : i32
        %c0_i32_54 = arith.constant 0 : i32
        %c0_i32_55 = arith.constant 0 : i32
        %99 = tpu.memref_slice %arg7[%c0_i32_54, %c0_i32_55] : memref<64x256xf32, #tpu.memory_space<any>> -> memref<1x256xf32, #tpu.memory_space<any>>
        %c0_i32_56 = arith.constant 0 : i32
        %100 = tpu.memref_slice %arg10[%9, %c7_i32_52, %70, %c0_i32_56] : memref<2x8x8x256xf32, #tpu.memory_space<vmem>> -> memref<1x1x1x256xf32, #tpu.memory_space<vmem>>
        %101 = tpu.memref_squeeze %100 : memref<1x1x1x256xf32, #tpu.memory_space<vmem>> -> memref<1x256xf32, #tpu.memory_space<vmem>>
        %102 = tpu.memref_slice %arg11[%9, %c7_i32_53, %70] : memref<2x8x8x!tpu.dma_semaphore, #tpu.memory_space<semaphore_mem>> -> memref<1x1x1x!tpu.dma_semaphore, #tpu.memory_space<semaphore_mem>>
        %103 = tpu.memref_squeeze %102 : memref<1x1x1x!tpu.dma_semaphore, #tpu.memory_space<semaphore_mem>> -> memref<!tpu.dma_semaphore, #tpu.memory_space<semaphore_mem>>
        tpu.wait_dma2 semaphore(%103 : memref<!tpu.dma_semaphore, #tpu.memory_space<semaphore_mem>>) src(%99 : memref<1x256xf32, #tpu.memory_space<any>>) dst(%101 : memref<1x256xf32, #tpu.memory_space<vmem>>)
      } else {
      }
    }
    %c8_i32_10 = arith.constant 8 : i32
    %c0 = arith.constant 0 : index
    %c0_11 = arith.constant 0 : index
    %c0_12 = arith.constant 0 : index
    %18 = vector.load %arg3[%c0, %c0_11, %c0_12] : memref<1x8x256xf32, #tpu.memory_space<vmem>>, vector<1x8x256xf32>
    %19 = vector.shape_cast %18 : vector<1x8x256xf32> to vector<8x256xf32>
    %20 = arith.index_cast %9 : i32 to index
    %c0_13 = arith.constant 0 : index
    %c0_14 = arith.constant 0 : index
    %c0_15 = arith.constant 0 : index
    %21 = vector.load %arg10[%20, %c0_13, %c0_14, %c0_15] : memref<2x8x8x256xf32, #tpu.memory_space<vmem>>, vector<1x8x8x256xf32>
    %22 = vector.shape_cast %21 : vector<1x8x8x256xf32> to vector<8x8x256xf32>
    %23 = vector.shape_cast %19 : vector<8x256xf32> to vector<1x8x256xf32>
    %24 = vector.broadcast %23 : vector<1x8x256xf32> to vector<8x8x256xf32>
    %25 = arith.mulf %22, %24 : vector<8x8x256xf32>
    %cst = arith.constant dense<0.000000e+00> : vector<8x8xf32>
    %26 = vector.multi_reduction <add>, %25, %cst [2] : vector<8x8x256xf32> to vector<8x8xf32>
    %c0_16 = arith.constant 0 : index
    %c0_17 = arith.constant 0 : index
    %c0_18 = arith.constant 0 : index
    %27 = vector.load %arg4[%c0_16, %c0_17, %c0_18] : memref<1x8x8xf32, #tpu.memory_space<vmem>>, vector<1x8x8xf32>
    %28 = vector.shape_cast %27 : vector<1x8x8xf32> to vector<8x8xf32>
    %29 = arith.addf %26, %28 : vector<8x8xf32>
    %30 = tpu.iota {dimensions = array<i32: 0>} : vector<8x8xi32>
    %c0_19 = arith.constant 0 : index
    %c0_20 = arith.constant 0 : index
    %c0_21 = arith.constant 0 : index
    %31 = vector.load %arg5[%c0_19, %c0_20, %c0_21] : memref<1x1x8xi32, #tpu.memory_space<vmem>>, vector<1x1x8xi32>
    %32 = vector.shape_cast %31 : vector<1x1x8xi32> to vector<1x8xi32>
    %33 = vector.broadcast %32 : vector<1x8xi32> to vector<8x8xi32>
    %34 = arith.cmpi slt, %30, %33 : vector<8x8xi32>
    %cst_22 = arith.constant -1.000000e+30 : f32
    %35 = vector.broadcast %cst_22 : f32 to vector<8x8xf32>
    %36 = arith.select %34, %29, %35 : vector<8x8xi1>, vector<8x8xf32>
    %c0_23 = arith.constant 0 : index
    %c0_24 = arith.constant 0 : index
    %c0_25 = arith.constant 0 : index
    %37 = vector.load %arg6[%c0_23, %c0_24, %c0_25] : memref<1x1x8xi32, #tpu.memory_space<vmem>>, vector<1x1x8xi32>
    %38 = vector.shape_cast %37 : vector<1x1x8xi32> to vector<1x8xi32>
    %cst_26 = arith.constant dense<0xFF800000> : vector<8xf32>
    %39 = vector.multi_reduction <maximumf>, %36, %cst_26 [0] : vector<8x8xf32> to vector<8xf32>
    %40 = vector.shape_cast %39 : vector<8xf32> to vector<1x8xf32>
    %41 = vector.broadcast %40 : vector<1x8xf32> to vector<8x8xf32>
    %42 = arith.cmpf oeq, %36, %41 : vector<8x8xf32>
    %c8_i32_27 = arith.constant 8 : i32
    %43 = vector.broadcast %c8_i32_27 : i32 to vector<8x8xi32>
    %44 = arith.select %42, %30, %43 : vector<8x8xi1>, vector<8x8xi32>
    %cst_28 = arith.constant dense<2147483647> : vector<8xi32>
    %45 = vector.multi_reduction <minsi>, %44, %cst_28 [0] : vector<8x8xi32> to vector<8xi32>
    %46 = vector.shape_cast %45 : vector<8xi32> to vector<1x8xi32>
    %47 = arith.cmpi eq, %46, %38 : vector<1x8xi32>
    %48 = arith.extui %47 : vector<1x8xi1> to vector<1x8xi32>
    %c0_29 = arith.constant 0 : index
    %c0_30 = arith.constant 0 : index
    %c0_31 = arith.constant 0 : index
    %49 = vector.load %arg9[%c0_29, %c0_30, %c0_31] : memref<1x1x8xi32, #tpu.memory_space<vmem>>, vector<1x1x8xi32>
    %50 = vector.shape_cast %49 : vector<1x1x8xi32> to vector<1x8xi32>
    %51 = vector.shape_cast %48 : vector<1x8xi32> to vector<1x1x8xi32>
    tpu.vector_store %arg9[%c0_29, %c0_30, %c0_31], %51 {strides = array<i32>} : memref<1x1x8xi32, #tpu.memory_space<vmem>>, vector<1x1x8xi32>,
    %52 = vector.broadcast %40 : vector<1x8xf32> to vector<8x8xf32>
    %53 = arith.subf %36, %52 : vector<8x8xf32>
    %54 = math.exp %53 : vector<8x8xf32>
    %cst_32 = arith.constant dense<0.000000e+00> : vector<8xf32>
    %55 = vector.multi_reduction <add>, %54, %cst_32 [0] : vector<8x8xf32> to vector<8xf32>
    %56 = vector.shape_cast %55 : vector<8xf32> to vector<1x8xf32>
    %57 = math.log %56 : vector<1x8xf32>
    %58 = arith.addf %40, %57 : vector<1x8xf32>
    %59 = vector.broadcast %38 : vector<1x8xi32> to vector<8x8xi32>
    %60 = arith.cmpi eq, %30, %59 : vector<8x8xi32>
    %cst_33 = arith.constant 0.000000e+00 : f32
    %61 = vector.broadcast %cst_33 : f32 to vector<8x8xf32>
    %62 = arith.select %60, %36, %61 : vector<8x8xi1>, vector<8x8xf32>
    %cst_34 = arith.constant dense<0.000000e+00> : vector<8xf32>
    %63 = vector.multi_reduction <add>, %62, %cst_34 [0] : vector<8x8xf32> to vector<8xf32>
    %64 = vector.shape_cast %63 : vector<8xf32> to vector<1x8xf32>
    %65 = arith.subf %58, %64 : vector<1x8xf32>
    %c0_35 = arith.constant 0 : index
    %c0_36 = arith.constant 0 : index
    %c0_37 = arith.constant 0 : index
    %66 = vector.load %arg8[%c0_35, %c0_36, %c0_37] : memref<1x1x8xf32, #tpu.memory_space<vmem>>, vector<1x1x8xf32>
    %67 = vector.shape_cast %66 : vector<1x1x8xf32> to vector<1x8xf32>
    %68 = vector.shape_cast %65 : vector<1x8xf32> to vector<1x1x8xf32>
    tpu.vector_store %arg8[%c0_35, %c0_36, %c0_37], %68 {strides = array<i32>} : memref<1x1x8xf32, #tpu.memory_space<vmem>>, vector<1x1x8xf32>,
    return
  }
  func.func @transform_0(%arg0: i32, %arg1: memref<128xi32, #tpu.memory_space<smem>>, %arg2: memref<16xi32, #tpu.memory_space<smem>>) -> (i32, i32, i32) {
    %c0_i32 = arith.constant 0 : i32
    %c0_i32_0 = arith.constant 0 : i32
    %c0_i32_1 = arith.constant 0 : i32
    return %arg0, %c0_i32, %c0_i32_0 : i32, i32, i32
  }
  func.func @transform_1(%arg0: i32, %arg1: memref<128xi32, #tpu.memory_space<smem>>, %arg2: memref<16xi32, #tpu.memory_space<smem>>) -> (i32, i32, i32) {
    %c0_i32 = arith.constant 0 : i32
    %c0_i32_0 = arith.constant 0 : i32
    %c0_i32_1 = arith.constant 0 : i32
    return %arg0, %c0_i32, %c0_i32_0 : i32, i32, i32
  }
  func.func @transform_2(%arg0: i32, %arg1: memref<128xi32, #tpu.memory_space<smem>>, %arg2: memref<16xi32, #tpu.memory_space<smem>>) -> (i32, i32, i32) {
    %c0_i32 = arith.constant 0 : i32
    %c0_i32_0 = arith.constant 0 : i32
    %c0_i32_1 = arith.constant 0 : i32
    return %arg0, %c0_i32, %c0_i32_0 : i32, i32, i32
  }
  func.func @transform_3(%arg0: i32, %arg1: memref<128xi32, #tpu.memory_space<smem>>, %arg2: memref<16xi32, #tpu.memory_space<smem>>) -> (i32, i32, i32) {
    %c0_i32 = arith.constant 0 : i32
    %c0_i32_0 = arith.constant 0 : i32
    %c0_i32_1 = arith.constant 0 : i32
    return %arg0, %c0_i32, %c0_i32_0 : i32, i32, i32
  }
  func.func @transform_5(%arg0: i32, %arg1: memref<128xi32, #tpu.memory_space<smem>>, %arg2: memref<16xi32, #tpu.memory_space<smem>>) -> (i32, i32, i32) {
    %c0_i32 = arith.constant 0 : i32
    %c0_i32_0 = arith.constant 0 : i32
    %c0_i32_1 = arith.constant 0 : i32
    return %arg0, %c0_i32, %c0_i32_0 : i32, i32, i32
  }
  func.func @transform_6(%arg0: i32, %arg1: memref<128xi32, #tpu.memory_space<smem>>, %arg2: memref<16xi32, #tpu.memory_space<smem>>) -> (i32, i32, i32) {
    %c0_i32 = arith.constant 0 : i32
    %c0_i32_0 = arith.constant 0 : i32
    %c0_i32_1 = arith.constant 0 : i32
    return %arg0, %c0_i32, %c0_i32_0 : i32, i32, i32
  }
}

</mosaic_0001>

<llo_original>
// kernel: tpu_custom_call.1
$region0: #{tpu_custom_call.1}
  #allocation0 [shape = 'u32[]', space=smem, size = 0x4, offset = 0x4, fixed_abs, tag = 'smem constant byte address 0x4 - core index']
  #allocation1 [shape = 'u32[144,128]{1,0:T(1,128)}', space=vmem, size = 0x12000, scoped, tag = 'internal scratch']
  #allocation2 [shape = 'f32[2,8,8,256]{3,2,1,0:T(8,128)}', space=vmem, size = 0x20000, scoped, tag = 'scratch operand']
  #allocation3 [shape = 's32[128]{0}', space=sflag, size = 0x200, scoped, tag = 'scratch operand']
  #allocation4 [shape = 's32[1]{0}', space=sflag, size = 0x4, scoped, tag = 'scoped memory for tpu_custom_call.1']
  #allocation5 [shape = 'u8[512]{0}', space=smem, size = 0x200, scoped, tag = 'prefetched SMEM operand 0']
  #allocation6 [shape = 'u8[512]{0}', space=smem, size = 0x200, scoped, tag = 'prefetched SMEM operand 1']
  #allocation15 [shape = 's32[]', space=sflag, size = 0x4, offset = 0, fixed_abs, tag = 'sflag constant byte address 0x0 - dummy sync flag']
  #allocation16 [shape = 's32[]', space=sflag, size = 0x4, offset = 0, fixed_abs, tag = 'sflag constant byte address 0x0 - dummy sync flag']
  #allocation17 [shape = 's32[]', space=sflag, size = 0x4, offset = 0, fixed_abs, tag = 'sflag constant byte address 0x0 - dummy sync flag']
  #allocation18 [shape = 's32[]', space=sflag, size = 0x4, offset = 0, fixed_abs, tag = 'sflag constant byte address 0x0 - dummy sync flag']
  #allocation19 [shape = 's32[]', space=sflag, size = 0x4, offset = 0, fixed_abs, tag = 'sflag constant byte address 0x0 - dummy sync flag']
  #allocation20 [shape = 's32[]', space=sflag, size = 0x4, offset = 0, fixed_abs, tag = 'sflag constant byte address 0x0 - dummy sync flag']
  #allocation21 [shape = 's32[]', space=sflag, size = 0x4, offset = 0, fixed_abs, tag = 'sflag constant byte address 0x0 - dummy sync flag']
  #allocation22 [shape = 's32[]', space=sflag, size = 0x4, offset = 0, fixed_abs, tag = 'sflag constant byte address 0x0 - dummy sync flag']
  #allocation23 [shape = 's32[]', space=sflag, size = 0x4, offset = 0, fixed_abs, tag = 'sflag constant byte address 0x0 - dummy sync flag']
  #allocation24 [shape = 's32[]', space=sflag, size = 0x4, offset = 0, fixed_abs, tag = 'sflag constant byte address 0x0 - dummy sync flag']
  #allocation25 [shape = 's32[]', space=sflag, size = 0x4, offset = 0, fixed_abs, tag = 'sflag constant byte address 0x0 - dummy sync flag']
  #allocation26 [shape = 's32[]', space=sflag, size = 0x4, offset = 0, fixed_abs, tag = 'sflag constant byte address 0x0 - dummy sync flag']
  #allocation27 [shape = 's32[]', space=sflag, size = 0x4, offset = 0, fixed_abs, tag = 'sflag constant byte address 0x0 - dummy sync flag']
  #allocation28 [shape = 's32[]', space=sflag, size = 0x4, offset = 0, fixed_abs, tag = 'sflag constant byte address 0x0 - dummy sync flag']
  #allocation29 [shape = 's32[]', space=sflag, size = 0x4, offset = 0, fixed_abs, tag = 'sflag constant byte address 0x0 - dummy sync flag']
  #allocation30 [shape = 's32[]', space=sflag, size = 0x4, offset = 0, fixed_abs, tag = 'sflag constant byte address 0x0 - dummy sync flag']
  %s0 = inlined_call_operand.hbm [shape: s32[128], index: 0, kind: input, shape index: {}]
  %s1 = inlined_call_operand.vmem [shape: s32[16], index: 1, kind: input, shape index: {}]
  %s2 = inlined_call_operand.hbm [shape: f32[2,8,256], index: 2, kind: input, shape index: {}]
  %s3 = inlined_call_operand.hbm [shape: f32[2,8,8], index: 3, kind: input, shape index: {}]
  %s4 = inlined_call_operand.vmem [shape: s32[2,1,8], index: 4, kind: input, shape index: {}]
  %s5 = inlined_call_operand.vmem [shape: s32[2,1,8], index: 5, kind: input, shape index: {}]
  %s6 = inlined_call_operand.hbm [shape: f32[64,256], index: 6, kind: input, shape index: {}]
  %s7 = inlined_call_operand.hbm [shape: f32[2,1,8], index: 7, kind: output, shape index: {0}]
  %s8 = inlined_call_operand.hbm [shape: s32[2,1,8], index: 8, kind: output, shape index: {1}]
  %9 = xla_tuple %s7, %s8
  %s10 = sld [smem:[#allocation0]]
  $region190: #{tpu_custom_call.1} parent=0
    _
  %s12 = ssub.s32 1, %s10
  %s13 = scalar_select 0, %s12, %s10
  %15 = dma.hbm_to_smem %s0, 16, [#allocation5], [#allocation4]
  %s16 = sshll.u32 %s1, 4
  %s17 = int_to_ptr.vmem [resolvable:$true] %s16
  %19 = dma.vmem_to_smem %s17, 16, [#allocation6], [#allocation4]
  %20 = dma.done [#allocation4], 32
  %21 = sfence
  $region1: #{tpu_custom_call.1} parent=0
    #allocation7 [shape = 'u8[16384]{0}', space=vmem, size = 0x4000, scoped, tag = 'input window, operand 2']
    #allocation8 [shape = 's32[2]{0}', space=sflag, size = 0x8, scoped, tag = 'scoped memory for tpu_custom_call.1']
    #allocation9 [shape = 's32[2]{0}', space=sflag, size = 0x8, scoped, tag = 'scoped memory for tpu_custom_call.1']
    #allocation10 [shape = 'u8[8192]{0}', space=vmem, size = 0x2000, scoped, tag = 'input window, operand 3']
    #allocation11 [shape = 's32[2]{0}', space=sflag, size = 0x8, scoped, tag = 'scoped memory for tpu_custom_call.1']
    #allocation12 [shape = 'u8[1024]{0}', space=vmem, size = 0x400, scoped, tag = 'output window, operand 0']
    #allocation13 [shape = 'u8[1024]{0}', space=vmem, size = 0x400, scoped, tag = 'output window, operand 1']
    #allocation14 [shape = 's32[2]{0}', space=sflag, size = 0x8, scoped, tag = 'scoped memory for tpu_custom_call.1']
    %22 = vsyncpa [#allocation8], 0
    %s23 = scalar_lea.sflag [#allocation8], 1
    %24 = vsyncpa %s23, 0
    %25 = vsyncpa [#allocation11], 0
    %s26 = scalar_lea.sflag [#allocation11], 1
    %27 = vsyncpa %s26, 0
    %28 = vsyncpa [#allocation9], 0
    %s29 = scalar_lea.sflag [#allocation9], 1
    %30 = vsyncpa %s29, 0
    %31 = vsyncpa [#allocation14], 0
    %s32 = scalar_lea.sflag [#allocation14], 1
    %33 = vsyncpa %s32, 0
    loop: start=0, step=1, limit=4
    $region2: #{tpu_custom_call.1} parent=1 // loop_pre_header
      _
    $region3: #{tpu_custom_call.1} parent=1 // loop_header
      %s35 = sphi 0, %s39
      %p36 = scmp.ge.s32.totalorder %s35, 4
      %s45 = sphi 0, %s47
      %s48 = sphi 0, %s45
      %s49 = sphi 0, %s48
      %s65 = sphi 0, %s49
      %s71 = sphi 0, %s73
      %s74 = sphi 0, %s71
      %s75 = sphi 0, %s74
      %s91 = sphi 0, %s75
      %s97 = sphi 0, %s99
      %s100 = sphi 0, %s97
      %s101 = sphi 0, %s100
      %s117 = sphi 0, %s101
      %s123 = sphi 0, %s125
      %s126 = sphi 0, %s123
      %s127 = sphi 0, %s126
      %s143 = sphi 0, %s127
      %s149 = sphi 0, %s151
      %s152 = sphi 0, %s149
      %s153 = sphi 0, %s152
      %s169 = sphi 0, %s153
      %s175 = sphi 0, %s177
      %s178 = sphi 0, %s175
      %s179 = sphi 0, %s178
      %s195 = sphi 0, %s179
    $region4: #{tpu_custom_call.1} parent=1 // loop_header_branch
      %38 = sbr.rel (%p36) target = $region8
    $region5: #{tpu_custom_call.1} parent=1 // loop_body
      %s40 = ssub.s32 %s35, 1
      %s41 = ssub.s32 %s35, 2
      %s42 = sadd.s32 %s35, 1
      %s43 = ssub.s32 %s35, %s42
      %p44 = scmp.eq.s32.totalorder %s43, 0
      %s46 = sadd.s32 %s45, 1
      %s47 = scalar_select %p44, %s45, %s46
      %p50 = pneg %p44
      %p51 = scmp.eq.s32.totalorder %s35, 1
      %p52 = por %p50, %p51
      %p53 = scmp.ne.s32.totalorder %s45, %s48
      %p54 = scmp.eq.s32.totalorder %s35, 0
      %p55 = por %p53, %p54
      %p56 = scmp.ne.s32.totalorder %s45, %s48
      %p57 = scmp.eq.s32.totalorder %s40, 1
      %p58 = por %p56, %p57
      %p59 = scmp.ne.s32.totalorder %s48, %s49
      %p60 = scmp.eq.s32.totalorder %s40, 0
      %p61 = por %p59, %p60
      %p62 = scmp.ne.s32.totalorder %s48, %s49
      %p63 = scmp.eq.s32.totalorder %s41, 1
      %p64 = por %p62, %p63
      %p66 = scmp.ne.s32.totalorder %s49, %s65
      %p67 = scmp.eq.s32.totalorder %s41, 0
      %p68 = por %p66, %p67
      %s69 = ssub.s32 %s35, %s42
      %p70 = scmp.eq.s32.totalorder %s69, 0
      %s72 = sadd.s32 %s71, 1
      %s73 = scalar_select %p70, %s71, %s72
      %p76 = pneg %p70
      %p77 = scmp.eq.s32.totalorder %s35, 1
      %p78 = por %p76, %p77
      %p79 = scmp.ne.s32.totalorder %s71, %s74
      %p80 = scmp.eq.s32.totalorder %s35, 0
      %p81 = por %p79, %p80
      %p82 = scmp.ne.s32.totalorder %s71, %s74
      %p83 = scmp.eq.s32.totalorder %s40, 1
      %p84 = por %p82, %p83
      %p85 = scmp.ne.s32.totalorder %s74, %s75
      %p86 = scmp.eq.s32.totalorder %s40, 0
      %p87 = por %p85, %p86
      %p88 = scmp.ne.s32.totalorder %s74, %s75
      %p89 = scmp.eq.s32.totalorder %s41, 1
      %p90 = por %p88, %p89
      %p92 = scmp.ne.s32.totalorder %s75, %s91
      %p93 = scmp.eq.s32.totalorder %s41, 0
      %p94 = por %p92, %p93
      %s95 = ssub.s32 %s35, %s42
      %p96 = scmp.eq.s32.totalorder %s95, 0
      %s98 = sadd.s32 %s97, 1
      %s99 = scalar_select %p96, %s97, %s98
      %p102 = pneg %p96
      %p103 = scmp.eq.s32.totalorder %s35, 1
      %p104 = por %p102, %p103
      %p105 = scmp.ne.s32.totalorder %s97, %s100
      %p106 = scmp.eq.s32.totalorder %s35, 0
      %p107 = por %p105, %p106
      %p108 = scmp.ne.s32.totalorder %s97, %s100
      %p109 = scmp.eq.s32.totalorder %s40, 1
      %p110 = por %p108, %p109
      %p111 = scmp.ne.s32.totalorder %s100, %s101
      %p112 = scmp.eq.s32.totalorder %s40, 0
      %p113 = por %p111, %p112
      %p114 = scmp.ne.s32.totalorder %s100, %s101
      %p115 = scmp.eq.s32.totalorder %s41, 1
      %p116 = por %p114, %p115
      %p118 = scmp.ne.s32.totalorder %s101, %s117
      %p119 = scmp.eq.s32.totalorder %s41, 0
      %p120 = por %p118, %p119
      %s121 = ssub.s32 %s35, %s42
      %p122 = scmp.eq.s32.totalorder %s121, 0
      %s124 = sadd.s32 %s123, 1
      %s125 = scalar_select %p122, %s123, %s124
      %p128 = pneg %p122
      %p129 = scmp.eq.s32.totalorder %s35, 1
      %p130 = por %p128, %p129
      %p131 = scmp.ne.s32.totalorder %s123, %s126
      %p132 = scmp.eq.s32.totalorder %s35, 0
      %p133 = por %p131, %p132
      %p134 = scmp.ne.s32.totalorder %s123, %s126
      %p135 = scmp.eq.s32.totalorder %s40, 1
      %p136 = por %p134, %p135
      %p137 = scmp.ne.s32.totalorder %s126, %s127
      %p138 = scmp.eq.s32.totalorder %s40, 0
      %p139 = por %p137, %p138
      %p140 = scmp.ne.s32.totalorder %s126, %s127
      %p141 = scmp.eq.s32.totalorder %s41, 1
      %p142 = por %p140, %p141
      %p144 = scmp.ne.s32.totalorder %s127, %s143
      %p145 = scmp.eq.s32.totalorder %s41, 0
      %p146 = por %p144, %p145
      %s147 = ssub.s32 %s35, %s42
      %p148 = scmp.eq.s32.totalorder %s147, 0
      %s150 = sadd.s32 %s149, 1
      %s151 = scalar_select %p148, %s149, %s150
      %p154 = pneg %p148
      %p155 = scmp.eq.s32.totalorder %s35, 1
      %p156 = por %p154, %p155
      %p157 = scmp.ne.s32.totalorder %s149, %s152
      %p158 = scmp.eq.s32.totalorder %s35, 0
      %p159 = por %p157, %p158
      %p160 = scmp.ne.s32.totalorder %s149, %s152
      %p161 = scmp.eq.s32.totalorder %s40, 1
      %p162 = por %p160, %p161
      %p163 = scmp.ne.s32.totalorder %s152, %s153
      %p164 = scmp.eq.s32.totalorder %s40, 0
      %p165 = por %p163, %p164
      %p166 = scmp.ne.s32.totalorder %s152, %s153
      %p167 = scmp.eq.s32.totalorder %s41, 1
      %p168 = por %p166, %p167
      %p170 = scmp.ne.s32.totalorder %s153, %s169
      %p171 = scmp.eq.s32.totalorder %s41, 0
      %p172 = por %p170, %p171
      %s173 = ssub.s32 %s35, %s42
      %p174 = scmp.eq.s32.totalorder %s173, 0
      %s176 = sadd.s32 %s175, 1
      %s177 = scalar_select %p174, %s175, %s176
      %p180 = pneg %p174
      %p181 = scmp.eq.s32.totalorder %s35, 1
      %p182 = por %p180, %p181
      %p183 = scmp.ne.s32.totalorder %s175, %s178
      %p184 = scmp.eq.s32.totalorder %s35, 0
      %p185 = por %p183, %p184
      %p186 = scmp.ne.s32.totalorder %s175, %s178
      %p187 = scmp.eq.s32.totalorder %s40, 1
      %p188 = por %p186, %p187
      %p189 = scmp.ne.s32.totalorder %s178, %s179
      %p190 = scmp.eq.s32.totalorder %s40, 0
      %p191 = por %p189, %p190
      %p192 = scmp.ne.s32.totalorder %s178, %s179
      %p193 = scmp.eq.s32.totalorder %s41, 1
      %p194 = por %p192, %p193
      %p196 = scmp.ne.s32.totalorder %s179, %s195
      %p197 = scmp.eq.s32.totalorder %s41, 0
      %p198 = por %p196, %p197
      %p199 = scmp.le.s32.totalorder 1, %s35
      %p200 = scmp.lt.s32.totalorder %s35, 3
      %p201 = pnand %p199, %p200
      %p202 = pneg %p201
      // Predicated region
      $region9: #{tpu_custom_call.1} parent=5 // pred_check
        _
      $region10: #{tpu_custom_call.1} parent=5 // pred_check_branch
        %204 = sbr.rel (%p201) target = $region12
      $region11: #{tpu_custom_call.1} parent=5 // pred_region
        %s205 = ssub.s32 %s35, 1
      $region12: #{tpu_custom_call.1} parent=5 // pred_fallthru
        _
      %p206 = scmp.lt.s32.totalorder %s35, 2
      // Predicated region
      $region13: #{tpu_custom_call.1} parent=5 // pred_check
        %p207 = pneg %p206
      $region14: #{tpu_custom_call.1} parent=5 // pred_check_branch
        %209 = sbr.rel (%p207) target = $region16
      $region15: #{tpu_custom_call.1} parent=5 // pred_region
        // Predicated region
        $region17: #{tpu_custom_call.1} parent=15 // pred_check
          %p210 = pneg %p55
        $region18: #{tpu_custom_call.1} parent=15 // pred_check_branch
          %212 = sbr.rel (%p210) target = $region20
        $region19: #{tpu_custom_call.1} parent=15 // pred_region
          %s213 = sand.u32 %s45, 1
          %s214 = scalar_lea.sflag [#allocation8], %s213
          %s215 = sand.u32 %s45, 1
          %s216 = smul.addr %s215, 16
          %s217 = scalar_lea.vmem [#allocation7], %s216
          %s219 = ssub.s32 256, 256
          %220 = vsyncadd %s214, %s219
          %s221 = smul.addr %s35, 2
          %s222 = smul.addr %s221, 128
          %s223 = scalar_lea.hbm %s2, %s222
          %s225 = sshll.u32 %s217, 4
          %s226 = int_to_ptr.vmem [resolvable:$true] %s225
          %228 = dma.hbm_to_vmem [thread:$0]  %s223, 256, %s226, %s214
        $region20: #{tpu_custom_call.1} parent=15 // pred_fallthru
          _
        // Predicated region
        $region21: #{tpu_custom_call.1} parent=15 // pred_check
          %p229 = pneg %p81
        $region22: #{tpu_custom_call.1} parent=15 // pred_check_branch
          %231 = sbr.rel (%p229) target = $region24
        $region23: #{tpu_custom_call.1} parent=15 // pred_region
          %s232 = sand.u32 %s71, 1
          %s233 = scalar_lea.sflag [#allocation11], %s232
          %s234 = sand.u32 %s71, 1
          %s235 = smul.addr %s234, 8
          %s236 = scalar_lea.vmem [#allocation10], %s235
          %s238 = ssub.s32 128, 128
          %239 = vsyncadd %s233, %s238
          %s240 = smul.addr %s35, 128
          %s241 = scalar_lea.hbm %s3, %s240
          %s243 = sshll.u32 %s236, 4
          %s244 = int_to_ptr.vmem [resolvable:$true] %s243
          %246 = dma.hbm_to_vmem [thread:$0]  %s241, 128, %s244, %s233
        $region24: #{tpu_custom_call.1} parent=15 // pred_fallthru
          _
        // Predicated region
        $region25: #{tpu_custom_call.1} parent=15 // pred_check
          %p247 = pneg %p107
        $region26: #{tpu_custom_call.1} parent=15 // pred_check_branch
          %249 = sbr.rel (%p247) target = $region28
        $region27: #{tpu_custom_call.1} parent=15 // pred_region
          %p250 = scmp.lt.s32.totalorder %s35, 1
          %s251 = scalar_select %p250, %s35, 1
          %s252 = scalar_lea.vmem %s4, %s251
        $region28: #{tpu_custom_call.1} parent=15 // pred_fallthru
          _
        // Predicated region
        $region29: #{tpu_custom_call.1} parent=15 // pred_check
          %p253 = pneg %p133
        $region30: #{tpu_custom_call.1} parent=15 // pred_check_branch
          %255 = sbr.rel (%p253) target = $region32
        $region31: #{tpu_custom_call.1} parent=15 // pred_region
          %p256 = scmp.lt.s32.totalorder %s35, 1
          %s257 = scalar_select %p256, %s35, 1
          %s258 = scalar_lea.vmem %s5, %s257
        $region32: #{tpu_custom_call.1} parent=15 // pred_fallthru
          _
      $region16: #{tpu_custom_call.1} parent=5 // pred_fallthru
        _
      %p259 = scmp.le.s32.totalorder 1, %s35
      %p260 = scmp.lt.s32.totalorder %s35, 3
      %p261 = pnand %p259, %p260
      %p262 = pneg %p261
      // Predicated region
      $region33: #{tpu_custom_call.1} parent=5 // pred_check
        _
      $region34: #{tpu_custom_call.1} parent=5 // pred_check_branch
        %264 = sbr.rel (%p261) target = $region36
      $region35: #{tpu_custom_call.1} parent=5 // pred_region
        %s265 = ssub.s32 %s35, 1
        %s266 = sand.u32 %s48, 1
        %s267 = scalar_lea.sflag [#allocation8], %s266
        %s268 = sand.u32 %s48, 1
        %s269 = smul.addr %s268, 16
        %s270 = scalar_lea.vmem [#allocation7], %s269
        // Predicated region
        $region37: #{tpu_custom_call.1} parent=35 // pred_check
          %p271 = pneg %p61
        $region38: #{tpu_custom_call.1} parent=35 // pred_check_branch
          %273 = sbr.rel (%p271) target = $region40
        $region39: #{tpu_custom_call.1} parent=35 // pred_region
          %274 = dma.done %s267, 256
        $region40: #{tpu_custom_call.1} parent=35 // pred_fallthru
          _
        %s275 = sand.u32 %s74, 1
        %s276 = scalar_lea.sflag [#allocation11], %s275
        %s277 = sand.u32 %s74, 1
        %s278 = smul.addr %s277, 8
        %s279 = scalar_lea.vmem [#allocation10], %s278
        // Predicated region
        $region41: #{tpu_custom_call.1} parent=35 // pred_check
          %p280 = pneg %p87
        $region42: #{tpu_custom_call.1} parent=35 // pred_check_branch
          %282 = sbr.rel (%p280) target = $region44
        $region43: #{tpu_custom_call.1} parent=35 // pred_region
          %283 = dma.done %s276, 128
        $region44: #{tpu_custom_call.1} parent=35 // pred_fallthru
          _
        %s284 = sand.u32 %s48, 1
        %s285 = scalar_lea.sflag [#allocation8], %s284
        %s286 = sand.u32 %s48, 1
        %s287 = smul.addr %s286, 16
        %s288 = scalar_lea.vmem [#allocation7], %s287
        %p289 = pneg %p61
        %p290 = pneg %p58
        %s291 = sand.u32 %s74, 1
        %s292 = scalar_lea.sflag [#allocation11], %s291
        %s293 = sand.u32 %s74, 1
        %s294 = smul.addr %s293, 8
        %s295 = scalar_lea.vmem [#allocation10], %s294
        %p296 = pneg %p87
        %p297 = pneg %p84
        %p298 = scmp.lt.s32.totalorder %s40, 1
        %s299 = scalar_select %p298, %s40, 1
        %s300 = scalar_lea.vmem %s4, %s299
        %p301 = pneg %p113
        %p302 = pneg %p110
        %p303 = scmp.lt.s32.totalorder %s40, 1
        %s304 = scalar_select %p303, %s40, 1
        %s305 = scalar_lea.vmem %s5, %s304
        %p306 = pneg %p139
        %p307 = pneg %p136
        %p308 = pneg %p165
        %p309 = pneg %p162
        %s310 = sand.u32 %s152, 1
        %s311 = scalar_lea.sflag [#allocation9], %s310
        %s312 = sand.u32 %s152, 1
        %s313 = scalar_lea.vmem [#allocation12], %s312
        %p314 = pneg %p191
        %p315 = pneg %p188
        %s316 = sand.u32 %s178, 1
        %s317 = scalar_lea.sflag [#allocation14], %s316
        %s318 = sand.u32 %s178, 1
        %s319 = scalar_lea.vmem [#allocation13], %s318
        %p320 = scmp.lt.s32.totalorder %s40, 1
        %s321 = scalar_select %p320, %s40, 1
        %s322 = scalar_lea.vmem %s4, %s321
        %p323 = scmp.lt.s32.totalorder %s40, 1
        %s324 = scalar_select %p323, %s40, 1
        %s325 = scalar_lea.vmem %s5, %s324
        %p326 = scmp.lt.s32.totalorder %s40, 0
        %s327 = ssub.s32 0, %s40
        %s328 = scalar_select %p326, %s327, %s40
        %s329 = sand.u32 %s328, 1
        %s330 = ssub.s32 0, %s329
        %s331 = scalar_select %p326, %s330, %s329
        %p332 = scmp.ne.s32.totalorder %s331, 0
        %p333 = scmp.lt.s32.totalorder %s331, 0
        %p334 = pnand %p333, %p332
        %p335 = pneg %p334
        %s336 = sadd.s32 %s331, 2
        %s337 = scalar_select %p335, %s336, %s331
        %p338 = scmp.eq.s32.totalorder %s40, 0
        // Predicated region
        $region45: #{tpu_custom_call.1} parent=35 // pred_check
          %p339 = pneg %p338
        $region46: #{tpu_custom_call.1} parent=35 // pred_check_branch
          %341 = sbr.rel (%p339) target = $region48
        $region47: #{tpu_custom_call.1} parent=35 // pred_region
          loop: start=0, step=1, limit=8
          $region49: #{tpu_custom_call.1} parent=47 // loop_pre_header
            _
          $region50: #{tpu_custom_call.1} parent=47 // loop_header
            %s343 = sphi 0, %s347
            %p344 = scmp.ge.s32.totalorder %s343, 8
          $region51: #{tpu_custom_call.1} parent=47 // loop_header_branch
            %346 = sbr.rel (%p344) target = $region55
          $region52: #{tpu_custom_call.1} parent=47 // loop_body
            %s348 = sld [smem:[#allocation6 + %s343]]
            %p349 = scmp.gt.s32.totalorder %s348, 0
            // Predicated region
            $region56: #{tpu_custom_call.1} parent=52 // pred_check
              %p350 = pneg %p349
            $region57: #{tpu_custom_call.1} parent=52 // pred_check_branch
              %352 = sbr.rel (%p350) target = $region59
            $region58: #{tpu_custom_call.1} parent=52 // pred_region
              %s353 = smul.u32 %s343, 8
              %s354 = sld [smem:[#allocation5 + %s353]]
              %s355 = sshrl.u32 %s354, 3
              %s356 = sand.u32 %s354, 7
              %s357 = smul.u32 %s355, 16
              %s358 = sadd.s32 %s356, %s357
              %s359 = smul.addr %s358, 16
              %s360 = scalar_lea.hbm %s6, %s359
              %s361 = sshrl.u32 %s343, 3
              %s362 = sand.u32 %s343, 7
              %s363 = smul.u32 %s361, 16
              %s364 = sadd.s32 %s362, %s363
              %s365 = scalar_lea.vmem [#allocation2], %s364
              %s366 = scalar_lea.sflag [#allocation3], %s343
              %s368 = sshll.u32 %s365, 4
              %s369 = int_to_ptr.vmem [resolvable:$true] %s368
              %371 = dma.hbm_to_vmem [thread:$0]  %s360, 32, %s369, %s366, 128, 128, 1
            $region59: #{tpu_custom_call.1} parent=52 // pred_fallthru
              _
            %p372 = scmp.gt.s32.totalorder %s348, 1
            // Predicated region
            $region60: #{tpu_custom_call.1} parent=52 // pred_check
              %p373 = pneg %p372
            $region61: #{tpu_custom_call.1} parent=52 // pred_check_branch
              %375 = sbr.rel (%p373) target = $region63
            $region62: #{tpu_custom_call.1} parent=52 // pred_region
              %s376 = smul.u32 %s343, 8
              %s377 = sadd.s32 %s376, 1
              %s378 = sld [smem:[#allocation5 + %s377]]
              %s379 = sshrl.u32 %s378, 3
              %s380 = sand.u32 %s378, 7
              %s381 = smul.u32 %s379, 16
              %s382 = sadd.s32 %s380, %s381
              %s383 = smul.addr %s382, 16
              %s384 = scalar_lea.hbm %s6, %s383
              %s385 = sshrl.u32 %s343, 3
              %s386 = sand.u32 %s343, 7
              %s387 = smul.u32 %s385, 16
              %s388 = sadd.s32 %s386, %s387
              %s389 = sadd.s32 %s388, 16
              %s390 = scalar_lea.vmem [#allocation2], %s389
              %s391 = sadd.s32 %s343, 8
              %s392 = scalar_lea.sflag [#allocation3], %s391
              %s394 = sshll.u32 %s390, 4
              %s395 = int_to_ptr.vmem [resolvable:$true] %s394
              %397 = dma.hbm_to_vmem [thread:$0]  %s384, 32, %s395, %s392, 128, 128, 1
            $region63: #{tpu_custom_call.1} parent=52 // pred_fallthru
              _
            %p398 = scmp.gt.s32.totalorder %s348, 2
            // Predicated region
            $region64: #{tpu_custom_call.1} parent=52 // pred_check
              %p399 = pneg %p398
            $region65: #{tpu_custom_call.1} parent=52 // pred_check_branch
              %401 = sbr.rel (%p399) target = $region67
            $region66: #{tpu_custom_call.1} parent=52 // pred_region
              %s402 = smul.u32 %s343, 8
              %s403 = sadd.s32 %s402, 2
              %s404 = sld [smem:[#allocation5 + %s403]]
              %s405 = sshrl.u32 %s404, 3
              %s406 = sand.u32 %s404, 7
              %s407 = smul.u32 %s405, 16
              %s408 = sadd.s32 %s406, %s407
              %s409 = smul.addr %s408, 16
              %s410 = scalar_lea.hbm %s6, %s409
              %s411 = sshrl.u32 %s343, 3
              %s412 = sand.u32 %s343, 7
              %s413 = smul.u32 %s411, 16
              %s414 = sadd.s32 %s412, %s413
              %s415 = sadd.s32 %s414, 32
              %s416 = scalar_lea.vmem [#allocation2], %s415
              %s417 = sadd.s32 %s343, 16
              %s418 = scalar_lea.sflag [#allocation3], %s417
              %s420 = sshll.u32 %s416, 4
              %s421 = int_to_ptr.vmem [resolvable:$true] %s420
              %423 = dma.hbm_to_vmem [thread:$0]  %s410, 32, %s421, %s418, 128, 128, 1
            $region67: #{tpu_custom_call.1} parent=52 // pred_fallthru
              _
            %p424 = scmp.gt.s32.totalorder %s348, 3
            // Predicated region
            $region68: #{tpu_custom_call.1} parent=52 // pred_check
              %p425 = pneg %p424
            $region69: #{tpu_custom_call.1} parent=52 // pred_check_branch
              %427 = sbr.rel (%p425) target = $region71
            $region70: #{tpu_custom_call.1} parent=52 // pred_region
              %s428 = smul.u32 %s343, 8
              %s429 = sadd.s32 %s428, 3
              %s430 = sld [smem:[#allocation5 + %s429]]
              %s431 = sshrl.u32 %s430, 3
              %s432 = sand.u32 %s430, 7
              %s433 = smul.u32 %s431, 16
              %s434 = sadd.s32 %s432, %s433
              %s435 = smul.addr %s434, 16
              %s436 = scalar_lea.hbm %s6, %s435
              %s437 = sshrl.u32 %s343, 3
              %s438 = sand.u32 %s343, 7
              %s439 = smul.u32 %s437, 16
              %s440 = sadd.s32 %s438, %s439
              %s441 = sadd.s32 %s440, 48
              %s442 = scalar_lea.vmem [#allocation2], %s441
              %s443 = sadd.s32 %s343, 24
              %s444 = scalar_lea.sflag [#allocation3], %s443
              %s446 = sshll.u32 %s442, 4
              %s447 = int_to_ptr.vmem [resolvable:$true] %s446
              %449 = dma.hbm_to_vmem [thread:$0]  %s436, 32, %s447, %s444, 128, 128, 1
            $region71: #{tpu_custom_call.1} parent=52 // pred_fallthru
              _
            %p450 = scmp.gt.s32.totalorder %s348, 4
            // Predicated region
            $region72: #{tpu_custom_call.1} parent=52 // pred_check
              %p451 = pneg %p450
            $region73: #{tpu_custom_call.1} parent=52 // pred_check_branch
              %453 = sbr.rel (%p451) target = $region75
            $region74: #{tpu_custom_call.1} parent=52 // pred_region
              %s454 = smul.u32 %s343, 8
              %s455 = sadd.s32 %s454, 4
              %s456 = sld [smem:[#allocation5 + %s455]]
              %s457 = sshrl.u32 %s456, 3
              %s458 = sand.u32 %s456, 7
              %s459 = smul.u32 %s457, 16
              %s460 = sadd.s32 %s458, %s459
              %s461 = smul.addr %s460, 16
              %s462 = scalar_lea.hbm %s6, %s461
              %s463 = sshrl.u32 %s343, 3
              %s464 = sand.u32 %s343, 7
              %s465 = smul.u32 %s463, 16
              %s466 = sadd.s32 %s464, %s465
              %s467 = sadd.s32 %s466, 64
              %s468 = scalar_lea.vmem [#allocation2], %s467
              %s469 = sadd.s32 %s343, 32
              %s470 = scalar_lea.sflag [#allocation3], %s469
              %s472 = sshll.u32 %s468, 4
              %s473 = int_to_ptr.vmem [resolvable:$true] %s472
              %475 = dma.hbm_to_vmem [thread:$0]  %s462, 32, %s473, %s470, 128, 128, 1
            $region75: #{tpu_custom_call.1} parent=52 // pred_fallthru
              _
            %p476 = scmp.gt.s32.totalorder %s348, 5
            // Predicated region
            $region76: #{tpu_custom_call.1} parent=52 // pred_check
              %p477 = pneg %p476
            $region77: #{tpu_custom_call.1} parent=52 // pred_check_branch
              %479 = sbr.rel (%p477) target = $region79
            $region78: #{tpu_custom_call.1} parent=52 // pred_region
              %s480 = smul.u32 %s343, 8
              %s481 = sadd.s32 %s480, 5
              %s482 = sld [smem:[#allocation5 + %s481]]
              %s483 = sshrl.u32 %s482, 3
              %s484 = sand.u32 %s482, 7
              %s485 = smul.u32 %s483, 16
              %s486 = sadd.s32 %s484, %s485
              %s487 = smul.addr %s486, 16
              %s488 = scalar_lea.hbm %s6, %s487
              %s489 = sshrl.u32 %s343, 3
              %s490 = sand.u32 %s343, 7
              %s491 = smul.u32 %s489, 16
              %s492 = sadd.s32 %s490, %s491
              %s493 = sadd.s32 %s492, 80
              %s494 = scalar_lea.vmem [#allocation2], %s493
              %s495 = sadd.s32 %s343, 40
              %s496 = scalar_lea.sflag [#allocation3], %s495
              %s498 = sshll.u32 %s494, 4
              %s499 = int_to_ptr.vmem [resolvable:$true] %s498
              %501 = dma.hbm_to_vmem [thread:$0]  %s488, 32, %s499, %s496, 128, 128, 1
            $region79: #{tpu_custom_call.1} parent=52 // pred_fallthru
              _
            %p502 = scmp.gt.s32.totalorder %s348, 6
            // Predicated region
            $region80: #{tpu_custom_call.1} parent=52 // pred_check
              %p503 = pneg %p502
            $region81: #{tpu_custom_call.1} parent=52 // pred_check_branch
              %505 = sbr.rel (%p503) target = $region83
            $region82: #{tpu_custom_call.1} parent=52 // pred_region
              %s506 = smul.u32 %s343, 8
              %s507 = sadd.s32 %s506, 6
              %s508 = sld [smem:[#allocation5 + %s507]]
              %s509 = sshrl.u32 %s508, 3
              %s510 = sand.u32 %s508, 7
              %s511 = smul.u32 %s509, 16
              %s512 = sadd.s32 %s510, %s511
              %s513 = smul.addr %s512, 16
              %s514 = scalar_lea.hbm %s6, %s513
              %s515 = sshrl.u32 %s343, 3
              %s516 = sand.u32 %s343, 7
              %s517 = smul.u32 %s515, 16
              %s518 = sadd.s32 %s516, %s517
              %s519 = sadd.s32 %s518, 96
              %s520 = scalar_lea.vmem [#allocation2], %s519
              %s521 = sadd.s32 %s343, 48
              %s522 = scalar_lea.sflag [#allocation3], %s521
              %s524 = sshll.u32 %s520, 4
              %s525 = int_to_ptr.vmem [resolvable:$true] %s524
              %527 = dma.hbm_to_vmem [thread:$0]  %s514, 32, %s525, %s522, 128, 128, 1
            $region83: #{tpu_custom_call.1} parent=52 // pred_fallthru
              _
            %p528 = scmp.gt.s32.totalorder %s348, 7
            // Predicated region
            $region84: #{tpu_custom_call.1} parent=52 // pred_check
              %p529 = pneg %p528
            $region85: #{tpu_custom_call.1} parent=52 // pred_check_branch
              %531 = sbr.rel (%p529) target = $region87
            $region86: #{tpu_custom_call.1} parent=52 // pred_region
              %s532 = smul.u32 %s343, 8
              %s533 = sadd.s32 %s532, 7
              %s534 = sld [smem:[#allocation5 + %s533]]
              %s535 = sshrl.u32 %s534, 3
              %s536 = sand.u32 %s534, 7
              %s537 = smul.u32 %s535, 16
              %s538 = sadd.s32 %s536, %s537
              %s539 = smul.addr %s538, 16
              %s540 = scalar_lea.hbm %s6, %s539
              %s541 = sshrl.u32 %s343, 3
              %s542 = sand.u32 %s343, 7
              %s543 = smul.u32 %s541, 16
              %s544 = sadd.s32 %s542, %s543
              %s545 = sadd.s32 %s544, 112
              %s546 = scalar_lea.vmem [#allocation2], %s545
              %s547 = sadd.s32 %s343, 56
              %s548 = scalar_lea.sflag [#allocation3], %s547
              %s550 = sshll.u32 %s546, 4
              %s551 = int_to_ptr.vmem [resolvable:$true] %s550
              %553 = dma.hbm_to_vmem [thread:$0]  %s540, 32, %s551, %s548, 128, 128, 1
            $region87: #{tpu_custom_call.1} parent=52 // pred_fallthru
              _
          $region53: #{tpu_custom_call.1} parent=47 // loop_footer
            %s347 = sadd.s32 1, %s343
          $region54: #{tpu_custom_call.1} parent=47 // loop_footer_branch
            %342 = sbr.rel target = $region50
          $region55: #{tpu_custom_call.1} parent=47 // loop_exit
            _
        $region48: #{tpu_custom_call.1} parent=35 // pred_fallthru
          _
        %s554 = sadd.s32 %s40, 1
        %p555 = scmp.lt.s32.totalorder %s554, 2
        // Predicated region
        $region88: #{tpu_custom_call.1} parent=35 // pred_check
          %p556 = pneg %p555
        $region89: #{tpu_custom_call.1} parent=35 // pred_check_branch
          %558 = sbr.rel (%p556) target = $region91
        $region90: #{tpu_custom_call.1} parent=35 // pred_region
          %s559 = ssub.s32 1, %s337
          loop: start=0, step=1, limit=8
          $region92: #{tpu_custom_call.1} parent=90 // loop_pre_header
            _
          $region93: #{tpu_custom_call.1} parent=90 // loop_header
            %s561 = sphi 0, %s565
            %p562 = scmp.ge.s32.totalorder %s561, 8
          $region94: #{tpu_custom_call.1} parent=90 // loop_header_branch
            %564 = sbr.rel (%p562) target = $region98
          $region95: #{tpu_custom_call.1} parent=90 // loop_body
            %s566 = smul.u32 %s554, 8
            %s567 = sadd.s32 %s566, %s561
            %s568 = sld [smem:[#allocation6 + %s567]]
            %p569 = scmp.gt.s32.totalorder %s568, 0
            // Predicated region
            $region99: #{tpu_custom_call.1} parent=95 // pred_check
              %p570 = pneg %p569
            $region100: #{tpu_custom_call.1} parent=95 // pred_check_branch
              %572 = sbr.rel (%p570) target = $region102
            $region101: #{tpu_custom_call.1} parent=95 // pred_region
              %s573 = smul.u32 %s567, 8
              %s574 = sld [smem:[#allocation5 + %s573]]
              %s575 = sshrl.u32 %s574, 3
              %s576 = sand.u32 %s574, 7
              %s577 = smul.u32 %s575, 16
              %s578 = sadd.s32 %s576, %s577
              %s579 = smul.addr %s578, 16
              %s580 = scalar_lea.hbm %s6, %s579
              %s581 = sshrl.u32 %s561, 3
              %s582 = sand.u32 %s561, 7
              %s583 = smul.u32 %s581, 16
              %s584 = sadd.s32 %s582, %s583
              %s585 = smul.u32 %s559, 128
              %s586 = sadd.s32 %s584, %s585
              %s587 = scalar_lea.vmem [#allocation2], %s586
              %s588 = smul.u32 %s559, 64
              %s589 = sadd.s32 %s561, %s588
              %s590 = scalar_lea.sflag [#allocation3], %s589
              %s592 = sshll.u32 %s587, 4
              %s593 = int_to_ptr.vmem [resolvable:$true] %s592
              %595 = dma.hbm_to_vmem [thread:$0]  %s580, 32, %s593, %s590, 128, 128, 1
            $region102: #{tpu_custom_call.1} parent=95 // pred_fallthru
              _
            %p596 = scmp.gt.s32.totalorder %s568, 1
            // Predicated region
            $region103: #{tpu_custom_call.1} parent=95 // pred_check
              %p597 = pneg %p596
            $region104: #{tpu_custom_call.1} parent=95 // pred_check_branch
              %599 = sbr.rel (%p597) target = $region106
            $region105: #{tpu_custom_call.1} parent=95 // pred_region
              %s600 = smul.u32 %s567, 8
              %s601 = sadd.s32 %s600, 1
              %s602 = sld [smem:[#allocation5 + %s601]]
              %s603 = sshrl.u32 %s602, 3
              %s604 = sand.u32 %s602, 7
              %s605 = smul.u32 %s603, 16
              %s606 = sadd.s32 %s604, %s605
              %s607 = smul.addr %s606, 16
              %s608 = scalar_lea.hbm %s6, %s607
              %s609 = sshrl.u32 %s561, 3
              %s610 = sand.u32 %s561, 7
              %s611 = smul.u32 %s609, 16
              %s612 = sadd.s32 %s610, %s611
              %s613 = sadd.s32 %s612, 16
              %s614 = smul.u32 %s559, 128
              %s615 = sadd.s32 %s613, %s614
              %s616 = scalar_lea.vmem [#allocation2], %s615
              %s617 = sadd.s32 %s561, 8
              %s618 = smul.u32 %s559, 64
              %s619 = sadd.s32 %s617, %s618
              %s620 = scalar_lea.sflag [#allocation3], %s619
              %s622 = sshll.u32 %s616, 4
              %s623 = int_to_ptr.vmem [resolvable:$true] %s622
              %625 = dma.hbm_to_vmem [thread:$0]  %s608, 32, %s623, %s620, 128, 128, 1
            $region106: #{tpu_custom_call.1} parent=95 // pred_fallthru
              _
            %p626 = scmp.gt.s32.totalorder %s568, 2
            // Predicated region
            $region107: #{tpu_custom_call.1} parent=95 // pred_check
              %p627 = pneg %p626
            $region108: #{tpu_custom_call.1} parent=95 // pred_check_branch
              %629 = sbr.rel (%p627) target = $region110
            $region109: #{tpu_custom_call.1} parent=95 // pred_region
              %s630 = smul.u32 %s567, 8
              %s631 = sadd.s32 %s630, 2
              %s632 = sld [smem:[#allocation5 + %s631]]
              %s633 = sshrl.u32 %s632, 3
              %s634 = sand.u32 %s632, 7
              %s635 = smul.u32 %s633, 16
              %s636 = sadd.s32 %s634, %s635
              %s637 = smul.addr %s636, 16
              %s638 = scalar_lea.hbm %s6, %s637
              %s639 = sshrl.u32 %s561, 3
              %s640 = sand.u32 %s561, 7
              %s641 = smul.u32 %s639, 16
              %s642 = sadd.s32 %s640, %s641
              %s643 = sadd.s32 %s642, 32
              %s644 = smul.u32 %s559, 128
              %s645 = sadd.s32 %s643, %s644
              %s646 = scalar_lea.vmem [#allocation2], %s645
              %s647 = sadd.s32 %s561, 16
              %s648 = smul.u32 %s559, 64
              %s649 = sadd.s32 %s647, %s648
              %s650 = scalar_lea.sflag [#allocation3], %s649
              %s652 = sshll.u32 %s646, 4
              %s653 = int_to_ptr.vmem [resolvable:$true] %s652
              %655 = dma.hbm_to_vmem [thread:$0]  %s638, 32, %s653, %s650, 128, 128, 1
            $region110: #{tpu_custom_call.1} parent=95 // pred_fallthru
              _
            %p656 = scmp.gt.s32.totalorder %s568, 3
            // Predicated region
            $region111: #{tpu_custom_call.1} parent=95 // pred_check
              %p657 = pneg %p656
            $region112: #{tpu_custom_call.1} parent=95 // pred_check_branch
              %659 = sbr.rel (%p657) target = $region114
            $region113: #{tpu_custom_call.1} parent=95 // pred_region
              %s660 = smul.u32 %s567, 8
              %s661 = sadd.s32 %s660, 3
              %s662 = sld [smem:[#allocation5 + %s661]]
              %s663 = sshrl.u32 %s662, 3
              %s664 = sand.u32 %s662, 7
              %s665 = smul.u32 %s663, 16
              %s666 = sadd.s32 %s664, %s665
              %s667 = smul.addr %s666, 16
              %s668 = scalar_lea.hbm %s6, %s667
              %s669 = sshrl.u32 %s561, 3
              %s670 = sand.u32 %s561, 7
              %s671 = smul.u32 %s669, 16
              %s672 = sadd.s32 %s670, %s671
              %s673 = sadd.s32 %s672, 48
              %s674 = smul.u32 %s559, 128
              %s675 = sadd.s32 %s673, %s674
              %s676 = scalar_lea.vmem [#allocation2], %s675
              %s677 = sadd.s32 %s561, 24
              %s678 = smul.u32 %s559, 64
              %s679 = sadd.s32 %s677, %s678
              %s680 = scalar_lea.sflag [#allocation3], %s679
              %s682 = sshll.u32 %s676, 4
              %s683 = int_to_ptr.vmem [resolvable:$true] %s682
              %685 = dma.hbm_to_vmem [thread:$0]  %s668, 32, %s683, %s680, 128, 128, 1
            $region114: #{tpu_custom_call.1} parent=95 // pred_fallthru
              _
            %p686 = scmp.gt.s32.totalorder %s568, 4
            // Predicated region
            $region115: #{tpu_custom_call.1} parent=95 // pred_check
              %p687 = pneg %p686
            $region116: #{tpu_custom_call.1} parent=95 // pred_check_branch
              %689 = sbr.rel (%p687) target = $region118
            $region117: #{tpu_custom_call.1} parent=95 // pred_region
              %s690 = smul.u32 %s567, 8
              %s691 = sadd.s32 %s690, 4
              %s692 = sld [smem:[#allocation5 + %s691]]
              %s693 = sshrl.u32 %s692, 3
              %s694 = sand.u32 %s692, 7
              %s695 = smul.u32 %s693, 16
              %s696 = sadd.s32 %s694, %s695
              %s697 = smul.addr %s696, 16
              %s698 = scalar_lea.hbm %s6, %s697
              %s699 = sshrl.u32 %s561, 3
              %s700 = sand.u32 %s561, 7
              %s701 = smul.u32 %s699, 16
              %s702 = sadd.s32 %s700, %s701
              %s703 = sadd.s32 %s702, 64
              %s704 = smul.u32 %s559, 128
              %s705 = sadd.s32 %s703, %s704
              %s706 = scalar_lea.vmem [#allocation2], %s705
              %s707 = sadd.s32 %s561, 32
              %s708 = smul.u32 %s559, 64
              %s709 = sadd.s32 %s707, %s708
              %s710 = scalar_lea.sflag [#allocation3], %s709
              %s712 = sshll.u32 %s706, 4
              %s713 = int_to_ptr.vmem [resolvable:$true] %s712
              %715 = dma.hbm_to_vmem [thread:$0]  %s698, 32, %s713, %s710, 128, 128, 1
            $region118: #{tpu_custom_call.1} parent=95 // pred_fallthru
              _
            %p716 = scmp.gt.s32.totalorder %s568, 5
            // Predicated region
            $region119: #{tpu_custom_call.1} parent=95 // pred_check
              %p717 = pneg %p716
            $region120: #{tpu_custom_call.1} parent=95 // pred_check_branch
              %719 = sbr.rel (%p717) target = $region122
            $region121: #{tpu_custom_call.1} parent=95 // pred_region
              %s720 = smul.u32 %s567, 8
              %s721 = sadd.s32 %s720, 5
              %s722 = sld [smem:[#allocation5 + %s721]]
              %s723 = sshrl.u32 %s722, 3
              %s724 = sand.u32 %s722, 7
              %s725 = smul.u32 %s723, 16
              %s726 = sadd.s32 %s724, %s725
              %s727 = smul.addr %s726, 16
              %s728 = scalar_lea.hbm %s6, %s727
              %s729 = sshrl.u32 %s561, 3
              %s730 = sand.u32 %s561, 7
              %s731 = smul.u32 %s729, 16
              %s732 = sadd.s32 %s730, %s731
              %s733 = sadd.s32 %s732, 80
              %s734 = smul.u32 %s559, 128
              %s735 = sadd.s32 %s733, %s734
              %s736 = scalar_lea.vmem [#allocation2], %s735
              %s737 = sadd.s32 %s561, 40
              %s738 = smul.u32 %s559, 64
              %s739 = sadd.s32 %s737, %s738
              %s740 = scalar_lea.sflag [#allocation3], %s739
              %s742 = sshll.u32 %s736, 4
              %s743 = int_to_ptr.vmem [resolvable:$true] %s742
              %745 = dma.hbm_to_vmem [thread:$0]  %s728, 32, %s743, %s740, 128, 128, 1
            $region122: #{tpu_custom_call.1} parent=95 // pred_fallthru
              _
            %p746 = scmp.gt.s32.totalorder %s568, 6
            // Predicated region
            $region123: #{tpu_custom_call.1} parent=95 // pred_check
              %p747 = pneg %p746
            $region124: #{tpu_custom_call.1} parent=95 // pred_check_branch
              %749 = sbr.rel (%p747) target = $region126
            $region125: #{tpu_custom_call.1} parent=95 // pred_region
              %s750 = smul.u32 %s567, 8
              %s751 = sadd.s32 %s750, 6
              %s752 = sld [smem:[#allocation5 + %s751]]
              %s753 = sshrl.u32 %s752, 3
              %s754 = sand.u32 %s752, 7
              %s755 = smul.u32 %s753, 16
              %s756 = sadd.s32 %s754, %s755
              %s757 = smul.addr %s756, 16
              %s758 = scalar_lea.hbm %s6, %s757
              %s759 = sshrl.u32 %s561, 3
              %s760 = sand.u32 %s561, 7
              %s761 = smul.u32 %s759, 16
              %s762 = sadd.s32 %s760, %s761
              %s763 = sadd.s32 %s762, 96
              %s764 = smul.u32 %s559, 128
              %s765 = sadd.s32 %s763, %s764
              %s766 = scalar_lea.vmem [#allocation2], %s765
              %s767 = sadd.s32 %s561, 48
              %s768 = smul.u32 %s559, 64
              %s769 = sadd.s32 %s767, %s768
              %s770 = scalar_lea.sflag [#allocation3], %s769
              %s772 = sshll.u32 %s766, 4
              %s773 = int_to_ptr.vmem [resolvable:$true] %s772
              %775 = dma.hbm_to_vmem [thread:$0]  %s758, 32, %s773, %s770, 128, 128, 1
            $region126: #{tpu_custom_call.1} parent=95 // pred_fallthru
              _
            %p776 = scmp.gt.s32.totalorder %s568, 7
            // Predicated region
            $region127: #{tpu_custom_call.1} parent=95 // pred_check
              %p777 = pneg %p776
            $region128: #{tpu_custom_call.1} parent=95 // pred_check_branch
              %779 = sbr.rel (%p777) target = $region130
            $region129: #{tpu_custom_call.1} parent=95 // pred_region
              %s780 = smul.u32 %s567, 8
              %s781 = sadd.s32 %s780, 7
              %s782 = sld [smem:[#allocation5 + %s781]]
              %s783 = sshrl.u32 %s782, 3
              %s784 = sand.u32 %s782, 7
              %s785 = smul.u32 %s783, 16
              %s786 = sadd.s32 %s784, %s785
              %s787 = smul.addr %s786, 16
              %s788 = scalar_lea.hbm %s6, %s787
              %s789 = sshrl.u32 %s561, 3
              %s790 = sand.u32 %s561, 7
              %s791 = smul.u32 %s789, 16
              %s792 = sadd.s32 %s790, %s791
              %s793 = sadd.s32 %s792, 112
              %s794 = smul.u32 %s559, 128
              %s795 = sadd.s32 %s793, %s794
              %s796 = scalar_lea.vmem [#allocation2], %s795
              %s797 = sadd.s32 %s561, 56
              %s798 = smul.u32 %s559, 64
              %s799 = sadd.s32 %s797, %s798
              %s800 = scalar_lea.sflag [#allocation3], %s799
              %s802 = sshll.u32 %s796, 4
              %s803 = int_to_ptr.vmem [resolvable:$true] %s802
              %805 = dma.hbm_to_vmem [thread:$0]  %s788, 32, %s803, %s800, 128, 128, 1
            $region130: #{tpu_custom_call.1} parent=95 // pred_fallthru
              _
          $region96: #{tpu_custom_call.1} parent=90 // loop_footer
            %s565 = sadd.s32 1, %s561
          $region97: #{tpu_custom_call.1} parent=90 // loop_footer_branch
            %560 = sbr.rel target = $region93
          $region98: #{tpu_custom_call.1} parent=90 // loop_exit
            _
        $region91: #{tpu_custom_call.1} parent=35 // pred_fallthru
          _
        loop: start=0, step=1, limit=8
        $region131: #{tpu_custom_call.1} parent=35 // loop_pre_header
          _
        $region132: #{tpu_custom_call.1} parent=35 // loop_header
          %s807 = sphi 0, %s811
          %p808 = scmp.ge.s32.totalorder %s807, 8
        $region133: #{tpu_custom_call.1} parent=35 // loop_header_branch
          %810 = sbr.rel (%p808) target = $region137
        $region134: #{tpu_custom_call.1} parent=35 // loop_body
          %s812 = smul.u32 %s40, 8
          %s813 = sadd.s32 %s812, %s807
          %s814 = sld [smem:[#allocation6 + %s813]]
          %p815 = scmp.gt.s32.totalorder %s814, 0
          // Predicated region
          $region138: #{tpu_custom_call.1} parent=134 // pred_check
            %p816 = pneg %p815
          $region139: #{tpu_custom_call.1} parent=134 // pred_check_branch
            %818 = sbr.rel (%p816) target = $region141
          $region140: #{tpu_custom_call.1} parent=134 // pred_region
            %s819 = smul.u32 %s337, 64
            %s820 = sadd.s32 %s807, %s819
            %s821 = scalar_lea.sflag [#allocation3], %s820
            %s822 = smul.u32 1, 2
            %s823 = sshll.u32 %s822, 4
            %824 = dma.done %s821, %s823
          $region141: #{tpu_custom_call.1} parent=134 // pred_fallthru
            _
          %p825 = scmp.gt.s32.totalorder %s814, 1
          // Predicated region
          $region142: #{tpu_custom_call.1} parent=134 // pred_check
            %p826 = pneg %p825
          $region143: #{tpu_custom_call.1} parent=134 // pred_check_branch
            %828 = sbr.rel (%p826) target = $region145
          $region144: #{tpu_custom_call.1} parent=134 // pred_region
            %s829 = sadd.s32 %s807, 8
            %s830 = smul.u32 %s337, 64
            %s831 = sadd.s32 %s829, %s830
            %s832 = scalar_lea.sflag [#allocation3], %s831
            %s833 = smul.u32 1, 2
            %s834 = sshll.u32 %s833, 4
            %835 = dma.done %s832, %s834
          $region145: #{tpu_custom_call.1} parent=134 // pred_fallthru
            _
          %p836 = scmp.gt.s32.totalorder %s814, 2
          // Predicated region
          $region146: #{tpu_custom_call.1} parent=134 // pred_check
            %p837 = pneg %p836
          $region147: #{tpu_custom_call.1} parent=134 // pred_check_branch
            %839 = sbr.rel (%p837) target = $region149
          $region148: #{tpu_custom_call.1} parent=134 // pred_region
            %s840 = sadd.s32 %s807, 16
            %s841 = smul.u32 %s337, 64
            %s842 = sadd.s32 %s840, %s841
            %s843 = scalar_lea.sflag [#allocation3], %s842
            %s844 = smul.u32 1, 2
            %s845 = sshll.u32 %s844, 4
            %846 = dma.done %s843, %s845
          $region149: #{tpu_custom_call.1} parent=134 // pred_fallthru
            _
          %p847 = scmp.gt.s32.totalorder %s814, 3
          // Predicated region
          $region150: #{tpu_custom_call.1} parent=134 // pred_check
            %p848 = pneg %p847
          $region151: #{tpu_custom_call.1} parent=134 // pred_check_branch
            %850 = sbr.rel (%p848) target = $region153
          $region152: #{tpu_custom_call.1} parent=134 // pred_region
            %s851 = sadd.s32 %s807, 24
            %s852 = smul.u32 %s337, 64
            %s853 = sadd.s32 %s851, %s852
            %s854 = scalar_lea.sflag [#allocation3], %s853
            %s855 = smul.u32 1, 2
            %s856 = sshll.u32 %s855, 4
            %857 = dma.done %s854, %s856
          $region153: #{tpu_custom_call.1} parent=134 // pred_fallthru
            _
          %p858 = scmp.gt.s32.totalorder %s814, 4
          // Predicated region
          $region154: #{tpu_custom_call.1} parent=134 // pred_check
            %p859 = pneg %p858
          $region155: #{tpu_custom_call.1} parent=134 // pred_check_branch
            %861 = sbr.rel (%p859) target = $region157
          $region156: #{tpu_custom_call.1} parent=134 // pred_region
            %s862 = sadd.s32 %s807, 32
            %s863 = smul.u32 %s337, 64
            %s864 = sadd.s32 %s862, %s863
            %s865 = scalar_lea.sflag [#allocation3], %s864
            %s866 = smul.u32 1, 2
            %s867 = sshll.u32 %s866, 4
            %868 = dma.done %s865, %s867
          $region157: #{tpu_custom_call.1} parent=134 // pred_fallthru
            _
          %p869 = scmp.gt.s32.totalorder %s814, 5
          // Predicated region
          $region158: #{tpu_custom_call.1} parent=134 // pred_check
            %p870 = pneg %p869
          $region159: #{tpu_custom_call.1} parent=134 // pred_check_branch
            %872 = sbr.rel (%p870) target = $region161
          $region160: #{tpu_custom_call.1} parent=134 // pred_region
            %s873 = sadd.s32 %s807, 40
            %s874 = smul.u32 %s337, 64
            %s875 = sadd.s32 %s873, %s874
            %s876 = scalar_lea.sflag [#allocation3], %s875
            %s877 = smul.u32 1, 2
            %s878 = sshll.u32 %s877, 4
            %879 = dma.done %s876, %s878
          $region161: #{tpu_custom_call.1} parent=134 // pred_fallthru
            _
          %p880 = scmp.gt.s32.totalorder %s814, 6
          // Predicated region
          $region162: #{tpu_custom_call.1} parent=134 // pred_check
            %p881 = pneg %p880
          $region163: #{tpu_custom_call.1} parent=134 // pred_check_branch
            %883 = sbr.rel (%p881) target = $region165
          $region164: #{tpu_custom_call.1} parent=134 // pred_region
            %s884 = sadd.s32 %s807, 48
            %s885 = smul.u32 %s337, 64
            %s886 = sadd.s32 %s884, %s885
            %s887 = scalar_lea.sflag [#allocation3], %s886
            %s888 = smul.u32 1, 2
            %s889 = sshll.u32 %s888, 4
            %890 = dma.done %s887, %s889
          $region165: #{tpu_custom_call.1} parent=134 // pred_fallthru
            _
          %p891 = scmp.gt.s32.totalorder %s814, 7
          // Predicated region
          $region166: #{tpu_custom_call.1} parent=134 // pred_check
            %p892 = pneg %p891
          $region167: #{tpu_custom_call.1} parent=134 // pred_check_branch
            %894 = sbr.rel (%p892) target = $region169
          $region168: #{tpu_custom_call.1} parent=134 // pred_region
            %s895 = sadd.s32 %s807, 56
            %s896 = smul.u32 %s337, 64
            %s897 = sadd.s32 %s895, %s896
            %s898 = scalar_lea.sflag [#allocation3], %s897
            %s899 = smul.u32 1, 2
            %s900 = sshll.u32 %s899, 4
            %901 = dma.done %s898, %s900
          $region169: #{tpu_custom_call.1} parent=134 // pred_fallthru
            _
        $region135: #{tpu_custom_call.1} parent=35 // loop_footer
          %s811 = sadd.s32 1, %s807
        $region136: #{tpu_custom_call.1} parent=35 // loop_footer_branch
          %806 = sbr.rel target = $region132
        $region137: #{tpu_custom_call.1} parent=35 // loop_exit
          _
        %v902 = vld [vmem:[%s270] sm:$0xff]
        %v903 = vld [vmem:[%s270 + $0x8] sm:$0xff]
        %s904 = smul.u32 %s337, 16
        %s905 = smul.addr %s904, 8
        %s906 = scalar_lea.vmem [#allocation2], %s905
        %v907 = vld [vmem:[%s906] sm:$0xff]
        %v908 = vld [vmem:[%s906 + $0x8] sm:$0xff]
        %v909 = vld [vmem:[%s906 + $0x10] sm:$0xff]
        %v910 = vld [vmem:[%s906 + $0x18] sm:$0xff]
        %v911 = vld [vmem:[%s906 + $0x20] sm:$0xff]
        %v912 = vld [vmem:[%s906 + $0x28] sm:$0xff]
        %v913 = vld [vmem:[%s906 + $0x30] sm:$0xff]
        %v914 = vld [vmem:[%s906 + $0x38] sm:$0xff]
        %v915 = vld [vmem:[%s906 + $0x40] sm:$0xff]
        %v916 = vld [vmem:[%s906 + $0x48] sm:$0xff]
        %v917 = vld [vmem:[%s906 + $0x50] sm:$0xff]
        %v918 = vld [vmem:[%s906 + $0x58] sm:$0xff]
        %v919 = vld [vmem:[%s906 + $0x60] sm:$0xff]
        %v920 = vld [vmem:[%s906 + $0x68] sm:$0xff]
        %v921 = vld [vmem:[%s906 + $0x70] sm:$0xff]
        %v922 = vld [vmem:[%s906 + $0x78] sm:$0xff]
        %v923 = vmul.f32 %v907, %v902
        %v924 = vmul.f32 %v908, %v903
        %v925 = vmul.f32 %v909, %v902
        %v926 = vmul.f32 %v910, %v903
        %v927 = vmul.f32 %v911, %v902
        %v928 = vmul.f32 %v912, %v903
        %v929 = vmul.f32 %v913, %v902
        %v930 = vmul.f32 %v914, %v903
        %v931 = vmul.f32 %v915, %v902
        %v932 = vmul.f32 %v916, %v903
        %v933 = vmul.f32 %v917, %v902
        %v934 = vmul.f32 %v918, %v903
        %v935 = vmul.f32 %v919, %v902
        %v936 = vmul.f32 %v920, %v903
        %v937 = vmul.f32 %v921, %v902
        %v938 = vmul.f32 %v922, %v903
        %v939 = vadd.f32 %v923, %v924
        %940 = vadd.xlane.f32.xlu0 %v939
        %v941 = vpop.xlane.xlu0 %940
        %v942 = vadd.f32 %v925, %v926
        %943 = vadd.xlane.f32.xlu0 %v942
        %v944 = vpop.xlane.xlu0 %943
        %v945 = vadd.f32 %v927, %v928
        %946 = vadd.xlane.f32.xlu0 %v945
        %v947 = vpop.xlane.xlu0 %946
        %v948 = vadd.f32 %v929, %v930
        %949 = vadd.xlane.f32.xlu0 %v948
        %v950 = vpop.xlane.xlu0 %949
        %v951 = vadd.f32 %v931, %v932
        %952 = vadd.xlane.f32.xlu0 %v951
        %v953 = vpop.xlane.xlu0 %952
        %v954 = vadd.f32 %v933, %v934
        %955 = vadd.xlane.f32.xlu0 %v954
        %v956 = vpop.xlane.xlu0 %955
        %v957 = vadd.f32 %v935, %v936
        %958 = vadd.xlane.f32.xlu0 %v957
        %v959 = vpop.xlane.xlu0 %958
        %v960 = vadd.f32 %v937, %v938
        %961 = vadd.xlane.f32.xlu0 %v960
        %v962 = vpop.xlane.xlu0 %961
        %v963 = vld [vmem:[%s279] sm:$0xff]
        %v965 = vlaneseq
        %v966 = vshrl.u32 %v965, 7
        %v967 = vsub.s32 0, %v966
        %v968 = vrot.slane %v963, %v967
        %970 = vbcast.lane.b32.xlu0 %v968, 256
        %v971 = vpop.permute.xlu0 %970
        %v972 = vlaneseq
        %v973 = vshrl.u32 %v972, 7
        %v974 = vsub.s32 1, %v973
        %v975 = vrot.slane %v963, %v974
        %977 = vbcast.lane.b32.xlu0 %v975, 256
        %v978 = vpop.permute.xlu0 %977
        %v979 = vlaneseq
        %v980 = vshrl.u32 %v979, 7
        %v981 = vsub.s32 2, %v980
        %v982 = vrot.slane %v963, %v981
        %984 = vbcast.lane.b32.xlu0 %v982, 256
        %v985 = vpop.permute.xlu0 %984
        %v986 = vlaneseq
        %v987 = vshrl.u32 %v986, 7
        %v988 = vsub.s32 3, %v987
        %v989 = vrot.slane %v963, %v988
        %991 = vbcast.lane.b32.xlu0 %v989, 256
        %v992 = vpop.permute.xlu0 %991
        %v993 = vlaneseq
        %v994 = vshrl.u32 %v993, 7
        %v995 = vsub.s32 4, %v994
        %v996 = vrot.slane %v963, %v995
        %998 = vbcast.lane.b32.xlu0 %v996, 256
        %v999 = vpop.permute.xlu0 %998
        %v1000 = vlaneseq
        %v1001 = vshrl.u32 %v1000, 7
        %v1002 = vsub.s32 5, %v1001
        %v1003 = vrot.slane %v963, %v1002
        %1005 = vbcast.lane.b32.xlu0 %v1003, 256
        %v1006 = vpop.permute.xlu0 %1005
        %v1007 = vlaneseq
        %v1008 = vshrl.u32 %v1007, 7
        %v1009 = vsub.s32 6, %v1008
        %v1010 = vrot.slane %v963, %v1009
        %1012 = vbcast.lane.b32.xlu0 %v1010, 256
        %v1013 = vpop.permute.xlu0 %1012
        %v1014 = vlaneseq
        %v1015 = vshrl.u32 %v1014, 7
        %v1016 = vsub.s32 7, %v1015
        %v1017 = vrot.slane %v963, %v1016
        %1019 = vbcast.lane.b32.xlu0 %v1017, 256
        %v1020 = vpop.permute.xlu0 %1019
        %v1029 = vadd.f32 %v941, %v971
        %v1030 = vadd.f32 %v944, %v978
        %v1031 = vadd.f32 %v947, %v985
        %v1032 = vadd.f32 %v950, %v992
        %v1033 = vadd.f32 %v953, %v999
        %v1034 = vadd.f32 %v956, %v1006
        %v1035 = vadd.f32 %v959, %v1013
        %v1036 = vadd.f32 %v962, %v1020
        %v1037 = vlaneseq
        %v1038 = vshrl.u32 %v1037, 7
        %v1039 = vld [vmem:[%s322] sm:$0x1]
        %v1040 = vlaneseq
        %v1041 = vshrl.u32 %v1040, 7
        %v1042 = vsub.s32 0, %v1041
        %v1043 = vrot.slane %v1039, %v1042
        %vm1044 = vcmp.lt.s32.totalorder %v1038, %v1043
        %1053 = vset.pattern.permute.xlu0 0
        %1054 = vperm.xlu0 %1053, %v1029
        %v1055 = vpop.permute.xlu0 %1054
        %1056 = vset.pattern.permute.xlu0 0
        %1057 = vperm.xlu0 %1056, %v1030
        %v1058 = vpop.permute.xlu0 %1057
        %1059 = vset.pattern.permute.xlu0 0
        %1060 = vperm.xlu0 %1059, %v1031
        %v1061 = vpop.permute.xlu0 %1060
        %1062 = vset.pattern.permute.xlu0 0
        %1063 = vperm.xlu0 %1062, %v1032
        %v1064 = vpop.permute.xlu0 %1063
        %1065 = vset.pattern.permute.xlu0 0
        %1066 = vperm.xlu0 %1065, %v1033
        %v1067 = vpop.permute.xlu0 %1066
        %1068 = vset.pattern.permute.xlu0 0
        %1069 = vperm.xlu0 %1068, %v1034
        %v1070 = vpop.permute.xlu0 %1069
        %1071 = vset.pattern.permute.xlu0 0
        %1072 = vperm.xlu0 %1071, %v1035
        %v1073 = vpop.permute.xlu0 %1072
        %1074 = vset.pattern.permute.xlu0 0
        %1075 = vperm.xlu0 %1074, %v1036
        %v1076 = vpop.permute.xlu0 %1075
        %v1077 = vlaneseq
        %v1078 = vand.u32 %v1077, 127
        %v1079 = vlaneseq
        %v1080 = vshrl.u32 %v1079, 7
        %v1081 = vsub.s32 %v1078, %v1080
        %v1082 = vrot.slane %v1055, %v1081
        %v1083 = vlaneseq
        %v1084 = vshrl.u32 %v1083, 7
        %v1085 = vsub.s32 %v1078, %v1084
        %v1086 = vrot.slane %v1058, %v1085
        %v1087 = vlaneseq
        %v1088 = vshrl.u32 %v1087, 7
        %v1089 = vsub.s32 %v1078, %v1088
        %v1090 = vrot.slane %v1061, %v1089
        %v1091 = vlaneseq
        %v1092 = vshrl.u32 %v1091, 7
        %v1093 = vsub.s32 %v1078, %v1092
        %v1094 = vrot.slane %v1064, %v1093
        %v1095 = vlaneseq
        %v1096 = vshrl.u32 %v1095, 7
        %v1097 = vsub.s32 %v1078, %v1096
        %v1098 = vrot.slane %v1067, %v1097
        %v1099 = vlaneseq
        %v1100 = vshrl.u32 %v1099, 7
        %v1101 = vsub.s32 %v1078, %v1100
        %v1102 = vrot.slane %v1070, %v1101
        %v1103 = vlaneseq
        %v1104 = vshrl.u32 %v1103, 7
        %v1105 = vsub.s32 %v1078, %v1104
        %v1106 = vrot.slane %v1073, %v1105
        %v1107 = vlaneseq
        %v1108 = vshrl.u32 %v1107, 7
        %v1109 = vsub.s32 %v1078, %v1108
        %v1110 = vrot.slane %v1076, %v1109
        %vm1111 = vcmask 1041409
        %v1112 = vsel %vm1111, %v1086, %v1082
        %vm1113 = vcmask 1042434
        %v1114 = vsel %vm1113, %v1090, %v1112
        %vm1115 = vcmask 1043459
        %v1116 = vsel %vm1115, %v1094, %v1114
        %vm1117 = vcmask 1044484
        %v1118 = vsel %vm1117, %v1098, %v1116
        %vm1119 = vcmask 1045509
        %v1120 = vsel %vm1119, %v1102, %v1118
        %vm1121 = vcmask 1046534
        %v1122 = vsel %vm1121, %v1106, %v1120
        %vm1123 = vcmask 1047559
        %v1124 = vsel %vm1123, %v1110, %v1122
        %v1126 = vsel %vm1044, %v1124, -1e+30
        %v1127 = vld [vmem:[%s325] sm:$0x1]
        %vm1128 = vcmask 64512
        %v1129 = vsel %vm1128, %v1126, -inf
        %v1130 = vrot.slane %v1129, 4
        %v1131 = vmax.f32 %v1129, %v1130
        %v1132 = vrot.slane %v1131, 2
        %v1133 = vmax.f32 %v1131, %v1132
        %v1134 = vrot.slane %v1133, 1
        %v1135 = vmax.f32 %v1133, %v1134
        %vm1136 = vcmp.eq.f32.partialorder %v1126, %v1135
        %v1137 = vsel %vm1136, %v1038, 8
        %v1138 = vsel %vm1128, %v1137, 2147483647
        %v1139 = vrot.slane %v1138, 4
        %vm1140 = vcmp.lt.s32.totalorder %v1138, %v1139
        %v1141 = vsel %vm1140, %v1138, %v1139
        %v1142 = vrot.slane %v1141, 2
        %vm1143 = vcmp.lt.s32.totalorder %v1141, %v1142
        %v1144 = vsel %vm1143, %v1141, %v1142
        %v1145 = vrot.slane %v1144, 1
        %vm1146 = vcmp.lt.s32.totalorder %v1144, %v1145
        %v1147 = vsel %vm1146, %v1144, %v1145
        %vm1148 = vcmp.eq.s32.totalorder %v1147, %v1127
        %v1149 = vsel %vm1148, 1, 0
        %vm1150 = vcmask 57344
        %1151 = vst.msk [vmem:[%s319] sm:$0x1] %vm1150, %v1149
        %v1152 = vsub.f32 %v1126, %v1135
        %v1153 = vmul.f32 %v1152, 1.442695
        %v1154 = vpow.pop %v1153
        %v1155 = vsel %vm1128, %v1154, 0.0
        %v1156 = vrot.slane %v1155, 4
        %v1157 = vadd.f32 %v1155, %v1156
        %v1158 = vrot.slane %v1157, 2
        %v1159 = vadd.f32 %v1157, %v1158
        %v1160 = vrot.slane %v1159, 1
        %v1161 = vadd.f32 %v1159, %v1160
        %v1162 = vlog2.pop %v1161
        %v1163 = vmul.f32 %v1162, 0.6931472
        %v1164 = vadd.f32 %v1135, %v1163
        %v1165 = vlaneseq
        %v1166 = vshrl.u32 %v1165, 7
        %v1167 = vsub.s32 0, %v1166
        %v1168 = vrot.slane %v1127, %v1167
        %vm1169 = vcmp.eq.s32.totalorder %v1038, %v1168
        %v1170 = vsel %vm1169, %v1126, 0.0
        %v1171 = vsel %vm1128, %v1170, 0.0
        %v1172 = vrot.slane %v1171, 4
        %v1173 = vadd.f32 %v1171, %v1172
        %v1174 = vrot.slane %v1173, 2
        %v1175 = vadd.f32 %v1173, %v1174
        %v1176 = vrot.slane %v1175, 1
        %v1177 = vadd.f32 %v1175, %v1176
        %v1178 = vsub.f32 %v1164, %v1177
        %1179 = vst.msk [vmem:[%s313] sm:$0x1] %vm1150, %v1178
        %s1180 = sand.u32 %s152, 1
        %s1181 = scalar_lea.sflag [#allocation9], %s1180
        %s1182 = sand.u32 %s152, 1
        %s1183 = scalar_lea.vmem [#allocation12], %s1182
        %s1184 = sand.u32 %s178, 1
        %s1185 = scalar_lea.sflag [#allocation14], %s1184
        %s1186 = sand.u32 %s178, 1
        %s1187 = scalar_lea.vmem [#allocation13], %s1186
        // Predicated region
        $region170: #{tpu_custom_call.1} parent=35 // pred_check
          %p1188 = pneg %p162
        $region171: #{tpu_custom_call.1} parent=35 // pred_check_branch
          %1190 = sbr.rel (%p1188) target = $region173
        $region172: #{tpu_custom_call.1} parent=35 // pred_region
          %s1192 = ssub.s32 16, 16
          %1193 = vsyncadd %s1181, %s1192
          %s1194 = smul.addr %s40, 16
          %s1195 = scalar_lea.hbm %s7, %s1194
          %s1197 = sshll.u32 %s1183, 4
          %s1198 = int_to_ptr.vmem [resolvable:$true] %s1197
          %1200 = dma.vmem_to_hbm [thread:$0]  %s1198, 16, %s1195, %s1181
        $region173: #{tpu_custom_call.1} parent=35 // pred_fallthru
          _
        // Predicated region
        $region174: #{tpu_custom_call.1} parent=35 // pred_check
          %p1201 = pneg %p188
        $region175: #{tpu_custom_call.1} parent=35 // pred_check_branch
          %1203 = sbr.rel (%p1201) target = $region177
        $region176: #{tpu_custom_call.1} parent=35 // pred_region
          %s1205 = ssub.s32 16, 16
          %1206 = vsyncadd %s1185, %s1205
          %s1207 = smul.addr %s40, 16
          %s1208 = scalar_lea.hbm %s8, %s1207
          %s1210 = sshll.u32 %s1187, 4
          %s1211 = int_to_ptr.vmem [resolvable:$true] %s1210
          %1213 = dma.vmem_to_hbm [thread:$0]  %s1211, 16, %s1208, %s1185
        $region177: #{tpu_custom_call.1} parent=35 // pred_fallthru
          _
      $region36: #{tpu_custom_call.1} parent=5 // pred_fallthru
        _
      %p1214 = scmp.le.s32.totalorder 2, %s35
      // Predicated region
      $region178: #{tpu_custom_call.1} parent=5 // pred_check
        %p1215 = pneg %p1214
      $region179: #{tpu_custom_call.1} parent=5 // pred_check_branch
        %1217 = sbr.rel (%p1215) target = $region181
      $region180: #{tpu_custom_call.1} parent=5 // pred_region
        %s1218 = ssub.s32 %s35, 2
        // Predicated region
        $region182: #{tpu_custom_call.1} parent=180 // pred_check
          %p1219 = pneg %p168
        $region183: #{tpu_custom_call.1} parent=180 // pred_check_branch
          %1221 = sbr.rel (%p1219) target = $region185
        $region184: #{tpu_custom_call.1} parent=180 // pred_region
          %s1222 = sand.u32 %s153, 1
          %s1223 = scalar_lea.sflag [#allocation9], %s1222
          %s1224 = sand.u32 %s153, 1
          %s1225 = scalar_lea.vmem [#allocation12], %s1224
          %1226 = dma.done %s1223, 16
        $region185: #{tpu_custom_call.1} parent=180 // pred_fallthru
          _
        // Predicated region
        $region186: #{tpu_custom_call.1} parent=180 // pred_check
          %p1227 = pneg %p194
        $region187: #{tpu_custom_call.1} parent=180 // pred_check_branch
          %1229 = sbr.rel (%p1227) target = $region189
        $region188: #{tpu_custom_call.1} parent=180 // pred_region
          %s1230 = sand.u32 %s179, 1
          %s1231 = scalar_lea.sflag [#allocation14], %s1230
          %s1232 = sand.u32 %s179, 1
          %s1233 = scalar_lea.vmem [#allocation13], %s1232
          %1234 = dma.done %s1231, 16
        $region189: #{tpu_custom_call.1} parent=180 // pred_fallthru
          _
      $region181: #{tpu_custom_call.1} parent=5 // pred_fallthru
        _
    $region6: #{tpu_custom_call.1} parent=1 // loop_footer
      %s39 = sadd.s32 1, %s35
    $region7: #{tpu_custom_call.1} parent=1 // loop_footer_branch
      %34 = sbr.rel target = $region3
    $region8: #{tpu_custom_call.1} parent=1 // loop_exit
      _
    %1235 = vsyncpa [#allocation8], 1
    %s1236 = scalar_lea.sflag [#allocation8], 1
    %1237 = vsyncpa %s1236, 1
    %1238 = vsyncpa [#allocation11], 1
    %s1239 = scalar_lea.sflag [#allocation11], 1
    %1240 = vsyncpa %s1239, 1
    %1241 = vsyncpa [#allocation9], 1
    %s1242 = scalar_lea.sflag [#allocation9], 1
    %1243 = vsyncpa %s1242, 1
    %1244 = vsyncpa [#allocation14], 1
    %s1245 = scalar_lea.sflag [#allocation14], 1
    %1246 = vsyncpa %s1245, 1
  %1247 = vsyncmov [#allocation3]
  %s1248 = vpop.sfrf %1247
  %p1249 = scmp.eq.s32.totalorder %s1248, 0
  %p1250 = pneg %p1249
  %1252 = shalt.err (%p1250)
  %s1253 = scalar_lea.sflag [#allocation3], 1
  %1254 = vsyncmov %s1253
  %s1255 = vpop.sfrf %1254
  %p1256 = scmp.eq.s32.totalorder %s1255, 0
  %p1257 = pneg %p1256
  %1259 = shalt.err (%p1257)
  %s1260 = scalar_lea.sflag [#allocation3], 2
  %1261 = vsyncmov %s1260
  %s1262 = vpop.sfrf %1261
  %p1263 = scmp.eq.s32.totalorder %s1262, 0
  %p1264 = pneg %p1263
  %1266 = shalt.err (%p1264)
  %s1267 = scalar_lea.sflag [#allocation3], 3
  %1268 = vsyncmov %s1267
  %s1269 = vpop.sfrf %1268
  %p1270 = scmp.eq.s32.totalorder %s1269, 0
  %p1271 = pneg %p1270
  %1273 = shalt.err (%p1271)
  %s1274 = scalar_lea.sflag [#allocation3], 4
  %1275 = vsyncmov %s1274
  %s1276 = vpop.sfrf %1275
  %p1277 = scmp.eq.s32.totalorder %s1276, 0
  %p1278 = pneg %p1277
  %1280 = shalt.err (%p1278)
  %s1281 = scalar_lea.sflag [#allocation3], 5
  %1282 = vsyncmov %s1281
  %s1283 = vpop.sfrf %1282
  %p1284 = scmp.eq.s32.totalorder %s1283, 0
  %p1285 = pneg %p1284
  %1287 = shalt.err (%p1285)
  %s1288 = scalar_lea.sflag [#allocation3], 6
  %1289 = vsyncmov %s1288
  %s1290 = vpop.sfrf %1289
  %p1291 = scmp.eq.s32.totalorder %s1290, 0
  %p1292 = pneg %p1291
  %1294 = shalt.err (%p1292)
  %s1295 = scalar_lea.sflag [#allocation3], 7
  %1296 = vsyncmov %s1295
  %s1297 = vpop.sfrf %1296
  %p1298 = scmp.eq.s32.totalorder %s1297, 0
  %p1299 = pneg %p1298
  %1301 = shalt.err (%p1299)
  %s1302 = scalar_lea.sflag [#allocation3], 8
  %1303 = vsyncmov %s1302
  %s1304 = vpop.sfrf %1303
  %p1305 = scmp.eq.s32.totalorder %s1304, 0
  %p1306 = pneg %p1305
  %1308 = shalt.err (%p1306)
  %s1309 = scalar_lea.sflag [#allocation3], 9
  %1310 = vsyncmov %s1309
  %s1311 = vpop.sfrf %1310
  %p1312 = scmp.eq.s32.totalorder %s1311, 0
  %p1313 = pneg %p1312
  %1315 = shalt.err (%p1313)
  %s1316 = scalar_lea.sflag [#allocation3], 10
  %1317 = vsyncmov %s1316
  %s1318 = vpop.sfrf %1317
  %p1319 = scmp.eq.s32.totalorder %s1318, 0
  %p1320 = pneg %p1319
  %1322 = shalt.err (%p1320)
  %s1323 = scalar_lea.sflag [#allocation3], 11
  %1324 = vsyncmov %s1323
  %s1325 = vpop.sfrf %1324
  %p1326 = scmp.eq.s32.totalorder %s1325, 0
  %p1327 = pneg %p1326
  %1329 = shalt.err (%p1327)
  %s1330 = scalar_lea.sflag [#allocation3], 12
  %1331 = vsyncmov %s1330
  %s1332 = vpop.sfrf %1331
  %p1333 = scmp.eq.s32.totalorder %s1332, 0
  %p1334 = pneg %p1333
  %1336 = shalt.err (%p1334)
  %s1337 = scalar_lea.sflag [#allocation3], 13
  %1338 = vsyncmov %s1337
  %s1339 = vpop.sfrf %1338
  %p1340 = scmp.eq.s32.totalorder %s1339, 0
  %p1341 = pneg %p1340
  %1343 = shalt.err (%p1341)
  %s1344 = scalar_lea.sflag [#allocation3], 14
  %1345 = vsyncmov %s1344
  %s1346 = vpop.sfrf %1345
  %p1347 = scmp.eq.s32.totalorder %s1346, 0
  %p1348 = pneg %p1347
  %1350 = shalt.err (%p1348)
  %s1351 = scalar_lea.sflag [#allocation3], 15
  %1352 = vsyncmov %s1351
  %s1353 = vpop.sfrf %1352
  %p1354 = scmp.eq.s32.totalorder %s1353, 0
  %p1355 = pneg %p1354
  %1357 = shalt.err (%p1355)
  %s1358 = scalar_lea.sflag [#allocation3], 16
  %1359 = vsyncmov %s1358
  %s1360 = vpop.sfrf %1359
  %p1361 = scmp.eq.s32.totalorder %s1360, 0
  %p1362 = pneg %p1361
  %1364 = shalt.err (%p1362)
  %s1365 = scalar_lea.sflag [#allocation3], 17
  %1366 = vsyncmov %s1365
  %s1367 = vpop.sfrf %1366
  %p1368 = scmp.eq.s32.totalorder %s1367, 0
  %p1369 = pneg %p1368
  %1371 = shalt.err (%p1369)
  %s1372 = scalar_lea.sflag [#allocation3], 18
  %1373 = vsyncmov %s1372
  %s1374 = vpop.sfrf %1373
  %p1375 = scmp.eq.s32.totalorder %s1374, 0
  %p1376 = pneg %p1375
  %1378 = shalt.err (%p1376)
  %s1379 = scalar_lea.sflag [#allocation3], 19
  %1380 = vsyncmov %s1379
  %s1381 = vpop.sfrf %1380
  %p1382 = scmp.eq.s32.totalorder %s1381, 0
  %p1383 = pneg %p1382
  %1385 = shalt.err (%p1383)
  %s1386 = scalar_lea.sflag [#allocation3], 20
  %1387 = vsyncmov %s1386
  %s1388 = vpop.sfrf %1387
  %p1389 = scmp.eq.s32.totalorder %s1388, 0
  %p1390 = pneg %p1389
  %1392 = shalt.err (%p1390)
  %s1393 = scalar_lea.sflag [#allocation3], 21
  %1394 = vsyncmov %s1393
  %s1395 = vpop.sfrf %1394
  %p1396 = scmp.eq.s32.totalorder %s1395, 0
  %p1397 = pneg %p1396
  %1399 = shalt.err (%p1397)
  %s1400 = scalar_lea.sflag [#allocation3], 22
  %1401 = vsyncmov %s1400
  %s1402 = vpop.sfrf %1401
  %p1403 = scmp.eq.s32.totalorder %s1402, 0
  %p1404 = pneg %p1403
  %1406 = shalt.err (%p1404)
  %s1407 = scalar_lea.sflag [#allocation3], 23
  %1408 = vsyncmov %s1407
  %s1409 = vpop.sfrf %1408
  %p1410 = scmp.eq.s32.totalorder %s1409, 0
  %p1411 = pneg %p1410
  %1413 = shalt.err (%p1411)
  %s1414 = scalar_lea.sflag [#allocation3], 24
  %1415 = vsyncmov %s1414
  %s1416 = vpop.sfrf %1415
  %p1417 = scmp.eq.s32.totalorder %s1416, 0
  %p1418 = pneg %p1417
  %1420 = shalt.err (%p1418)
  %s1421 = scalar_lea.sflag [#allocation3], 25
  %1422 = vsyncmov %s1421
  %s1423 = vpop.sfrf %1422
  %p1424 = scmp.eq.s32.totalorder %s1423, 0
  %p1425 = pneg %p1424
  %1427 = shalt.err (%p1425)
  %s1428 = scalar_lea.sflag [#allocation3], 26
  %1429 = vsyncmov %s1428
  %s1430 = vpop.sfrf %1429
  %p1431 = scmp.eq.s32.totalorder %s1430, 0
  %p1432 = pneg %p1431
  %1434 = shalt.err (%p1432)
  %s1435 = scalar_lea.sflag [#allocation3], 27
  %1436 = vsyncmov %s1435
  %s1437 = vpop.sfrf %1436
  %p1438 = scmp.eq.s32.totalorder %s1437, 0
  %p1439 = pneg %p1438
  %1441 = shalt.err (%p1439)
  %s1442 = scalar_lea.sflag [#allocation3], 28
  %1443 = vsyncmov %s1442
  %s1444 = vpop.sfrf %1443
  %p1445 = scmp.eq.s32.totalorder %s1444, 0
  %p1446 = pneg %p1445
  %1448 = shalt.err (%p1446)
  %s1449 = scalar_lea.sflag [#allocation3], 29
  %1450 = vsyncmov %s1449
  %s1451 = vpop.sfrf %1450
  %p1452 = scmp.eq.s32.totalorder %s1451, 0
  %p1453 = pneg %p1452
  %1455 = shalt.err (%p1453)
  %s1456 = scalar_lea.sflag [#allocation3], 30
  %1457 = vsyncmov %s1456
  %s1458 = vpop.sfrf %1457
  %p1459 = scmp.eq.s32.totalorder %s1458, 0
  %p1460 = pneg %p1459
  %1462 = shalt.err (%p1460)
  %s1463 = scalar_lea.sflag [#allocation3], 31
  %1464 = vsyncmov %s1463
  %s1465 = vpop.sfrf %1464
  %p1466 = scmp.eq.s32.totalorder %s1465, 0
  %p1467 = pneg %p1466
  %1469 = shalt.err (%p1467)
  %s1470 = scalar_lea.sflag [#allocation3], 32
  %1471 = vsyncmov %s1470
  %s1472 = vpop.sfrf %1471
  %p1473 = scmp.eq.s32.totalorder %s1472, 0
  %p1474 = pneg %p1473
  %1476 = shalt.err (%p1474)
  %s1477 = scalar_lea.sflag [#allocation3], 33
  %1478 = vsyncmov %s1477
  %s1479 = vpop.sfrf %1478
  %p1480 = scmp.eq.s32.totalorder %s1479, 0
  %p1481 = pneg %p1480
  %1483 = shalt.err (%p1481)
  %s1484 = scalar_lea.sflag [#allocation3], 34
  %1485 = vsyncmov %s1484
  %s1486 = vpop.sfrf %1485
  %p1487 = scmp.eq.s32.totalorder %s1486, 0
  %p1488 = pneg %p1487
  %1490 = shalt.err (%p1488)
  %s1491 = scalar_lea.sflag [#allocation3], 35
  %1492 = vsyncmov %s1491
  %s1493 = vpop.sfrf %1492
  %p1494 = scmp.eq.s32.totalorder %s1493, 0
  %p1495 = pneg %p1494
  %1497 = shalt.err (%p1495)
  %s1498 = scalar_lea.sflag [#allocation3], 36
  %1499 = vsyncmov %s1498
  %s1500 = vpop.sfrf %1499
  %p1501 = scmp.eq.s32.totalorder %s1500, 0
  %p1502 = pneg %p1501
  %1504 = shalt.err (%p1502)
  %s1505 = scalar_lea.sflag [#allocation3], 37
  %1506 = vsyncmov %s1505
  %s1507 = vpop.sfrf %1506
  %p1508 = scmp.eq.s32.totalorder %s1507, 0
  %p1509 = pneg %p1508
  %1511 = shalt.err (%p1509)
  %s1512 = scalar_lea.sflag [#allocation3], 38
  %1513 = vsyncmov %s1512
  %s1514 = vpop.sfrf %1513
  %p1515 = scmp.eq.s32.totalorder %s1514, 0
  %p1516 = pneg %p1515
  %1518 = shalt.err (%p1516)
  %s1519 = scalar_lea.sflag [#allocation3], 39
  %1520 = vsyncmov %s1519
  %s1521 = vpop.sfrf %1520
  %p1522 = scmp.eq.s32.totalorder %s1521, 0
  %p1523 = pneg %p1522
  %1525 = shalt.err (%p1523)
  %s1526 = scalar_lea.sflag [#allocation3], 40
  %1527 = vsyncmov %s1526
  %s1528 = vpop.sfrf %1527
  %p1529 = scmp.eq.s32.totalorder %s1528, 0
  %p1530 = pneg %p1529
  %1532 = shalt.err (%p1530)
  %s1533 = scalar_lea.sflag [#allocation3], 41
  %1534 = vsyncmov %s1533
  %s1535 = vpop.sfrf %1534
  %p1536 = scmp.eq.s32.totalorder %s1535, 0
  %p1537 = pneg %p1536
  %1539 = shalt.err (%p1537)
  %s1540 = scalar_lea.sflag [#allocation3], 42
  %1541 = vsyncmov %s1540
  %s1542 = vpop.sfrf %1541
  %p1543 = scmp.eq.s32.totalorder %s1542, 0
  %p1544 = pneg %p1543
  %1546 = shalt.err (%p1544)
  %s1547 = scalar_lea.sflag [#allocation3], 43
  %1548 = vsyncmov %s1547
  %s1549 = vpop.sfrf %1548
  %p1550 = scmp.eq.s32.totalorder %s1549, 0
  %p1551 = pneg %p1550
  %1553 = shalt.err (%p1551)
  %s1554 = scalar_lea.sflag [#allocation3], 44
  %1555 = vsyncmov %s1554
  %s1556 = vpop.sfrf %1555
  %p1557 = scmp.eq.s32.totalorder %s1556, 0
  %p1558 = pneg %p1557
  %1560 = shalt.err (%p1558)
  %s1561 = scalar_lea.sflag [#allocation3], 45
  %1562 = vsyncmov %s1561
  %s1563 = vpop.sfrf %1562
  %p1564 = scmp.eq.s32.totalorder %s1563, 0
  %p1565 = pneg %p1564
  %1567 = shalt.err (%p1565)
  %s1568 = scalar_lea.sflag [#allocation3], 46
  %1569 = vsyncmov %s1568
  %s1570 = vpop.sfrf %1569
  %p1571 = scmp.eq.s32.totalorder %s1570, 0
  %p1572 = pneg %p1571
  %1574 = shalt.err (%p1572)
  %s1575 = scalar_lea.sflag [#allocation3], 47
  %1576 = vsyncmov %s1575
  %s1577 = vpop.sfrf %1576
  %p1578 = scmp.eq.s32.totalorder %s1577, 0
  %p1579 = pneg %p1578
  %1581 = shalt.err (%p1579)
  %s1582 = scalar_lea.sflag [#allocation3], 48
  %1583 = vsyncmov %s1582
  %s1584 = vpop.sfrf %1583
  %p1585 = scmp.eq.s32.totalorder %s1584, 0
  %p1586 = pneg %p1585
  %1588 = shalt.err (%p1586)
  %s1589 = scalar_lea.sflag [#allocation3], 49
  %1590 = vsyncmov %s1589
  %s1591 = vpop.sfrf %1590
  %p1592 = scmp.eq.s32.totalorder %s1591, 0
  %p1593 = pneg %p1592
  %1595 = shalt.err (%p1593)
  %s1596 = scalar_lea.sflag [#allocation3], 50
  %1597 = vsyncmov %s1596
  %s1598 = vpop.sfrf %1597
  %p1599 = scmp.eq.s32.totalorder %s1598, 0
  %p1600 = pneg %p1599
  %1602 = shalt.err (%p1600)
  %s1603 = scalar_lea.sflag [#allocation3], 51
  %1604 = vsyncmov %s1603
  %s1605 = vpop.sfrf %1604
  %p1606 = scmp.eq.s32.totalorder %s1605, 0
  %p1607 = pneg %p1606
  %1609 = shalt.err (%p1607)
  %s1610 = scalar_lea.sflag [#allocation3], 52
  %1611 = vsyncmov %s1610
  %s1612 = vpop.sfrf %1611
  %p1613 = scmp.eq.s32.totalorder %s1612, 0
  %p1614 = pneg %p1613
  %1616 = shalt.err (%p1614)
  %s1617 = scalar_lea.sflag [#allocation3], 53
  %1618 = vsyncmov %s1617
  %s1619 = vpop.sfrf %1618
  %p1620 = scmp.eq.s32.totalorder %s1619, 0
  %p1621 = pneg %p1620
  %1623 = shalt.err (%p1621)
  %s1624 = scalar_lea.sflag [#allocation3], 54
  %1625 = vsyncmov %s1624
  %s1626 = vpop.sfrf %1625
  %p1627 = scmp.eq.s32.totalorder %s1626, 0
  %p1628 = pneg %p1627
  %1630 = shalt.err (%p1628)
  %s1631 = scalar_lea.sflag [#allocation3], 55
  %1632 = vsyncmov %s1631
  %s1633 = vpop.sfrf %1632
  %p1634 = scmp.eq.s32.totalorder %s1633, 0
  %p1635 = pneg %p1634
  %1637 = shalt.err (%p1635)
  %s1638 = scalar_lea.sflag [#allocation3], 56
  %1639 = vsyncmov %s1638
  %s1640 = vpop.sfrf %1639
  %p1641 = scmp.eq.s32.totalorder %s1640, 0
  %p1642 = pneg %p1641
  %1644 = shalt.err (%p1642)
  %s1645 = scalar_lea.sflag [#allocation3], 57
  %1646 = vsyncmov %s1645
  %s1647 = vpop.sfrf %1646
  %p1648 = scmp.eq.s32.totalorder %s1647, 0
  %p1649 = pneg %p1648
  %1651 = shalt.err (%p1649)
  %s1652 = scalar_lea.sflag [#allocation3], 58
  %1653 = vsyncmov %s1652
  %s1654 = vpop.sfrf %1653
  %p1655 = scmp.eq.s32.totalorder %s1654, 0
  %p1656 = pneg %p1655
  %1658 = shalt.err (%p1656)
  %s1659 = scalar_lea.sflag [#allocation3], 59
  %1660 = vsyncmov %s1659
  %s1661 = vpop.sfrf %1660
  %p1662 = scmp.eq.s32.totalorder %s1661, 0
  %p1663 = pneg %p1662
  %1665 = shalt.err (%p1663)
  %s1666 = scalar_lea.sflag [#allocation3], 60
  %1667 = vsyncmov %s1666
  %s1668 = vpop.sfrf %1667
  %p1669 = scmp.eq.s32.totalorder %s1668, 0
  %p1670 = pneg %p1669
  %1672 = shalt.err (%p1670)
  %s1673 = scalar_lea.sflag [#allocation3], 61
  %1674 = vsyncmov %s1673
  %s1675 = vpop.sfrf %1674
  %p1676 = scmp.eq.s32.totalorder %s1675, 0
  %p1677 = pneg %p1676
  %1679 = shalt.err (%p1677)
  %s1680 = scalar_lea.sflag [#allocation3], 62
  %1681 = vsyncmov %s1680
  %s1682 = vpop.sfrf %1681
  %p1683 = scmp.eq.s32.totalorder %s1682, 0
  %p1684 = pneg %p1683
  %1686 = shalt.err (%p1684)
  %s1687 = scalar_lea.sflag [#allocation3], 63
  %1688 = vsyncmov %s1687
  %s1689 = vpop.sfrf %1688
  %p1690 = scmp.eq.s32.totalorder %s1689, 0
  %p1691 = pneg %p1690
  %1693 = shalt.err (%p1691)
  %s1694 = scalar_lea.sflag [#allocation3], 64
  %1695 = vsyncmov %s1694
  %s1696 = vpop.sfrf %1695
  %p1697 = scmp.eq.s32.totalorder %s1696, 0
  %p1698 = pneg %p1697
  %1700 = shalt.err (%p1698)
  %s1701 = scalar_lea.sflag [#allocation3], 65
  %1702 = vsyncmov %s1701
  %s1703 = vpop.sfrf %1702
  %p1704 = scmp.eq.s32.totalorder %s1703, 0
  %p1705 = pneg %p1704
  %1707 = shalt.err (%p1705)
  %s1708 = scalar_lea.sflag [#allocation3], 66
  %1709 = vsyncmov %s1708
  %s1710 = vpop.sfrf %1709
  %p1711 = scmp.eq.s32.totalorder %s1710, 0
  %p1712 = pneg %p1711
  %1714 = shalt.err (%p1712)
  %s1715 = scalar_lea.sflag [#allocation3], 67
  %1716 = vsyncmov %s1715
  %s1717 = vpop.sfrf %1716
  %p1718 = scmp.eq.s32.totalorder %s1717, 0
  %p1719 = pneg %p1718
  %1721 = shalt.err (%p1719)
  %s1722 = scalar_lea.sflag [#allocation3], 68
  %1723 = vsyncmov %s1722
  %s1724 = vpop.sfrf %1723
  %p1725 = scmp.eq.s32.totalorder %s1724, 0
  %p1726 = pneg %p1725
  %1728 = shalt.err (%p1726)
  %s1729 = scalar_lea.sflag [#allocation3], 69
  %1730 = vsyncmov %s1729
  %s1731 = vpop.sfrf %1730
  %p1732 = scmp.eq.s32.totalorder %s1731, 0
  %p1733 = pneg %p1732
  %1735 = shalt.err (%p1733)
  %s1736 = scalar_lea.sflag [#allocation3], 70
  %1737 = vsyncmov %s1736
  %s1738 = vpop.sfrf %1737
  %p1739 = scmp.eq.s32.totalorder %s1738, 0
  %p1740 = pneg %p1739
  %1742 = shalt.err (%p1740)
  %s1743 = scalar_lea.sflag [#allocation3], 71
  %1744 = vsyncmov %s1743
  %s1745 = vpop.sfrf %1744
  %p1746 = scmp.eq.s32.totalorder %s1745, 0
  %p1747 = pneg %p1746
  %1749 = shalt.err (%p1747)
  %s1750 = scalar_lea.sflag [#allocation3], 72
  %1751 = vsyncmov %s1750
  %s1752 = vpop.sfrf %1751
  %p1753 = scmp.eq.s32.totalorder %s1752, 0
  %p1754 = pneg %p1753
  %1756 = shalt.err (%p1754)
  %s1757 = scalar_lea.sflag [#allocation3], 73
  %1758 = vsyncmov %s1757
  %s1759 = vpop.sfrf %1758
  %p1760 = scmp.eq.s32.totalorder %s1759, 0
  %p1761 = pneg %p1760
  %1763 = shalt.err (%p1761)
  %s1764 = scalar_lea.sflag [#allocation3], 74
  %1765 = vsyncmov %s1764
  %s1766 = vpop.sfrf %1765
  %p1767 = scmp.eq.s32.totalorder %s1766, 0
  %p1768 = pneg %p1767
  %1770 = shalt.err (%p1768)
  %s1771 = scalar_lea.sflag [#allocation3], 75
  %1772 = vsyncmov %s1771
  %s1773 = vpop.sfrf %1772
  %p1774 = scmp.eq.s32.totalorder %s1773, 0
  %p1775 = pneg %p1774
  %1777 = shalt.err (%p1775)
  %s1778 = scalar_lea.sflag [#allocation3], 76
  %1779 = vsyncmov %s1778
  %s1780 = vpop.sfrf %1779
  %p1781 = scmp.eq.s32.totalorder %s1780, 0
  %p1782 = pneg %p1781
  %1784 = shalt.err (%p1782)
  %s1785 = scalar_lea.sflag [#allocation3], 77
  %1786 = vsyncmov %s1785
  %s1787 = vpop.sfrf %1786
  %p1788 = scmp.eq.s32.totalorder %s1787, 0
  %p1789 = pneg %p1788
  %1791 = shalt.err (%p1789)
  %s1792 = scalar_lea.sflag [#allocation3], 78
  %1793 = vsyncmov %s1792
  %s1794 = vpop.sfrf %1793
  %p1795 = scmp.eq.s32.totalorder %s1794, 0
  %p1796 = pneg %p1795
  %1798 = shalt.err (%p1796)
  %s1799 = scalar_lea.sflag [#allocation3], 79
  %1800 = vsyncmov %s1799
  %s1801 = vpop.sfrf %1800
  %p1802 = scmp.eq.s32.totalorder %s1801, 0
  %p1803 = pneg %p1802
  %1805 = shalt.err (%p1803)
  %s1806 = scalar_lea.sflag [#allocation3], 80
  %1807 = vsyncmov %s1806
  %s1808 = vpop.sfrf %1807
  %p1809 = scmp.eq.s32.totalorder %s1808, 0
  %p1810 = pneg %p1809
  %1812 = shalt.err (%p1810)
  %s1813 = scalar_lea.sflag [#allocation3], 81
  %1814 = vsyncmov %s1813
  %s1815 = vpop.sfrf %1814
  %p1816 = scmp.eq.s32.totalorder %s1815, 0
  %p1817 = pneg %p1816
  %1819 = shalt.err (%p1817)
  %s1820 = scalar_lea.sflag [#allocation3], 82
  %1821 = vsyncmov %s1820
  %s1822 = vpop.sfrf %1821
  %p1823 = scmp.eq.s32.totalorder %s1822, 0
  %p1824 = pneg %p1823
  %1826 = shalt.err (%p1824)
  %s1827 = scalar_lea.sflag [#allocation3], 83
  %1828 = vsyncmov %s1827
  %s1829 = vpop.sfrf %1828
  %p1830 = scmp.eq.s32.totalorder %s1829, 0
  %p1831 = pneg %p1830
  %1833 = shalt.err (%p1831)
  %s1834 = scalar_lea.sflag [#allocation3], 84
  %1835 = vsyncmov %s1834
  %s1836 = vpop.sfrf %1835
  %p1837 = scmp.eq.s32.totalorder %s1836, 0
  %p1838 = pneg %p1837
  %1840 = shalt.err (%p1838)
  %s1841 = scalar_lea.sflag [#allocation3], 85
  %1842 = vsyncmov %s1841
  %s1843 = vpop.sfrf %1842
  %p1844 = scmp.eq.s32.totalorder %s1843, 0
  %p1845 = pneg %p1844
  %1847 = shalt.err (%p1845)
  %s1848 = scalar_lea.sflag [#allocation3], 86
  %1849 = vsyncmov %s1848
  %s1850 = vpop.sfrf %1849
  %p1851 = scmp.eq.s32.totalorder %s1850, 0
  %p1852 = pneg %p1851
  %1854 = shalt.err (%p1852)
  %s1855 = scalar_lea.sflag [#allocation3], 87
  %1856 = vsyncmov %s1855
  %s1857 = vpop.sfrf %1856
  %p1858 = scmp.eq.s32.totalorder %s1857, 0
  %p1859 = pneg %p1858
  %1861 = shalt.err (%p1859)
  %s1862 = scalar_lea.sflag [#allocation3], 88
  %1863 = vsyncmov %s1862
  %s1864 = vpop.sfrf %1863
  %p1865 = scmp.eq.s32.totalorder %s1864, 0
  %p1866 = pneg %p1865
  %1868 = shalt.err (%p1866)
  %s1869 = scalar_lea.sflag [#allocation3], 89
  %1870 = vsyncmov %s1869
  %s1871 = vpop.sfrf %1870
  %p1872 = scmp.eq.s32.totalorder %s1871, 0
  %p1873 = pneg %p1872
  %1875 = shalt.err (%p1873)
  %s1876 = scalar_lea.sflag [#allocation3], 90
  %1877 = vsyncmov %s1876
  %s1878 = vpop.sfrf %1877
  %p1879 = scmp.eq.s32.totalorder %s1878, 0
  %p1880 = pneg %p1879
  %1882 = shalt.err (%p1880)
  %s1883 = scalar_lea.sflag [#allocation3], 91
  %1884 = vsyncmov %s1883
  %s1885 = vpop.sfrf %1884
  %p1886 = scmp.eq.s32.totalorder %s1885, 0
  %p1887 = pneg %p1886
  %1889 = shalt.err (%p1887)
  %s1890 = scalar_lea.sflag [#allocation3], 92
  %1891 = vsyncmov %s1890
  %s1892 = vpop.sfrf %1891
  %p1893 = scmp.eq.s32.totalorder %s1892, 0
  %p1894 = pneg %p1893
  %1896 = shalt.err (%p1894)
  %s1897 = scalar_lea.sflag [#allocation3], 93
  %1898 = vsyncmov %s1897
  %s1899 = vpop.sfrf %1898
  %p1900 = scmp.eq.s32.totalorder %s1899, 0
  %p1901 = pneg %p1900
  %1903 = shalt.err (%p1901)
  %s1904 = scalar_lea.sflag [#allocation3], 94
  %1905 = vsyncmov %s1904
  %s1906 = vpop.sfrf %1905
  %p1907 = scmp.eq.s32.totalorder %s1906, 0
  %p1908 = pneg %p1907
  %1910 = shalt.err (%p1908)
  %s1911 = scalar_lea.sflag [#allocation3], 95
  %1912 = vsyncmov %s1911
  %s1913 = vpop.sfrf %1912
  %p1914 = scmp.eq.s32.totalorder %s1913, 0
  %p1915 = pneg %p1914
  %1917 = shalt.err (%p1915)
  %s1918 = scalar_lea.sflag [#allocation3], 96
  %1919 = vsyncmov %s1918
  %s1920 = vpop.sfrf %1919
  %p1921 = scmp.eq.s32.totalorder %s1920, 0
  %p1922 = pneg %p1921
  %1924 = shalt.err (%p1922)
  %s1925 = scalar_lea.sflag [#allocation3], 97
  %1926 = vsyncmov %s1925
  %s1927 = vpop.sfrf %1926
  %p1928 = scmp.eq.s32.totalorder %s1927, 0
  %p1929 = pneg %p1928
  %1931 = shalt.err (%p1929)
  %s1932 = scalar_lea.sflag [#allocation3], 98
  %1933 = vsyncmov %s1932
  %s1934 = vpop.sfrf %1933
  %p1935 = scmp.eq.s32.totalorder %s1934, 0
  %p1936 = pneg %p1935
  %1938 = shalt.err (%p1936)
  %s1939 = scalar_lea.sflag [#allocation3], 99
  %1940 = vsyncmov %s1939
  %s1941 = vpop.sfrf %1940
  %p1942 = scmp.eq.s32.totalorder %s1941, 0
  %p1943 = pneg %p1942
  %1945 = shalt.err (%p1943)
  %s1946 = scalar_lea.sflag [#allocation3], 100
  %1947 = vsyncmov %s1946
  %s1948 = vpop.sfrf %1947
  %p1949 = scmp.eq.s32.totalorder %s1948, 0
  %p1950 = pneg %p1949
  %1952 = shalt.err (%p1950)
  %s1953 = scalar_lea.sflag [#allocation3], 101
  %1954 = vsyncmov %s1953
  %s1955 = vpop.sfrf %1954
  %p1956 = scmp.eq.s32.totalorder %s1955, 0
  %p1957 = pneg %p1956
  %1959 = shalt.err (%p1957)
  %s1960 = scalar_lea.sflag [#allocation3], 102
  %1961 = vsyncmov %s1960
  %s1962 = vpop.sfrf %1961
  %p1963 = scmp.eq.s32.totalorder %s1962, 0
  %p1964 = pneg %p1963
  %1966 = shalt.err (%p1964)
  %s1967 = scalar_lea.sflag [#allocation3], 103
  %1968 = vsyncmov %s1967
  %s1969 = vpop.sfrf %1968
  %p1970 = scmp.eq.s32.totalorder %s1969, 0
  %p1971 = pneg %p1970
  %1973 = shalt.err (%p1971)
  %s1974 = scalar_lea.sflag [#allocation3], 104
  %1975 = vsyncmov %s1974
  %s1976 = vpop.sfrf %1975
  %p1977 = scmp.eq.s32.totalorder %s1976, 0
  %p1978 = pneg %p1977
  %1980 = shalt.err (%p1978)
  %s1981 = scalar_lea.sflag [#allocation3], 105
  %1982 = vsyncmov %s1981
  %s1983 = vpop.sfrf %1982
  %p1984 = scmp.eq.s32.totalorder %s1983, 0
  %p1985 = pneg %p1984
  %1987 = shalt.err (%p1985)
  %s1988 = scalar_lea.sflag [#allocation3], 106
  %1989 = vsyncmov %s1988
  %s1990 = vpop.sfrf %1989
  %p1991 = scmp.eq.s32.totalorder %s1990, 0
  %p1992 = pneg %p1991
  %1994 = shalt.err (%p1992)
  %s1995 = scalar_lea.sflag [#allocation3], 107
  %1996 = vsyncmov %s1995
  %s1997 = vpop.sfrf %1996
  %p1998 = scmp.eq.s32.totalorder %s1997, 0
  %p1999 = pneg %p1998
  %2001 = shalt.err (%p1999)
  %s2002 = scalar_lea.sflag [#allocation3], 108
  %2003 = vsyncmov %s2002
  %s2004 = vpop.sfrf %2003
  %p2005 = scmp.eq.s32.totalorder %s2004, 0
  %p2006 = pneg %p2005
  %2008 = shalt.err (%p2006)
  %s2009 = scalar_lea.sflag [#allocation3], 109
  %2010 = vsyncmov %s2009
  %s2011 = vpop.sfrf %2010
  %p2012 = scmp.eq.s32.totalorder %s2011, 0
  %p2013 = pneg %p2012
  %2015 = shalt.err (%p2013)
  %s2016 = scalar_lea.sflag [#allocation3], 110
  %2017 = vsyncmov %s2016
  %s2018 = vpop.sfrf %2017
  %p2019 = scmp.eq.s32.totalorder %s2018, 0
  %p2020 = pneg %p2019
  %2022 = shalt.err (%p2020)
  %s2023 = scalar_lea.sflag [#allocation3], 111
  %2024 = vsyncmov %s2023
  %s2025 = vpop.sfrf %2024
  %p2026 = scmp.eq.s32.totalorder %s2025, 0
  %p2027 = pneg %p2026
  %2029 = shalt.err (%p2027)
  %s2030 = scalar_lea.sflag [#allocation3], 112
  %2031 = vsyncmov %s2030
  %s2032 = vpop.sfrf %2031
  %p2033 = scmp.eq.s32.totalorder %s2032, 0
  %p2034 = pneg %p2033
  %2036 = shalt.err (%p2034)
  %s2037 = scalar_lea.sflag [#allocation3], 113
  %2038 = vsyncmov %s2037
  %s2039 = vpop.sfrf %2038
  %p2040 = scmp.eq.s32.totalorder %s2039, 0
  %p2041 = pneg %p2040
  %2043 = shalt.err (%p2041)
  %s2044 = scalar_lea.sflag [#allocation3], 114
  %2045 = vsyncmov %s2044
  %s2046 = vpop.sfrf %2045
  %p2047 = scmp.eq.s32.totalorder %s2046, 0
  %p2048 = pneg %p2047
  %2050 = shalt.err (%p2048)
  %s2051 = scalar_lea.sflag [#allocation3], 115
  %2052 = vsyncmov %s2051
  %s2053 = vpop.sfrf %2052
  %p2054 = scmp.eq.s32.totalorder %s2053, 0
  %p2055 = pneg %p2054
  %2057 = shalt.err (%p2055)
  %s2058 = scalar_lea.sflag [#allocation3], 116
  %2059 = vsyncmov %s2058
  %s2060 = vpop.sfrf %2059
  %p2061 = scmp.eq.s32.totalorder %s2060, 0
  %p2062 = pneg %p2061
  %2064 = shalt.err (%p2062)
  %s2065 = scalar_lea.sflag [#allocation3], 117
  %2066 = vsyncmov %s2065
  %s2067 = vpop.sfrf %2066
  %p2068 = scmp.eq.s32.totalorder %s2067, 0
  %p2069 = pneg %p2068
  %2071 = shalt.err (%p2069)
  %s2072 = scalar_lea.sflag [#allocation3], 118
  %2073 = vsyncmov %s2072
  %s2074 = vpop.sfrf %2073
  %p2075 = scmp.eq.s32.totalorder %s2074, 0
  %p2076 = pneg %p2075
  %2078 = shalt.err (%p2076)
  %s2079 = scalar_lea.sflag [#allocation3], 119
  %2080 = vsyncmov %s2079
  %s2081 = vpop.sfrf %2080
  %p2082 = scmp.eq.s32.totalorder %s2081, 0
  %p2083 = pneg %p2082
  %2085 = shalt.err (%p2083)
  %s2086 = scalar_lea.sflag [#allocation3], 120
  %2087 = vsyncmov %s2086
  %s2088 = vpop.sfrf %2087
  %p2089 = scmp.eq.s32.totalorder %s2088, 0
  %p2090 = pneg %p2089
  %2092 = shalt.err (%p2090)
  %s2093 = scalar_lea.sflag [#allocation3], 121
  %2094 = vsyncmov %s2093
  %s2095 = vpop.sfrf %2094
  %p2096 = scmp.eq.s32.totalorder %s2095, 0
  %p2097 = pneg %p2096
  %2099 = shalt.err (%p2097)
  %s2100 = scalar_lea.sflag [#allocation3], 122
  %2101 = vsyncmov %s2100
  %s2102 = vpop.sfrf %2101
  %p2103 = scmp.eq.s32.totalorder %s2102, 0
  %p2104 = pneg %p2103
  %2106 = shalt.err (%p2104)
  %s2107 = scalar_lea.sflag [#allocation3], 123
  %2108 = vsyncmov %s2107
  %s2109 = vpop.sfrf %2108
  %p2110 = scmp.eq.s32.totalorder %s2109, 0
  %p2111 = pneg %p2110
  %2113 = shalt.err (%p2111)
  %s2114 = scalar_lea.sflag [#allocation3], 124
  %2115 = vsyncmov %s2114
  %s2116 = vpop.sfrf %2115
  %p2117 = scmp.eq.s32.totalorder %s2116, 0
  %p2118 = pneg %p2117
  %2120 = shalt.err (%p2118)
  %s2121 = scalar_lea.sflag [#allocation3], 125
  %2122 = vsyncmov %s2121
  %s2123 = vpop.sfrf %2122
  %p2124 = scmp.eq.s32.totalorder %s2123, 0
  %p2125 = pneg %p2124
  %2127 = shalt.err (%p2125)
  %s2128 = scalar_lea.sflag [#allocation3], 126
  %2129 = vsyncmov %s2128
  %s2130 = vpop.sfrf %2129
  %p2131 = scmp.eq.s32.totalorder %s2130, 0
  %p2132 = pneg %p2131
  %2134 = shalt.err (%p2132)
  %s2135 = scalar_lea.sflag [#allocation3], 127
  %2136 = vsyncmov %s2135
  %s2137 = vpop.sfrf %2136
  %p2138 = scmp.eq.s32.totalorder %s2137, 0
  %p2139 = pneg %p2138
  %2141 = shalt.err (%p2139)

</llo_original>
